<compile_context>
chip_gen: v7x
topology: tpu7x:2x2x1
jax: 0.10.0
libtpu: 0.0.40
codegen_flags: <defaults>
</compile_context>

<pallas_src>
import functools

import jax
import jax.numpy as jnp
from jax.experimental import pallas as pl
from jax.experimental.pallas import tpu as pltpu


def _round_up(x, m):
    return ((x + m - 1) // m) * m


# ---------------------------------------------------------------------------
# Fused Pallas kernel: 2-layer LSTM over time + dense + ReLU
# ---------------------------------------------------------------------------
def _trace_gen_kernel(x_ref, w_in0_ref, b0_ref, w_rec0_ref, w_in1_ref, w_rec1_ref,
                      b1_ref, wd_ref, bd_ref, out_ref, xw0_ref,
                      *, hidden_pad, seq_len, batch_pad):
    """Single-invocation fused forward.

    x_ref:      (T*Bp, E)   bf16  time-major embedded inputs (row t*Bp+b)
    w_in0_ref:  (E,  4Hp)   bf16  layer-0 input weight, gate-aligned columns
    b0_ref:     (1,  4Hp)   f32   layer-0 combined bias, gate-aligned
    w_rec0_ref: (Hp, 4Hp)   bf16  layer-0 recurrent weight
    w_in1_ref:  (Hp, 4Hp)   bf16  layer-1 input weight (input = h0)
    w_rec1_ref: (Hp, 4Hp)   bf16  layer-1 recurrent weight
    b1_ref:     (1,  4Hp)   f32   layer-1 combined bias
    wd_ref:     (Hp, HPout) bf16  dense weight^T, lane-padded
    bd_ref:     (1,  HPout) f32   dense bias, lane-padded
    out_ref:    (Bp, HPout) f32   relu(dense(last hidden)), padded
    xw0_ref:    (T*Bp, 4Hp) f32 VMEM scratch: hoisted layer-0 input projection
    """
    Hp = hidden_pad
    T = seq_len
    Bp = batch_pad

    # ---- Hoisted layer-0 input projection + bias: one MXU-efficient matmul with
    # M = T*Bp rows, off the recurrent critical path.  Stored once to VMEM scratch;
    # per-step reads below are aligned, unmasked (Bp, 4Hp) loads.
    xw0_ref[...] = jnp.dot(x_ref[...], w_in0_ref[...],
                           preferred_element_type=jnp.float32) + b0_ref[...]

    # Loop-invariant weight/bias loads hoisted out of the unrolled time loop.
    w_rec0 = w_rec0_ref[...]
    w_in1 = w_in1_ref[...]
    w_rec1 = w_rec1_ref[...]
    b1 = b1_ref[...]

    def gate_act(gates):
        # Gate blocks start at 128-aligned columns g*Hp; sigmoid only on i/f/o,
        # tanh only on g (no full-width double activation, no lane-mask select).
        i_g = jax.nn.sigmoid(gates[:, 0 * Hp:1 * Hp])
        f_g = jax.nn.sigmoid(gates[:, 1 * Hp:2 * Hp])
        g_g = jnp.tanh(gates[:, 2 * Hp:3 * Hp])
        o_g = jax.nn.sigmoid(gates[:, 3 * Hp:4 * Hp])
        return i_g, f_g, g_g, o_g

    zeros = jnp.zeros((Bp, Hp), jnp.float32)
    h0 = zeros
    c0 = zeros
    h1 = zeros
    c1 = zeros

    # T is small & static: fully unrolled straight-line time loop.
    # TODO(synk): for large T switch to lax.fori_loop(..., unroll=4-8).
    for t in range(T):
        # ---- layer 0: precomputed input projection + recurrent matmul only ----
        g0 = xw0_ref[pl.ds(t * Bp, Bp), :] + jnp.dot(
            h0.astype(jnp.bfloat16), w_rec0, preferred_element_type=jnp.float32)
        i0, f0, gg0, o0 = gate_act(g0)
        c0 = f0 * c0 + i0 * gg0
        h0 = o0 * jnp.tanh(c0)
        # TODO(synk): PyTorch applies dropout(0.5) to h0 here in training mode only.

        # ---- layer 1: input projection (depends on h0) + recurrent matmul ----
        g1 = (jnp.dot(h0.astype(jnp.bfloat16), w_in1,
                      preferred_element_type=jnp.float32)
              + jnp.dot(h1.astype(jnp.bfloat16), w_rec1,
                        preferred_element_type=jnp.float32)
              + b1)
        i1, f1, gg1, o1 = gate_act(g1)
        c1 = f1 * c1 + i1 * gg1
        h1 = o1 * jnp.tanh(c1)

    # dense2 + ReLU on the last timestep's hidden state; lane-dense padded output.
    out_ref[...] = jnp.maximum(
        jnp.dot(h1.astype(jnp.bfloat16), wd_ref[...],
                preferred_element_type=jnp.float32) + bd_ref[...],
        0.0,
    )


# ---------------------------------------------------------------------------
# Wrapper: weight prep (gate-aligned padding, transpose, bf16 cast) + pallas_call
# ---------------------------------------------------------------------------
def _pack_gate_weight(w, H, Hp, k_pad=None):
    """torch-layout (4H, K) -> transposed (Kp, 4Hp) with gate g at cols [g*Hp, g*Hp+H)."""
    K = w.shape[1]
    Kp = K if k_pad is None else k_pad
    wt = w.T  # (K, 4H)
    out = jnp.zeros((Kp, 4 * Hp), jnp.float32)
    for g in range(4):
        out = out.at[:K, g * Hp:g * Hp + H].set(wt[:, g * H:(g + 1) * H])
    return out.astype(jnp.bfloat16)


def _pack_gate_bias(b, H, Hp):
    """(1, 4H) -> (1, 4Hp) with gate g at cols [g*Hp, g*Hp+H), f32."""
    out = jnp.zeros((1, 4 * Hp), jnp.float32)
    for g in range(4):
        out = out.at[0, g * Hp:g * Hp + H].set(b[0, g * H:(g + 1) * H])
    return out


def trace_gen_forward(params, inputs):
    """Full TraceGen forward.  inputs: (B, T) int32 token ids in [0, height)."""
    H = params["hidden_dim"]
    E = params["embeddings"].shape[1]
    height = params["w_dense"].shape[0]
    B, T = inputs.shape

    Hp = _round_up(max(H, 128), 128)           # per-gate, lane-aligned width
    HPout = _round_up(max(height, 128), 128)   # lane-dense output width
    Bp = _round_up(max(B, 16), 16)             # sublane-padded batch (bf16 tile = 16)

    # Embedding lookup (glue, plain JAX gather), time-major, batch-padded, bf16.
    x = params["embeddings"][inputs.T]                     # (T, B, E) f32
    x = jnp.pad(x, ((0, 0), (0, Bp - B), (0, 0)))          # (T, Bp, E)
    x2 = x.reshape(T * Bp, E).astype(jnp.bfloat16)         # (T*Bp, E) bf16

    # One-time weight prep (in production this would be done once, not per call).
    w_in0 = _pack_gate_weight(params["w_ih0"], H, Hp)                 # (E,  4Hp)
    w_rec0 = _pack_gate_weight(params["w_hh0"], H, Hp, k_pad=Hp)      # (Hp, 4Hp)
    w_in1 = _pack_gate_weight(params["w_ih1"], H, Hp, k_pad=Hp)       # (Hp, 4Hp)
    w_rec1 = _pack_gate_weight(params["w_hh1"], H, Hp, k_pad=Hp)      # (Hp, 4Hp)
    b0 = _pack_gate_bias(params["b0"], H, Hp)                         # (1, 4Hp) f32
    b1 = _pack_gate_bias(params["b1"], H, Hp)                         # (1, 4Hp) f32
    wd = (jnp.zeros((Hp, HPout), jnp.float32)
          .at[:H, :height].set(params["w_dense"].T)).astype(jnp.bfloat16)
    bd = jnp.zeros((1, HPout), jnp.float32).at[0, :height].set(params["b_dense"])

    kernel = functools.partial(_trace_gen_kernel,
                               hidden_pad=Hp, seq_len=T, batch_pad=Bp)
    out_padded = pl.pallas_call(
        kernel,
        out_shape=jax.ShapeDtypeStruct((Bp, HPout), jnp.float32),
        scratch_shapes=[
            pltpu.VMEM((T * Bp, 4 * Hp), jnp.float32),   # hoisted layer-0 projection
        ],
    )(x2, w_in0, b0, w_rec0, w_in1, w_rec1, b1, wd, bd)

    return out_padded[:B, :height]                        # (B, height)


# ---------------------------------------------------------------------------
# Deterministic parameter construction (synthetic init, no checkpoint)
# ---------------------------------------------------------------------------
def make_params(key, height, embedding_dim, hidden_dim):
    ks = jax.random.split(key, 10)
    scale = 0.1
    return {
        "hidden_dim": hidden_dim,
        "embeddings": scale * jax.random.normal(ks[0], (height, embedding_dim), jnp.float32),
        # layer 0: E -> H
        "w_ih0": scale * jax.random.normal(ks[1], (4 * hidden_dim, embedding_dim), jnp.float32),
        "w_hh0": scale * jax.random.normal(ks[2], (4 * hidden_dim, hidden_dim), jnp.float32),
        "b0": (scale * jax.random.normal(ks[3], (4 * hidden_dim,), jnp.float32)).reshape(1, -1),
        # layer 1: H -> H
        "w_ih1": scale * jax.random.normal(ks[4], (4 * hidden_dim, hidden_dim), jnp.float32),
        "w_hh1": scale * jax.random.normal(ks[5], (4 * hidden_dim, hidden_dim), jnp.float32),
        "b1": (scale * jax.random.normal(ks[6], (4 * hidden_dim,), jnp.float32)).reshape(1, -1),
        # dense2: H -> height
        "w_dense": scale * jax.random.normal(ks[7], (height, hidden_dim), jnp.float32),
        "b_dense": scale * jax.random.normal(ks[8], (height,), jnp.float32),
    }


# ---------------------------------------------------------------------------
# Pure-JAX f32 reference (sanity check; kernel uses bf16 matmul operands, so the
# tolerance below is loosened accordingly)
# ---------------------------------------------------------------------------
def _ref_forward(params, inputs):
    H = params["hidden_dim"]
    embeds = params["embeddings"][inputs]        # (B, T, E)
    B, T, _ = embeds.shape

    def run_layer(x, w_ih, w_hh, b):
        h = jnp.zeros((B, H), jnp.float32)
        c = jnp.zeros((B, H), jnp.float32)
        outs = []
        for t in range(T):
            g = x[:, t] @ w_ih.T + h @ w_hh.T + b[0]
            i = jax.nn.sigmoid(g[:, 0 * H:1 * H])
            f = jax.nn.sigmoid(g[:, 1 * H:2 * H])
            gg = jnp.tanh(g[:, 2 * H:3 * H])
            o = jax.nn.sigmoid(g[:, 3 * H:4 * H])
            c = f * c + i * gg
            h = o * jnp.tanh(c)
            outs.append(h)
        return jnp.stack(outs, axis=1)           # (B, T, H)

    h1 = run_layer(embeds, params["w_ih0"], params["w_hh0"], params["b0"])
    h2 = run_layer(h1, params["w_ih1"], params["w_hh1"], params["b1"])
    last = h2[:, -1]
    return jnp.maximum(last @ params["w_dense"].T + params["b_dense"], 0.0)


if __name__ == "__main__":
    # Small shapes consistent with the module's forward: (B, T) int token ids.
    HEIGHT = 16        # vocab / output size
    EMBED_DIM = 32
    HIDDEN_DIM = 32
    B, T = 2, 8

    key = jax.random.PRNGKey(0)
    pkey, ikey = jax.random.split(key)
    params = make_params(pkey, HEIGHT, EMBED_DIM, HIDDEN_DIM)
    inputs = jax.random.randint(ikey, (B, T), 0, HEIGHT, dtype=jnp.int32)

    out = trace_gen_forward(params, inputs)
    out = jax.block_until_ready(out)

    ref = _ref_forward(params, inputs)
    assert out.shape == (B, HEIGHT)
    # bf16 MXU operands vs f32 reference -> loosened tolerance.
    assert jnp.allclose(out, ref, atol=2e-2, rtol=2e-2), float(jnp.max(jnp.abs(out - ref)))

    print("KERNEL_OK")
</pallas_src>

<mosaic_0001>
module attributes {stable_mosaic.version = 11 : i64} {
  func.func @_trace_gen_kernel(%arg0: memref<128x32xbf16, #tpu.memory_space<vmem>>, %arg1: memref<32x512xbf16, #tpu.memory_space<vmem>>, %arg2: memref<1x512xf32, #tpu.memory_space<vmem>>, %arg3: memref<128x512xbf16, #tpu.memory_space<vmem>>, %arg4: memref<128x512xbf16, #tpu.memory_space<vmem>>, %arg5: memref<128x512xbf16, #tpu.memory_space<vmem>>, %arg6: memref<1x512xf32, #tpu.memory_space<vmem>>, %arg7: memref<128x128xbf16, #tpu.memory_space<vmem>>, %arg8: memref<1x128xf32, #tpu.memory_space<vmem>>, %arg9: memref<16x128xf32, #tpu.memory_space<vmem>>, %arg10: memref<128x512xf32, #tpu.memory_space<vmem>>) attributes {dimension_semantics = [], scalar_prefetch = 0 : i64, scratch_operands = 1 : i64, tpu.core_type = #tpu.core_type<tc>} {
    %c0 = arith.constant 0 : index
    %c0_0 = arith.constant 0 : index
    %0 = vector.load %arg0[%c0, %c0_0] : memref<128x32xbf16, #tpu.memory_space<vmem>>, vector<128x32xbf16>
    %c0_1 = arith.constant 0 : index
    %c0_2 = arith.constant 0 : index
    %1 = vector.load %arg1[%c0_1, %c0_2] : memref<32x512xbf16, #tpu.memory_space<vmem>>, vector<32x512xbf16>
    %cst = arith.constant dense<0.000000e+00> : vector<128x512xf32>
    %2 = tpu.matmul %0, %1, %cst {dimension_numbers = #tpu.dot_dimension_numbers<[1], [0], [0], [1], [0, 0, 1, 1], [], []>} : vector<128x32xbf16>, vector<32x512xbf16>, vector<128x512xf32> -> vector<128x512xf32>
    %c0_3 = arith.constant 0 : index
    %c0_4 = arith.constant 0 : index
    %3 = vector.load %arg2[%c0_3, %c0_4] : memref<1x512xf32, #tpu.memory_space<vmem>>, vector<1x512xf32>
    %4 = vector.broadcast %3 : vector<1x512xf32> to vector<128x512xf32>
    %5 = arith.addf %2, %4 : vector<128x512xf32>
    %c0_5 = arith.constant 0 : index
    %c0_6 = arith.constant 0 : index
    %6 = vector.load %arg10[%c0_5, %c0_6] : memref<128x512xf32, #tpu.memory_space<vmem>>, vector<128x512xf32>
    tpu.vector_store %arg10[%c0_5, %c0_6], %5 {strides = array<i32>} : memref<128x512xf32, #tpu.memory_space<vmem>>, vector<128x512xf32>,
    %c0_7 = arith.constant 0 : index
    %c0_8 = arith.constant 0 : index
    %7 = vector.load %arg3[%c0_7, %c0_8] : memref<128x512xbf16, #tpu.memory_space<vmem>>, vector<128x512xbf16>
    %c0_9 = arith.constant 0 : index
    %c0_10 = arith.constant 0 : index
    %8 = vector.load %arg4[%c0_9, %c0_10] : memref<128x512xbf16, #tpu.memory_space<vmem>>, vector<128x512xbf16>
    %c0_11 = arith.constant 0 : index
    %c0_12 = arith.constant 0 : index
    %9 = vector.load %arg5[%c0_11, %c0_12] : memref<128x512xbf16, #tpu.memory_space<vmem>>, vector<128x512xbf16>
    %c0_13 = arith.constant 0 : index
    %c0_14 = arith.constant 0 : index
    %10 = vector.load %arg6[%c0_13, %c0_14] : memref<1x512xf32, #tpu.memory_space<vmem>>, vector<1x512xf32>
    %cst_15 = arith.constant 0.000000e+00 : f32
    %11 = vector.broadcast %cst_15 : f32 to vector<16x128xf32>
    %c0_16 = arith.constant 0 : index
    %c0_17 = arith.constant 0 : index
    %12 = vector.load %arg10[%c0_16, %c0_17] : memref<128x512xf32, #tpu.memory_space<vmem>>, vector<16x512xf32>
    %13 = arith.truncf %11 : vector<16x128xf32> to vector<16x128xbf16>
    %cst_18 = arith.constant dense<0.000000e+00> : vector<16x512xf32>
    %14 = tpu.matmul %13, %7, %cst_18 {dimension_numbers = #tpu.dot_dimension_numbers<[1], [0], [0], [1], [0, 0, 1, 1], [], []>} : vector<16x128xbf16>, vector<128x512xbf16>, vector<16x512xf32> -> vector<16x512xf32>
    %15 = arith.addf %12, %14 : vector<16x512xf32>
    %16 = vector.extract_strided_slice %15 {offsets = [0, 0], sizes = [16, 128], strides = [1, 1]} : vector<16x512xf32> to vector<16x128xf32>
    %17 = arith.negf %16 : vector<16x128xf32>
    %18 = math.exp %17 : vector<16x128xf32>
    %cst_19 = arith.constant 1.000000e+00 : f32
    %19 = vector.broadcast %cst_19 : f32 to vector<16x128xf32>
    %20 = arith.addf %19, %18 : vector<16x128xf32>
    %21 = arith.divf %19, %20 : vector<16x128xf32>
    %22 = vector.extract_strided_slice %15 {offsets = [0, 128], sizes = [16, 128], strides = [1, 1]} : vector<16x512xf32> to vector<16x128xf32>
    %23 = arith.negf %22 : vector<16x128xf32>
    %24 = math.exp %23 : vector<16x128xf32>
    %cst_20 = arith.constant 1.000000e+00 : f32
    %25 = vector.broadcast %cst_20 : f32 to vector<16x128xf32>
    %26 = arith.addf %25, %24 : vector<16x128xf32>
    %27 = arith.divf %25, %26 : vector<16x128xf32>
    %28 = vector.extract_strided_slice %15 {offsets = [0, 256], sizes = [16, 128], strides = [1, 1]} : vector<16x512xf32> to vector<16x128xf32>
    %29 = math.tanh %28 : vector<16x128xf32>
    %30 = vector.extract_strided_slice %15 {offsets = [0, 384], sizes = [16, 128], strides = [1, 1]} : vector<16x512xf32> to vector<16x128xf32>
    %31 = arith.negf %30 : vector<16x128xf32>
    %32 = math.exp %31 : vector<16x128xf32>
    %cst_21 = arith.constant 1.000000e+00 : f32
    %33 = vector.broadcast %cst_21 : f32 to vector<16x128xf32>
    %34 = arith.addf %33, %32 : vector<16x128xf32>
    %35 = arith.divf %33, %34 : vector<16x128xf32>
    %36 = arith.mulf %27, %11 : vector<16x128xf32>
    %37 = arith.mulf %21, %29 : vector<16x128xf32>
    %38 = arith.addf %36, %37 : vector<16x128xf32>
    %39 = math.tanh %38 : vector<16x128xf32>
    %40 = arith.mulf %35, %39 : vector<16x128xf32>
    %41 = arith.truncf %40 : vector<16x128xf32> to vector<16x128xbf16>
    %cst_22 = arith.constant dense<0.000000e+00> : vector<16x512xf32>
    %42 = tpu.matmul %41, %8, %cst_22 {dimension_numbers = #tpu.dot_dimension_numbers<[1], [0], [0], [1], [0, 0, 1, 1], [], []>} : vector<16x128xbf16>, vector<128x512xbf16>, vector<16x512xf32> -> vector<16x512xf32>
    %43 = arith.truncf %11 : vector<16x128xf32> to vector<16x128xbf16>
    %cst_23 = arith.constant dense<0.000000e+00> : vector<16x512xf32>
    %44 = tpu.matmul %43, %9, %cst_23 {dimension_numbers = #tpu.dot_dimension_numbers<[1], [0], [0], [1], [0, 0, 1, 1], [], []>} : vector<16x128xbf16>, vector<128x512xbf16>, vector<16x512xf32> -> vector<16x512xf32>
    %45 = arith.addf %42, %44 : vector<16x512xf32>
    %46 = vector.broadcast %10 : vector<1x512xf32> to vector<16x512xf32>
    %47 = arith.addf %45, %46 : vector<16x512xf32>
    %48 = vector.extract_strided_slice %47 {offsets = [0, 0], sizes = [16, 128], strides = [1, 1]} : vector<16x512xf32> to vector<16x128xf32>
    %49 = arith.negf %48 : vector<16x128xf32>
    %50 = math.exp %49 : vector<16x128xf32>
    %cst_24 = arith.constant 1.000000e+00 : f32
    %51 = vector.broadcast %cst_24 : f32 to vector<16x128xf32>
    %52 = arith.addf %51, %50 : vector<16x128xf32>
    %53 = arith.divf %51, %52 : vector<16x128xf32>
    %54 = vector.extract_strided_slice %47 {offsets = [0, 128], sizes = [16, 128], strides = [1, 1]} : vector<16x512xf32> to vector<16x128xf32>
    %55 = arith.negf %54 : vector<16x128xf32>
    %56 = math.exp %55 : vector<16x128xf32>
    %cst_25 = arith.constant 1.000000e+00 : f32
    %57 = vector.broadcast %cst_25 : f32 to vector<16x128xf32>
    %58 = arith.addf %57, %56 : vector<16x128xf32>
    %59 = arith.divf %57, %58 : vector<16x128xf32>
    %60 = vector.extract_strided_slice %47 {offsets = [0, 256], sizes = [16, 128], strides = [1, 1]} : vector<16x512xf32> to vector<16x128xf32>
    %61 = math.tanh %60 : vector<16x128xf32>
    %62 = vector.extract_strided_slice %47 {offsets = [0, 384], sizes = [16, 128], strides = [1, 1]} : vector<16x512xf32> to vector<16x128xf32>
    %63 = arith.negf %62 : vector<16x128xf32>
    %64 = math.exp %63 : vector<16x128xf32>
    %cst_26 = arith.constant 1.000000e+00 : f32
    %65 = vector.broadcast %cst_26 : f32 to vector<16x128xf32>
    %66 = arith.addf %65, %64 : vector<16x128xf32>
    %67 = arith.divf %65, %66 : vector<16x128xf32>
    %68 = arith.mulf %59, %11 : vector<16x128xf32>
    %69 = arith.mulf %53, %61 : vector<16x128xf32>
    %70 = arith.addf %68, %69 : vector<16x128xf32>
    %71 = math.tanh %70 : vector<16x128xf32>
    %72 = arith.mulf %67, %71 : vector<16x128xf32>
    %c16 = arith.constant 16 : index
    %c0_27 = arith.constant 0 : index
    %73 = vector.load %arg10[%c16, %c0_27] : memref<128x512xf32, #tpu.memory_space<vmem>>, vector<16x512xf32>
    %74 = arith.truncf %40 : vector<16x128xf32> to vector<16x128xbf16>
    %cst_28 = arith.constant dense<0.000000e+00> : vector<16x512xf32>
    %75 = tpu.matmul %74, %7, %cst_28 {dimension_numbers = #tpu.dot_dimension_numbers<[1], [0], [0], [1], [0, 0, 1, 1], [], []>} : vector<16x128xbf16>, vector<128x512xbf16>, vector<16x512xf32> -> vector<16x512xf32>
    %76 = arith.addf %73, %75 : vector<16x512xf32>
    %77 = vector.extract_strided_slice %76 {offsets = [0, 0], sizes = [16, 128], strides = [1, 1]} : vector<16x512xf32> to vector<16x128xf32>
    %78 = arith.negf %77 : vector<16x128xf32>
    %79 = math.exp %78 : vector<16x128xf32>
    %cst_29 = arith.constant 1.000000e+00 : f32
    %80 = vector.broadcast %cst_29 : f32 to vector<16x128xf32>
    %81 = arith.addf %80, %79 : vector<16x128xf32>
    %82 = arith.divf %80, %81 : vector<16x128xf32>
    %83 = vector.extract_strided_slice %76 {offsets = [0, 128], sizes = [16, 128], strides = [1, 1]} : vector<16x512xf32> to vector<16x128xf32>
    %84 = arith.negf %83 : vector<16x128xf32>
    %85 = math.exp %84 : vector<16x128xf32>
    %cst_30 = arith.constant 1.000000e+00 : f32
    %86 = vector.broadcast %cst_30 : f32 to vector<16x128xf32>
    %87 = arith.addf %86, %85 : vector<16x128xf32>
    %88 = arith.divf %86, %87 : vector<16x128xf32>
    %89 = vector.extract_strided_slice %76 {offsets = [0, 256], sizes = [16, 128], strides = [1, 1]} : vector<16x512xf32> to vector<16x128xf32>
    %90 = math.tanh %89 : vector<16x128xf32>
    %91 = vector.extract_strided_slice %76 {offsets = [0, 384], sizes = [16, 128], strides = [1, 1]} : vector<16x512xf32> to vector<16x128xf32>
    %92 = arith.negf %91 : vector<16x128xf32>
    %93 = math.exp %92 : vector<16x128xf32>
    %cst_31 = arith.constant 1.000000e+00 : f32
    %94 = vector.broadcast %cst_31 : f32 to vector<16x128xf32>
    %95 = arith.addf %94, %93 : vector<16x128xf32>
    %96 = arith.divf %94, %95 : vector<16x128xf32>
    %97 = arith.mulf %88, %38 : vector<16x128xf32>
    %98 = arith.mulf %82, %90 : vector<16x128xf32>
    %99 = arith.addf %97, %98 : vector<16x128xf32>
    %100 = math.tanh %99 : vector<16x128xf32>
    %101 = arith.mulf %96, %100 : vector<16x128xf32>
    %102 = arith.truncf %101 : vector<16x128xf32> to vector<16x128xbf16>
    %cst_32 = arith.constant dense<0.000000e+00> : vector<16x512xf32>
    %103 = tpu.matmul %102, %8, %cst_32 {dimension_numbers = #tpu.dot_dimension_numbers<[1], [0], [0], [1], [0, 0, 1, 1], [], []>} : vector<16x128xbf16>, vector<128x512xbf16>, vector<16x512xf32> -> vector<16x512xf32>
    %104 = arith.truncf %72 : vector<16x128xf32> to vector<16x128xbf16>
    %cst_33 = arith.constant dense<0.000000e+00> : vector<16x512xf32>
    %105 = tpu.matmul %104, %9, %cst_33 {dimension_numbers = #tpu.dot_dimension_numbers<[1], [0], [0], [1], [0, 0, 1, 1], [], []>} : vector<16x128xbf16>, vector<128x512xbf16>, vector<16x512xf32> -> vector<16x512xf32>
    %106 = arith.addf %103, %105 : vector<16x512xf32>
    %107 = vector.broadcast %10 : vector<1x512xf32> to vector<16x512xf32>
    %108 = arith.addf %106, %107 : vector<16x512xf32>
    %109 = vector.extract_strided_slice %108 {offsets = [0, 0], sizes = [16, 128], strides = [1, 1]} : vector<16x512xf32> to vector<16x128xf32>
    %110 = arith.negf %109 : vector<16x128xf32>
    %111 = math.exp %110 : vector<16x128xf32>
    %cst_34 = arith.constant 1.000000e+00 : f32
    %112 = vector.broadcast %cst_34 : f32 to vector<16x128xf32>
    %113 = arith.addf %112, %111 : vector<16x128xf32>
    %114 = arith.divf %112, %113 : vector<16x128xf32>
    %115 = vector.extract_strided_slice %108 {offsets = [0, 128], sizes = [16, 128], strides = [1, 1]} : vector<16x512xf32> to vector<16x128xf32>
    %116 = arith.negf %115 : vector<16x128xf32>
    %117 = math.exp %116 : vector<16x128xf32>
    %cst_35 = arith.constant 1.000000e+00 : f32
    %118 = vector.broadcast %cst_35 : f32 to vector<16x128xf32>
    %119 = arith.addf %118, %117 : vector<16x128xf32>
    %120 = arith.divf %118, %119 : vector<16x128xf32>
    %121 = vector.extract_strided_slice %108 {offsets = [0, 256], sizes = [16, 128], strides = [1, 1]} : vector<16x512xf32> to vector<16x128xf32>
    %122 = math.tanh %121 : vector<16x128xf32>
    %123 = vector.extract_strided_slice %108 {offsets = [0, 384], sizes = [16, 128], strides = [1, 1]} : vector<16x512xf32> to vector<16x128xf32>
    %124 = arith.negf %123 : vector<16x128xf32>
    %125 = math.exp %124 : vector<16x128xf32>
    %cst_36 = arith.constant 1.000000e+00 : f32
    %126 = vector.broadcast %cst_36 : f32 to vector<16x128xf32>
    %127 = arith.addf %126, %125 : vector<16x128xf32>
    %128 = arith.divf %126, %127 : vector<16x128xf32>
    %129 = arith.mulf %120, %70 : vector<16x128xf32>
    %130 = arith.mulf %114, %122 : vector<16x128xf32>
    %131 = arith.addf %129, %130 : vector<16x128xf32>
    %132 = math.tanh %131 : vector<16x128xf32>
    %133 = arith.mulf %128, %132 : vector<16x128xf32>
    %c32 = arith.constant 32 : index
    %c0_37 = arith.constant 0 : index
    %134 = vector.load %arg10[%c32, %c0_37] : memref<128x512xf32, #tpu.memory_space<vmem>>, vector<16x512xf32>
    %135 = arith.truncf %101 : vector<16x128xf32> to vector<16x128xbf16>
    %cst_38 = arith.constant dense<0.000000e+00> : vector<16x512xf32>
    %136 = tpu.matmul %135, %7, %cst_38 {dimension_numbers = #tpu.dot_dimension_numbers<[1], [0], [0], [1], [0, 0, 1, 1], [], []>} : vector<16x128xbf16>, vector<128x512xbf16>, vector<16x512xf32> -> vector<16x512xf32>
    %137 = arith.addf %134, %136 : vector<16x512xf32>
    %138 = vector.extract_strided_slice %137 {offsets = [0, 0], sizes = [16, 128], strides = [1, 1]} : vector<16x512xf32> to vector<16x128xf32>
    %139 = arith.negf %138 : vector<16x128xf32>
    %140 = math.exp %139 : vector<16x128xf32>
    %cst_39 = arith.constant 1.000000e+00 : f32
    %141 = vector.broadcast %cst_39 : f32 to vector<16x128xf32>
    %142 = arith.addf %141, %140 : vector<16x128xf32>
    %143 = arith.divf %141, %142 : vector<16x128xf32>
    %144 = vector.extract_strided_slice %137 {offsets = [0, 128], sizes = [16, 128], strides = [1, 1]} : vector<16x512xf32> to vector<16x128xf32>
    %145 = arith.negf %144 : vector<16x128xf32>
    %146 = math.exp %145 : vector<16x128xf32>
    %cst_40 = arith.constant 1.000000e+00 : f32
    %147 = vector.broadcast %cst_40 : f32 to vector<16x128xf32>
    %148 = arith.addf %147, %146 : vector<16x128xf32>
    %149 = arith.divf %147, %148 : vector<16x128xf32>
    %150 = vector.extract_strided_slice %137 {offsets = [0, 256], sizes = [16, 128], strides = [1, 1]} : vector<16x512xf32> to vector<16x128xf32>
    %151 = math.tanh %150 : vector<16x128xf32>
    %152 = vector.extract_strided_slice %137 {offsets = [0, 384], sizes = [16, 128], strides = [1, 1]} : vector<16x512xf32> to vector<16x128xf32>
    %153 = arith.negf %152 : vector<16x128xf32>
    %154 = math.exp %153 : vector<16x128xf32>
    %cst_41 = arith.constant 1.000000e+00 : f32
    %155 = vector.broadcast %cst_41 : f32 to vector<16x128xf32>
    %156 = arith.addf %155, %154 : vector<16x128xf32>
    %157 = arith.divf %155, %156 : vector<16x128xf32>
    %158 = arith.mulf %149, %99 : vector<16x128xf32>
    %159 = arith.mulf %143, %151 : vector<16x128xf32>
    %160 = arith.addf %158, %159 : vector<16x128xf32>
    %161 = math.tanh %160 : vector<16x128xf32>
    %162 = arith.mulf %157, %161 : vector<16x128xf32>
    %163 = arith.truncf %162 : vector<16x128xf32> to vector<16x128xbf16>
    %cst_42 = arith.constant dense<0.000000e+00> : vector<16x512xf32>
    %164 = tpu.matmul %163, %8, %cst_42 {dimension_numbers = #tpu.dot_dimension_numbers<[1], [0], [0], [1], [0, 0, 1, 1], [], []>} : vector<16x128xbf16>, vector<128x512xbf16>, vector<16x512xf32> -> vector<16x512xf32>
    %165 = arith.truncf %133 : vector<16x128xf32> to vector<16x128xbf16>
    %cst_43 = arith.constant dense<0.000000e+00> : vector<16x512xf32>
    %166 = tpu.matmul %165, %9, %cst_43 {dimension_numbers = #tpu.dot_dimension_numbers<[1], [0], [0], [1], [0, 0, 1, 1], [], []>} : vector<16x128xbf16>, vector<128x512xbf16>, vector<16x512xf32> -> vector<16x512xf32>
    %167 = arith.addf %164, %166 : vector<16x512xf32>
    %168 = vector.broadcast %10 : vector<1x512xf32> to vector<16x512xf32>
    %169 = arith.addf %167, %168 : vector<16x512xf32>
    %170 = vector.extract_strided_slice %169 {offsets = [0, 0], sizes = [16, 128], strides = [1, 1]} : vector<16x512xf32> to vector<16x128xf32>
    %171 = arith.negf %170 : vector<16x128xf32>
    %172 = math.exp %171 : vector<16x128xf32>
    %cst_44 = arith.constant 1.000000e+00 : f32
    %173 = vector.broadcast %cst_44 : f32 to vector<16x128xf32>
    %174 = arith.addf %173, %172 : vector<16x128xf32>
    %175 = arith.divf %173, %174 : vector<16x128xf32>
    %176 = vector.extract_strided_slice %169 {offsets = [0, 128], sizes = [16, 128], strides = [1, 1]} : vector<16x512xf32> to vector<16x128xf32>
    %177 = arith.negf %176 : vector<16x128xf32>
    %178 = math.exp %177 : vector<16x128xf32>
    %cst_45 = arith.constant 1.000000e+00 : f32
    %179 = vector.broadcast %cst_45 : f32 to vector<16x128xf32>
    %180 = arith.addf %179, %178 : vector<16x128xf32>
    %181 = arith.divf %179, %180 : vector<16x128xf32>
    %182 = vector.extract_strided_slice %169 {offsets = [0, 256], sizes = [16, 128], strides = [1, 1]} : vector<16x512xf32> to vector<16x128xf32>
    %183 = math.tanh %182 : vector<16x128xf32>
    %184 = vector.extract_strided_slice %169 {offsets = [0, 384], sizes = [16, 128], strides = [1, 1]} : vector<16x512xf32> to vector<16x128xf32>
    %185 = arith.negf %184 : vector<16x128xf32>
    %186 = math.exp %185 : vector<16x128xf32>
    %cst_46 = arith.constant 1.000000e+00 : f32
    %187 = vector.broadcast %cst_46 : f32 to vector<16x128xf32>
    %188 = arith.addf %187, %186 : vector<16x128xf32>
    %189 = arith.divf %187, %188 : vector<16x128xf32>
    %190 = arith.mulf %181, %131 : vector<16x128xf32>
    %191 = arith.mulf %175, %183 : vector<16x128xf32>
    %192 = arith.addf %190, %191 : vector<16x128xf32>
    %193 = math.tanh %192 : vector<16x128xf32>
    %194 = arith.mulf %189, %193 : vector<16x128xf32>
    %c48 = arith.constant 48 : index
    %c0_47 = arith.constant 0 : index
    %195 = vector.load %arg10[%c48, %c0_47] : memref<128x512xf32, #tpu.memory_space<vmem>>, vector<16x512xf32>
    %196 = arith.truncf %162 : vector<16x128xf32> to vector<16x128xbf16>
    %cst_48 = arith.constant dense<0.000000e+00> : vector<16x512xf32>
    %197 = tpu.matmul %196, %7, %cst_48 {dimension_numbers = #tpu.dot_dimension_numbers<[1], [0], [0], [1], [0, 0, 1, 1], [], []>} : vector<16x128xbf16>, vector<128x512xbf16>, vector<16x512xf32> -> vector<16x512xf32>
    %198 = arith.addf %195, %197 : vector<16x512xf32>
    %199 = vector.extract_strided_slice %198 {offsets = [0, 0], sizes = [16, 128], strides = [1, 1]} : vector<16x512xf32> to vector<16x128xf32>
    %200 = arith.negf %199 : vector<16x128xf32>
    %201 = math.exp %200 : vector<16x128xf32>
    %cst_49 = arith.constant 1.000000e+00 : f32
    %202 = vector.broadcast %cst_49 : f32 to vector<16x128xf32>
    %203 = arith.addf %202, %201 : vector<16x128xf32>
    %204 = arith.divf %202, %203 : vector<16x128xf32>
    %205 = vector.extract_strided_slice %198 {offsets = [0, 128], sizes = [16, 128], strides = [1, 1]} : vector<16x512xf32> to vector<16x128xf32>
    %206 = arith.negf %205 : vector<16x128xf32>
    %207 = math.exp %206 : vector<16x128xf32>
    %cst_50 = arith.constant 1.000000e+00 : f32
    %208 = vector.broadcast %cst_50 : f32 to vector<16x128xf32>
    %209 = arith.addf %208, %207 : vector<16x128xf32>
    %210 = arith.divf %208, %209 : vector<16x128xf32>
    %211 = vector.extract_strided_slice %198 {offsets = [0, 256], sizes = [16, 128], strides = [1, 1]} : vector<16x512xf32> to vector<16x128xf32>
    %212 = math.tanh %211 : vector<16x128xf32>
    %213 = vector.extract_strided_slice %198 {offsets = [0, 384], sizes = [16, 128], strides = [1, 1]} : vector<16x512xf32> to vector<16x128xf32>
    %214 = arith.negf %213 : vector<16x128xf32>
    %215 = math.exp %214 : vector<16x128xf32>
    %cst_51 = arith.constant 1.000000e+00 : f32
    %216 = vector.broadcast %cst_51 : f32 to vector<16x128xf32>
    %217 = arith.addf %216, %215 : vector<16x128xf32>
    %218 = arith.divf %216, %217 : vector<16x128xf32>
    %219 = arith.mulf %210, %160 : vector<16x128xf32>
    %220 = arith.mulf %204, %212 : vector<16x128xf32>
    %221 = arith.addf %219, %220 : vector<16x128xf32>
    %222 = math.tanh %221 : vector<16x128xf32>
    %223 = arith.mulf %218, %222 : vector<16x128xf32>
    %224 = arith.truncf %223 : vector<16x128xf32> to vector<16x128xbf16>
    %cst_52 = arith.constant dense<0.000000e+00> : vector<16x512xf32>
    %225 = tpu.matmul %224, %8, %cst_52 {dimension_numbers = #tpu.dot_dimension_numbers<[1], [0], [0], [1], [0, 0, 1, 1], [], []>} : vector<16x128xbf16>, vector<128x512xbf16>, vector<16x512xf32> -> vector<16x512xf32>
    %226 = arith.truncf %194 : vector<16x128xf32> to vector<16x128xbf16>
    %cst_53 = arith.constant dense<0.000000e+00> : vector<16x512xf32>
    %227 = tpu.matmul %226, %9, %cst_53 {dimension_numbers = #tpu.dot_dimension_numbers<[1], [0], [0], [1], [0, 0, 1, 1], [], []>} : vector<16x128xbf16>, vector<128x512xbf16>, vector<16x512xf32> -> vector<16x512xf32>
    %228 = arith.addf %225, %227 : vector<16x512xf32>
    %229 = vector.broadcast %10 : vector<1x512xf32> to vector<16x512xf32>
    %230 = arith.addf %228, %229 : vector<16x512xf32>
    %231 = vector.extract_strided_slice %230 {offsets = [0, 0], sizes = [16, 128], strides = [1, 1]} : vector<16x512xf32> to vector<16x128xf32>
    %232 = arith.negf %231 : vector<16x128xf32>
    %233 = math.exp %232 : vector<16x128xf32>
    %cst_54 = arith.constant 1.000000e+00 : f32
    %234 = vector.broadcast %cst_54 : f32 to vector<16x128xf32>
    %235 = arith.addf %234, %233 : vector<16x128xf32>
    %236 = arith.divf %234, %235 : vector<16x128xf32>
    %237 = vector.extract_strided_slice %230 {offsets = [0, 128], sizes = [16, 128], strides = [1, 1]} : vector<16x512xf32> to vector<16x128xf32>
    %238 = arith.negf %237 : vector<16x128xf32>
    %239 = math.exp %238 : vector<16x128xf32>
    %cst_55 = arith.constant 1.000000e+00 : f32
    %240 = vector.broadcast %cst_55 : f32 to vector<16x128xf32>
    %241 = arith.addf %240, %239 : vector<16x128xf32>
    %242 = arith.divf %240, %241 : vector<16x128xf32>
    %243 = vector.extract_strided_slice %230 {offsets = [0, 256], sizes = [16, 128], strides = [1, 1]} : vector<16x512xf32> to vector<16x128xf32>
    %244 = math.tanh %243 : vector<16x128xf32>
    %245 = vector.extract_strided_slice %230 {offsets = [0, 384], sizes = [16, 128], strides = [1, 1]} : vector<16x512xf32> to vector<16x128xf32>
    %246 = arith.negf %245 : vector<16x128xf32>
    %247 = math.exp %246 : vector<16x128xf32>
    %cst_56 = arith.constant 1.000000e+00 : f32
    %248 = vector.broadcast %cst_56 : f32 to vector<16x128xf32>
    %249 = arith.addf %248, %247 : vector<16x128xf32>
    %250 = arith.divf %248, %249 : vector<16x128xf32>
    %251 = arith.mulf %242, %192 : vector<16x128xf32>
    %252 = arith.mulf %236, %244 : vector<16x128xf32>
    %253 = arith.addf %251, %252 : vector<16x128xf32>
    %254 = math.tanh %253 : vector<16x128xf32>
    %255 = arith.mulf %250, %254 : vector<16x128xf32>
    %c64 = arith.constant 64 : index
    %c0_57 = arith.constant 0 : index
    %256 = vector.load %arg10[%c64, %c0_57] : memref<128x512xf32, #tpu.memory_space<vmem>>, vector<16x512xf32>
    %257 = arith.truncf %223 : vector<16x128xf32> to vector<16x128xbf16>
    %cst_58 = arith.constant dense<0.000000e+00> : vector<16x512xf32>
    %258 = tpu.matmul %257, %7, %cst_58 {dimension_numbers = #tpu.dot_dimension_numbers<[1], [0], [0], [1], [0, 0, 1, 1], [], []>} : vector<16x128xbf16>, vector<128x512xbf16>, vector<16x512xf32> -> vector<16x512xf32>
    %259 = arith.addf %256, %258 : vector<16x512xf32>
    %260 = vector.extract_strided_slice %259 {offsets = [0, 0], sizes = [16, 128], strides = [1, 1]} : vector<16x512xf32> to vector<16x128xf32>
    %261 = arith.negf %260 : vector<16x128xf32>
    %262 = math.exp %261 : vector<16x128xf32>
    %cst_59 = arith.constant 1.000000e+00 : f32
    %263 = vector.broadcast %cst_59 : f32 to vector<16x128xf32>
    %264 = arith.addf %263, %262 : vector<16x128xf32>
    %265 = arith.divf %263, %264 : vector<16x128xf32>
    %266 = vector.extract_strided_slice %259 {offsets = [0, 128], sizes = [16, 128], strides = [1, 1]} : vector<16x512xf32> to vector<16x128xf32>
    %267 = arith.negf %266 : vector<16x128xf32>
    %268 = math.exp %267 : vector<16x128xf32>
    %cst_60 = arith.constant 1.000000e+00 : f32
    %269 = vector.broadcast %cst_60 : f32 to vector<16x128xf32>
    %270 = arith.addf %269, %268 : vector<16x128xf32>
    %271 = arith.divf %269, %270 : vector<16x128xf32>
    %272 = vector.extract_strided_slice %259 {offsets = [0, 256], sizes = [16, 128], strides = [1, 1]} : vector<16x512xf32> to vector<16x128xf32>
    %273 = math.tanh %272 : vector<16x128xf32>
    %274 = vector.extract_strided_slice %259 {offsets = [0, 384], sizes = [16, 128], strides = [1, 1]} : vector<16x512xf32> to vector<16x128xf32>
    %275 = arith.negf %274 : vector<16x128xf32>
    %276 = math.exp %275 : vector<16x128xf32>
    %cst_61 = arith.constant 1.000000e+00 : f32
    %277 = vector.broadcast %cst_61 : f32 to vector<16x128xf32>
    %278 = arith.addf %277, %276 : vector<16x128xf32>
    %279 = arith.divf %277, %278 : vector<16x128xf32>
    %280 = arith.mulf %271, %221 : vector<16x128xf32>
    %281 = arith.mulf %265, %273 : vector<16x128xf32>
    %282 = arith.addf %280, %281 : vector<16x128xf32>
    %283 = math.tanh %282 : vector<16x128xf32>
    %284 = arith.mulf %279, %283 : vector<16x128xf32>
    %285 = arith.truncf %284 : vector<16x128xf32> to vector<16x128xbf16>
    %cst_62 = arith.constant dense<0.000000e+00> : vector<16x512xf32>
    %286 = tpu.matmul %285, %8, %cst_62 {dimension_numbers = #tpu.dot_dimension_numbers<[1], [0], [0], [1], [0, 0, 1, 1], [], []>} : vector<16x128xbf16>, vector<128x512xbf16>, vector<16x512xf32> -> vector<16x512xf32>
    %287 = arith.truncf %255 : vector<16x128xf32> to vector<16x128xbf16>
    %cst_63 = arith.constant dense<0.000000e+00> : vector<16x512xf32>
    %288 = tpu.matmul %287, %9, %cst_63 {dimension_numbers = #tpu.dot_dimension_numbers<[1], [0], [0], [1], [0, 0, 1, 1], [], []>} : vector<16x128xbf16>, vector<128x512xbf16>, vector<16x512xf32> -> vector<16x512xf32>
    %289 = arith.addf %286, %288 : vector<16x512xf32>
    %290 = vector.broadcast %10 : vector<1x512xf32> to vector<16x512xf32>
    %291 = arith.addf %289, %290 : vector<16x512xf32>
    %292 = vector.extract_strided_slice %291 {offsets = [0, 0], sizes = [16, 128], strides = [1, 1]} : vector<16x512xf32> to vector<16x128xf32>
    %293 = arith.negf %292 : vector<16x128xf32>
    %294 = math.exp %293 : vector<16x128xf32>
    %cst_64 = arith.constant 1.000000e+00 : f32
    %295 = vector.broadcast %cst_64 : f32 to vector<16x128xf32>
    %296 = arith.addf %295, %294 : vector<16x128xf32>
    %297 = arith.divf %295, %296 : vector<16x128xf32>
    %298 = vector.extract_strided_slice %291 {offsets = [0, 128], sizes = [16, 128], strides = [1, 1]} : vector<16x512xf32> to vector<16x128xf32>
    %299 = arith.negf %298 : vector<16x128xf32>
    %300 = math.exp %299 : vector<16x128xf32>
    %cst_65 = arith.constant 1.000000e+00 : f32
    %301 = vector.broadcast %cst_65 : f32 to vector<16x128xf32>
    %302 = arith.addf %301, %300 : vector<16x128xf32>
    %303 = arith.divf %301, %302 : vector<16x128xf32>
    %304 = vector.extract_strided_slice %291 {offsets = [0, 256], sizes = [16, 128], strides = [1, 1]} : vector<16x512xf32> to vector<16x128xf32>
    %305 = math.tanh %304 : vector<16x128xf32>
    %306 = vector.extract_strided_slice %291 {offsets = [0, 384], sizes = [16, 128], strides = [1, 1]} : vector<16x512xf32> to vector<16x128xf32>
    %307 = arith.negf %306 : vector<16x128xf32>
    %308 = math.exp %307 : vector<16x128xf32>
    %cst_66 = arith.constant 1.000000e+00 : f32
    %309 = vector.broadcast %cst_66 : f32 to vector<16x128xf32>
    %310 = arith.addf %309, %308 : vector<16x128xf32>
    %311 = arith.divf %309, %310 : vector<16x128xf32>
    %312 = arith.mulf %303, %253 : vector<16x128xf32>
    %313 = arith.mulf %297, %305 : vector<16x128xf32>
    %314 = arith.addf %312, %313 : vector<16x128xf32>
    %315 = math.tanh %314 : vector<16x128xf32>
    %316 = arith.mulf %311, %315 : vector<16x128xf32>
    %c80 = arith.constant 80 : index
    %c0_67 = arith.constant 0 : index
    %317 = vector.load %arg10[%c80, %c0_67] : memref<128x512xf32, #tpu.memory_space<vmem>>, vector<16x512xf32>
    %318 = arith.truncf %284 : vector<16x128xf32> to vector<16x128xbf16>
    %cst_68 = arith.constant dense<0.000000e+00> : vector<16x512xf32>
    %319 = tpu.matmul %318, %7, %cst_68 {dimension_numbers = #tpu.dot_dimension_numbers<[1], [0], [0], [1], [0, 0, 1, 1], [], []>} : vector<16x128xbf16>, vector<128x512xbf16>, vector<16x512xf32> -> vector<16x512xf32>
    %320 = arith.addf %317, %319 : vector<16x512xf32>
    %321 = vector.extract_strided_slice %320 {offsets = [0, 0], sizes = [16, 128], strides = [1, 1]} : vector<16x512xf32> to vector<16x128xf32>
    %322 = arith.negf %321 : vector<16x128xf32>
    %323 = math.exp %322 : vector<16x128xf32>
    %cst_69 = arith.constant 1.000000e+00 : f32
    %324 = vector.broadcast %cst_69 : f32 to vector<16x128xf32>
    %325 = arith.addf %324, %323 : vector<16x128xf32>
    %326 = arith.divf %324, %325 : vector<16x128xf32>
    %327 = vector.extract_strided_slice %320 {offsets = [0, 128], sizes = [16, 128], strides = [1, 1]} : vector<16x512xf32> to vector<16x128xf32>
    %328 = arith.negf %327 : vector<16x128xf32>
    %329 = math.exp %328 : vector<16x128xf32>
    %cst_70 = arith.constant 1.000000e+00 : f32
    %330 = vector.broadcast %cst_70 : f32 to vector<16x128xf32>
    %331 = arith.addf %330, %329 : vector<16x128xf32>
    %332 = arith.divf %330, %331 : vector<16x128xf32>
    %333 = vector.extract_strided_slice %320 {offsets = [0, 256], sizes = [16, 128], strides = [1, 1]} : vector<16x512xf32> to vector<16x128xf32>
    %334 = math.tanh %333 : vector<16x128xf32>
    %335 = vector.extract_strided_slice %320 {offsets = [0, 384], sizes = [16, 128], strides = [1, 1]} : vector<16x512xf32> to vector<16x128xf32>
    %336 = arith.negf %335 : vector<16x128xf32>
    %337 = math.exp %336 : vector<16x128xf32>
    %cst_71 = arith.constant 1.000000e+00 : f32
    %338 = vector.broadcast %cst_71 : f32 to vector<16x128xf32>
    %339 = arith.addf %338, %337 : vector<16x128xf32>
    %340 = arith.divf %338, %339 : vector<16x128xf32>
    %341 = arith.mulf %332, %282 : vector<16x128xf32>
    %342 = arith.mulf %326, %334 : vector<16x128xf32>
    %343 = arith.addf %341, %342 : vector<16x128xf32>
    %344 = math.tanh %343 : vector<16x128xf32>
    %345 = arith.mulf %340, %344 : vector<16x128xf32>
    %346 = arith.truncf %345 : vector<16x128xf32> to vector<16x128xbf16>
    %cst_72 = arith.constant dense<0.000000e+00> : vector<16x512xf32>
    %347 = tpu.matmul %346, %8, %cst_72 {dimension_numbers = #tpu.dot_dimension_numbers<[1], [0], [0], [1], [0, 0, 1, 1], [], []>} : vector<16x128xbf16>, vector<128x512xbf16>, vector<16x512xf32> -> vector<16x512xf32>
    %348 = arith.truncf %316 : vector<16x128xf32> to vector<16x128xbf16>
    %cst_73 = arith.constant dense<0.000000e+00> : vector<16x512xf32>
    %349 = tpu.matmul %348, %9, %cst_73 {dimension_numbers = #tpu.dot_dimension_numbers<[1], [0], [0], [1], [0, 0, 1, 1], [], []>} : vector<16x128xbf16>, vector<128x512xbf16>, vector<16x512xf32> -> vector<16x512xf32>
    %350 = arith.addf %347, %349 : vector<16x512xf32>
    %351 = vector.broadcast %10 : vector<1x512xf32> to vector<16x512xf32>
    %352 = arith.addf %350, %351 : vector<16x512xf32>
    %353 = vector.extract_strided_slice %352 {offsets = [0, 0], sizes = [16, 128], strides = [1, 1]} : vector<16x512xf32> to vector<16x128xf32>
    %354 = arith.negf %353 : vector<16x128xf32>
    %355 = math.exp %354 : vector<16x128xf32>
    %cst_74 = arith.constant 1.000000e+00 : f32
    %356 = vector.broadcast %cst_74 : f32 to vector<16x128xf32>
    %357 = arith.addf %356, %355 : vector<16x128xf32>
    %358 = arith.divf %356, %357 : vector<16x128xf32>
    %359 = vector.extract_strided_slice %352 {offsets = [0, 128], sizes = [16, 128], strides = [1, 1]} : vector<16x512xf32> to vector<16x128xf32>
    %360 = arith.negf %359 : vector<16x128xf32>
    %361 = math.exp %360 : vector<16x128xf32>
    %cst_75 = arith.constant 1.000000e+00 : f32
    %362 = vector.broadcast %cst_75 : f32 to vector<16x128xf32>
    %363 = arith.addf %362, %361 : vector<16x128xf32>
    %364 = arith.divf %362, %363 : vector<16x128xf32>
    %365 = vector.extract_strided_slice %352 {offsets = [0, 256], sizes = [16, 128], strides = [1, 1]} : vector<16x512xf32> to vector<16x128xf32>
    %366 = math.tanh %365 : vector<16x128xf32>
    %367 = vector.extract_strided_slice %352 {offsets = [0, 384], sizes = [16, 128], strides = [1, 1]} : vector<16x512xf32> to vector<16x128xf32>
    %368 = arith.negf %367 : vector<16x128xf32>
    %369 = math.exp %368 : vector<16x128xf32>
    %cst_76 = arith.constant 1.000000e+00 : f32
    %370 = vector.broadcast %cst_76 : f32 to vector<16x128xf32>
    %371 = arith.addf %370, %369 : vector<16x128xf32>
    %372 = arith.divf %370, %371 : vector<16x128xf32>
    %373 = arith.mulf %364, %314 : vector<16x128xf32>
    %374 = arith.mulf %358, %366 : vector<16x128xf32>
    %375 = arith.addf %373, %374 : vector<16x128xf32>
    %376 = math.tanh %375 : vector<16x128xf32>
    %377 = arith.mulf %372, %376 : vector<16x128xf32>
    %c96 = arith.constant 96 : index
    %c0_77 = arith.constant 0 : index
    %378 = vector.load %arg10[%c96, %c0_77] : memref<128x512xf32, #tpu.memory_space<vmem>>, vector<16x512xf32>
    %379 = arith.truncf %345 : vector<16x128xf32> to vector<16x128xbf16>
    %cst_78 = arith.constant dense<0.000000e+00> : vector<16x512xf32>
    %380 = tpu.matmul %379, %7, %cst_78 {dimension_numbers = #tpu.dot_dimension_numbers<[1], [0], [0], [1], [0, 0, 1, 1], [], []>} : vector<16x128xbf16>, vector<128x512xbf16>, vector<16x512xf32> -> vector<16x512xf32>
    %381 = arith.addf %378, %380 : vector<16x512xf32>
    %382 = vector.extract_strided_slice %381 {offsets = [0, 0], sizes = [16, 128], strides = [1, 1]} : vector<16x512xf32> to vector<16x128xf32>
    %383 = arith.negf %382 : vector<16x128xf32>
    %384 = math.exp %383 : vector<16x128xf32>
    %cst_79 = arith.constant 1.000000e+00 : f32
    %385 = vector.broadcast %cst_79 : f32 to vector<16x128xf32>
    %386 = arith.addf %385, %384 : vector<16x128xf32>
    %387 = arith.divf %385, %386 : vector<16x128xf32>
    %388 = vector.extract_strided_slice %381 {offsets = [0, 128], sizes = [16, 128], strides = [1, 1]} : vector<16x512xf32> to vector<16x128xf32>
    %389 = arith.negf %388 : vector<16x128xf32>
    %390 = math.exp %389 : vector<16x128xf32>
    %cst_80 = arith.constant 1.000000e+00 : f32
    %391 = vector.broadcast %cst_80 : f32 to vector<16x128xf32>
    %392 = arith.addf %391, %390 : vector<16x128xf32>
    %393 = arith.divf %391, %392 : vector<16x128xf32>
    %394 = vector.extract_strided_slice %381 {offsets = [0, 256], sizes = [16, 128], strides = [1, 1]} : vector<16x512xf32> to vector<16x128xf32>
    %395 = math.tanh %394 : vector<16x128xf32>
    %396 = vector.extract_strided_slice %381 {offsets = [0, 384], sizes = [16, 128], strides = [1, 1]} : vector<16x512xf32> to vector<16x128xf32>
    %397 = arith.negf %396 : vector<16x128xf32>
    %398 = math.exp %397 : vector<16x128xf32>
    %cst_81 = arith.constant 1.000000e+00 : f32
    %399 = vector.broadcast %cst_81 : f32 to vector<16x128xf32>
    %400 = arith.addf %399, %398 : vector<16x128xf32>
    %401 = arith.divf %399, %400 : vector<16x128xf32>
    %402 = arith.mulf %393, %343 : vector<16x128xf32>
    %403 = arith.mulf %387, %395 : vector<16x128xf32>
    %404 = arith.addf %402, %403 : vector<16x128xf32>
    %405 = math.tanh %404 : vector<16x128xf32>
    %406 = arith.mulf %401, %405 : vector<16x128xf32>
    %407 = arith.truncf %406 : vector<16x128xf32> to vector<16x128xbf16>
    %cst_82 = arith.constant dense<0.000000e+00> : vector<16x512xf32>
    %408 = tpu.matmul %407, %8, %cst_82 {dimension_numbers = #tpu.dot_dimension_numbers<[1], [0], [0], [1], [0, 0, 1, 1], [], []>} : vector<16x128xbf16>, vector<128x512xbf16>, vector<16x512xf32> -> vector<16x512xf32>
    %409 = arith.truncf %377 : vector<16x128xf32> to vector<16x128xbf16>
    %cst_83 = arith.constant dense<0.000000e+00> : vector<16x512xf32>
    %410 = tpu.matmul %409, %9, %cst_83 {dimension_numbers = #tpu.dot_dimension_numbers<[1], [0], [0], [1], [0, 0, 1, 1], [], []>} : vector<16x128xbf16>, vector<128x512xbf16>, vector<16x512xf32> -> vector<16x512xf32>
    %411 = arith.addf %408, %410 : vector<16x512xf32>
    %412 = vector.broadcast %10 : vector<1x512xf32> to vector<16x512xf32>
    %413 = arith.addf %411, %412 : vector<16x512xf32>
    %414 = vector.extract_strided_slice %413 {offsets = [0, 0], sizes = [16, 128], strides = [1, 1]} : vector<16x512xf32> to vector<16x128xf32>
    %415 = arith.negf %414 : vector<16x128xf32>
    %416 = math.exp %415 : vector<16x128xf32>
    %cst_84 = arith.constant 1.000000e+00 : f32
    %417 = vector.broadcast %cst_84 : f32 to vector<16x128xf32>
    %418 = arith.addf %417, %416 : vector<16x128xf32>
    %419 = arith.divf %417, %418 : vector<16x128xf32>
    %420 = vector.extract_strided_slice %413 {offsets = [0, 128], sizes = [16, 128], strides = [1, 1]} : vector<16x512xf32> to vector<16x128xf32>
    %421 = arith.negf %420 : vector<16x128xf32>
    %422 = math.exp %421 : vector<16x128xf32>
    %cst_85 = arith.constant 1.000000e+00 : f32
    %423 = vector.broadcast %cst_85 : f32 to vector<16x128xf32>
    %424 = arith.addf %423, %422 : vector<16x128xf32>
    %425 = arith.divf %423, %424 : vector<16x128xf32>
    %426 = vector.extract_strided_slice %413 {offsets = [0, 256], sizes = [16, 128], strides = [1, 1]} : vector<16x512xf32> to vector<16x128xf32>
    %427 = math.tanh %426 : vector<16x128xf32>
    %428 = vector.extract_strided_slice %413 {offsets = [0, 384], sizes = [16, 128], strides = [1, 1]} : vector<16x512xf32> to vector<16x128xf32>
    %429 = arith.negf %428 : vector<16x128xf32>
    %430 = math.exp %429 : vector<16x128xf32>
    %cst_86 = arith.constant 1.000000e+00 : f32
    %431 = vector.broadcast %cst_86 : f32 to vector<16x128xf32>
    %432 = arith.addf %431, %430 : vector<16x128xf32>
    %433 = arith.divf %431, %432 : vector<16x128xf32>
    %434 = arith.mulf %425, %375 : vector<16x128xf32>
    %435 = arith.mulf %419, %427 : vector<16x128xf32>
    %436 = arith.addf %434, %435 : vector<16x128xf32>
    %437 = math.tanh %436 : vector<16x128xf32>
    %438 = arith.mulf %433, %437 : vector<16x128xf32>
    %c112 = arith.constant 112 : index
    %c0_87 = arith.constant 0 : index
    %439 = vector.load %arg10[%c112, %c0_87] : memref<128x512xf32, #tpu.memory_space<vmem>>, vector<16x512xf32>
    %440 = arith.truncf %406 : vector<16x128xf32> to vector<16x128xbf16>
    %cst_88 = arith.constant dense<0.000000e+00> : vector<16x512xf32>
    %441 = tpu.matmul %440, %7, %cst_88 {dimension_numbers = #tpu.dot_dimension_numbers<[1], [0], [0], [1], [0, 0, 1, 1], [], []>} : vector<16x128xbf16>, vector<128x512xbf16>, vector<16x512xf32> -> vector<16x512xf32>
    %442 = arith.addf %439, %441 : vector<16x512xf32>
    %443 = vector.extract_strided_slice %442 {offsets = [0, 0], sizes = [16, 128], strides = [1, 1]} : vector<16x512xf32> to vector<16x128xf32>
    %444 = arith.negf %443 : vector<16x128xf32>
    %445 = math.exp %444 : vector<16x128xf32>
    %cst_89 = arith.constant 1.000000e+00 : f32
    %446 = vector.broadcast %cst_89 : f32 to vector<16x128xf32>
    %447 = arith.addf %446, %445 : vector<16x128xf32>
    %448 = arith.divf %446, %447 : vector<16x128xf32>
    %449 = vector.extract_strided_slice %442 {offsets = [0, 128], sizes = [16, 128], strides = [1, 1]} : vector<16x512xf32> to vector<16x128xf32>
    %450 = arith.negf %449 : vector<16x128xf32>
    %451 = math.exp %450 : vector<16x128xf32>
    %cst_90 = arith.constant 1.000000e+00 : f32
    %452 = vector.broadcast %cst_90 : f32 to vector<16x128xf32>
    %453 = arith.addf %452, %451 : vector<16x128xf32>
    %454 = arith.divf %452, %453 : vector<16x128xf32>
    %455 = vector.extract_strided_slice %442 {offsets = [0, 256], sizes = [16, 128], strides = [1, 1]} : vector<16x512xf32> to vector<16x128xf32>
    %456 = math.tanh %455 : vector<16x128xf32>
    %457 = vector.extract_strided_slice %442 {offsets = [0, 384], sizes = [16, 128], strides = [1, 1]} : vector<16x512xf32> to vector<16x128xf32>
    %458 = arith.negf %457 : vector<16x128xf32>
    %459 = math.exp %458 : vector<16x128xf32>
    %cst_91 = arith.constant 1.000000e+00 : f32
    %460 = vector.broadcast %cst_91 : f32 to vector<16x128xf32>
    %461 = arith.addf %460, %459 : vector<16x128xf32>
    %462 = arith.divf %460, %461 : vector<16x128xf32>
    %463 = arith.mulf %454, %404 : vector<16x128xf32>
    %464 = arith.mulf %448, %456 : vector<16x128xf32>
    %465 = arith.addf %463, %464 : vector<16x128xf32>
    %466 = math.tanh %465 : vector<16x128xf32>
    %467 = arith.mulf %462, %466 : vector<16x128xf32>
    %468 = arith.truncf %467 : vector<16x128xf32> to vector<16x128xbf16>
    %cst_92 = arith.constant dense<0.000000e+00> : vector<16x512xf32>
    %469 = tpu.matmul %468, %8, %cst_92 {dimension_numbers = #tpu.dot_dimension_numbers<[1], [0], [0], [1], [0, 0, 1, 1], [], []>} : vector<16x128xbf16>, vector<128x512xbf16>, vector<16x512xf32> -> vector<16x512xf32>
    %470 = arith.truncf %438 : vector<16x128xf32> to vector<16x128xbf16>
    %cst_93 = arith.constant dense<0.000000e+00> : vector<16x512xf32>
    %471 = tpu.matmul %470, %9, %cst_93 {dimension_numbers = #tpu.dot_dimension_numbers<[1], [0], [0], [1], [0, 0, 1, 1], [], []>} : vector<16x128xbf16>, vector<128x512xbf16>, vector<16x512xf32> -> vector<16x512xf32>
    %472 = arith.addf %469, %471 : vector<16x512xf32>
    %473 = vector.broadcast %10 : vector<1x512xf32> to vector<16x512xf32>
    %474 = arith.addf %472, %473 : vector<16x512xf32>
    %475 = vector.extract_strided_slice %474 {offsets = [0, 0], sizes = [16, 128], strides = [1, 1]} : vector<16x512xf32> to vector<16x128xf32>
    %476 = arith.negf %475 : vector<16x128xf32>
    %477 = math.exp %476 : vector<16x128xf32>
    %cst_94 = arith.constant 1.000000e+00 : f32
    %478 = vector.broadcast %cst_94 : f32 to vector<16x128xf32>
    %479 = arith.addf %478, %477 : vector<16x128xf32>
    %480 = arith.divf %478, %479 : vector<16x128xf32>
    %481 = vector.extract_strided_slice %474 {offsets = [0, 128], sizes = [16, 128], strides = [1, 1]} : vector<16x512xf32> to vector<16x128xf32>
    %482 = arith.negf %481 : vector<16x128xf32>
    %483 = math.exp %482 : vector<16x128xf32>
    %cst_95 = arith.constant 1.000000e+00 : f32
    %484 = vector.broadcast %cst_95 : f32 to vector<16x128xf32>
    %485 = arith.addf %484, %483 : vector<16x128xf32>
    %486 = arith.divf %484, %485 : vector<16x128xf32>
    %487 = vector.extract_strided_slice %474 {offsets = [0, 256], sizes = [16, 128], strides = [1, 1]} : vector<16x512xf32> to vector<16x128xf32>
    %488 = math.tanh %487 : vector<16x128xf32>
    %489 = vector.extract_strided_slice %474 {offsets = [0, 384], sizes = [16, 128], strides = [1, 1]} : vector<16x512xf32> to vector<16x128xf32>
    %490 = arith.negf %489 : vector<16x128xf32>
    %491 = math.exp %490 : vector<16x128xf32>
    %cst_96 = arith.constant 1.000000e+00 : f32
    %492 = vector.broadcast %cst_96 : f32 to vector<16x128xf32>
    %493 = arith.addf %492, %491 : vector<16x128xf32>
    %494 = arith.divf %492, %493 : vector<16x128xf32>
    %495 = arith.mulf %486, %436 : vector<16x128xf32>
    %496 = arith.mulf %480, %488 : vector<16x128xf32>
    %497 = arith.addf %495, %496 : vector<16x128xf32>
    %498 = math.tanh %497 : vector<16x128xf32>
    %499 = arith.mulf %494, %498 : vector<16x128xf32>
    %500 = arith.truncf %499 : vector<16x128xf32> to vector<16x128xbf16>
    %c0_97 = arith.constant 0 : index
    %c0_98 = arith.constant 0 : index
    %501 = vector.load %arg7[%c0_97, %c0_98] : memref<128x128xbf16, #tpu.memory_space<vmem>>, vector<128x128xbf16>
    %cst_99 = arith.constant dense<0.000000e+00> : vector<16x128xf32>
    %502 = tpu.matmul %500, %501, %cst_99 {dimension_numbers = #tpu.dot_dimension_numbers<[1], [0], [0], [1], [0, 0, 1, 1], [], []>} : vector<16x128xbf16>, vector<128x128xbf16>, vector<16x128xf32> -> vector<16x128xf32>
    %c0_100 = arith.constant 0 : index
    %c0_101 = arith.constant 0 : index
    %503 = vector.load %arg8[%c0_100, %c0_101] : memref<1x128xf32, #tpu.memory_space<vmem>>, vector<1x128xf32>
    %504 = vector.broadcast %503 : vector<1x128xf32> to vector<16x128xf32>
    %505 = arith.addf %502, %504 : vector<16x128xf32>
    %cst_102 = arith.constant 0.000000e+00 : f32
    %506 = vector.broadcast %cst_102 : f32 to vector<16x128xf32>
    %507 = arith.maximumf %505, %506 : vector<16x128xf32>
    %c0_103 = arith.constant 0 : index
    %c0_104 = arith.constant 0 : index
    %508 = vector.load %arg9[%c0_103, %c0_104] : memref<16x128xf32, #tpu.memory_space<vmem>>, vector<16x128xf32>
    tpu.vector_store %arg9[%c0_103, %c0_104], %507 {strides = array<i32>} : memref<16x128xf32, #tpu.memory_space<vmem>>, vector<16x128xf32>,
    return
  }
}

</mosaic_0001>

<llo_original>
// kernel: tpu_custom_call.1
$region0: #{tpu_custom_call.1}
  #allocation0 [shape = 'u32[]', space=smem, size = 0x4, offset = 0x4, fixed_abs, tag = 'smem constant byte address 0x4 - core index']
  #allocation1 [shape = 'u32[144,128]{1,0:T(1,128)}', space=vmem, size = 0x12000, scoped, tag = 'internal scratch']
  #allocation2 [shape = 'f32[128,512]{1,0:T(8,128)}', space=vmem, size = 0x40000, scoped, tag = 'scratch operand']
  %s0 = inlined_call_operand.vmem [shape: bf16[128,32], index: 0, kind: input, shape index: {}]
  %s1 = inlined_call_operand.vmem [shape: bf16[32,512], index: 1, kind: input, shape index: {}]
  %s2 = inlined_call_operand.vmem [shape: f32[1,512], index: 2, kind: input, shape index: {}]
  %s3 = inlined_call_operand.hbm [shape: bf16[128,512], index: 3, kind: input, shape index: {}]
  %s4 = inlined_call_operand.hbm [shape: bf16[128,512], index: 4, kind: input, shape index: {}]
  %s5 = inlined_call_operand.hbm [shape: bf16[128,512], index: 5, kind: input, shape index: {}]
  %s6 = inlined_call_operand.vmem [shape: f32[1,512], index: 6, kind: input, shape index: {}]
  %s7 = inlined_call_operand.hbm [shape: bf16[128,128], index: 7, kind: input, shape index: {}]
  %s8 = inlined_call_operand.vmem [shape: f32[1,128], index: 8, kind: input, shape index: {}]
  %s9 = inlined_call_operand.hbm [shape: f32[16,128], index: 9, kind: output, shape index: {}]
  %s10 = sld [smem:[#allocation0]]
  $region62: #{tpu_custom_call.1} parent=0
    _
  %s12 = ssub.s32 1, %s10
  %s13 = scalar_select 0, %s12, %s10
  $region1: #{tpu_custom_call.1} parent=0
    #allocation3 [shape = 'u8[131072]{0}', space=vmem, size = 0x20000, scoped, tag = 'input window, operand 3, single buffered']
    #allocation4 [shape = 's32[1]{0}', space=sflag, size = 0x4, scoped, tag = 'scoped memory for tpu_custom_call.1']
    #allocation5 [shape = 's32[1]{0}', space=sflag, size = 0x4, scoped, tag = 'scoped memory for tpu_custom_call.1']
    #allocation6 [shape = 'u8[131072]{0}', space=vmem, size = 0x20000, scoped, tag = 'input window, operand 4, single buffered']
    #allocation7 [shape = 's32[1]{0}', space=sflag, size = 0x4, scoped, tag = 'scoped memory for tpu_custom_call.1']
    #allocation8 [shape = 'u8[131072]{0}', space=vmem, size = 0x20000, scoped, tag = 'input window, operand 5, single buffered']
    #allocation9 [shape = 'u8[32768]{0}', space=vmem, size = 0x8000, scoped, tag = 'input window, operand 7, single buffered']
    #allocation10 [shape = 's32[1]{0}', space=sflag, size = 0x4, scoped, tag = 'scoped memory for tpu_custom_call.1']
    #allocation11 [shape = 'u8[8192]{0}', space=vmem, size = 0x2000, scoped, tag = 'output window, operand 0, single buffered']
    %14 = vsyncpa [#allocation4], 0
    %15 = vsyncpa [#allocation7], 0
    %16 = vsyncpa [#allocation10], 0
    %17 = vsyncpa [#allocation5], 0
    // Predicated region
    $region2: #{tpu_custom_call.1} parent=1 // pred_check
      _
    $region3: #{tpu_custom_call.1} parent=1 // pred_check_branch
      %19 = sbr.rel (0) target = $region5
    $region4: #{tpu_custom_call.1} parent=1 // pred_region
      _
    $region5: #{tpu_custom_call.1} parent=1 // pred_fallthru
      _
    // Predicated region
    $region6: #{tpu_custom_call.1} parent=1 // pred_check
      _
    $region7: #{tpu_custom_call.1} parent=1 // pred_check_branch
      %21 = sbr.rel (0) target = $region9
    $region8: #{tpu_custom_call.1} parent=1 // pred_region
      _
    $region9: #{tpu_custom_call.1} parent=1 // pred_fallthru
      _
    // Predicated region
    $region10: #{tpu_custom_call.1} parent=1 // pred_check
      _
    $region11: #{tpu_custom_call.1} parent=1 // pred_check_branch
      %23 = sbr.rel (0) target = $region13
    $region12: #{tpu_custom_call.1} parent=1 // pred_region
      _
    $region13: #{tpu_custom_call.1} parent=1 // pred_fallthru
      _
    // Predicated region
    $region14: #{tpu_custom_call.1} parent=1 // pred_check
      _
    $region15: #{tpu_custom_call.1} parent=1 // pred_check_branch
      %25 = sbr.rel (0) target = $region17
    $region16: #{tpu_custom_call.1} parent=1 // pred_region
      %s27 = ssub.s32 4096, 4096
      %28 = vsyncadd [#allocation4], %s27
      %s29 = sshll.u32 [#allocation3], 4
      %s30 = int_to_ptr.vmem [resolvable:$true] %s29
      %35 = dma.hbm_to_vmem [thread:$0]  %s3, 4096, %s30, [#allocation4], 256, 256, 16
    $region17: #{tpu_custom_call.1} parent=1 // pred_fallthru
      _
    // Predicated region
    $region18: #{tpu_custom_call.1} parent=1 // pred_check
      _
    $region19: #{tpu_custom_call.1} parent=1 // pred_check_branch
      %37 = sbr.rel (0) target = $region21
    $region20: #{tpu_custom_call.1} parent=1 // pred_region
      %s39 = ssub.s32 4096, 4096
      %40 = vsyncadd [#allocation7], %s39
      %s41 = sshll.u32 [#allocation6], 4
      %s42 = int_to_ptr.vmem [resolvable:$true] %s41
      %47 = dma.hbm_to_vmem [thread:$0]  %s4, 4096, %s42, [#allocation7], 256, 256, 16
    $region21: #{tpu_custom_call.1} parent=1 // pred_fallthru
      _
    // Predicated region
    $region22: #{tpu_custom_call.1} parent=1 // pred_check
      _
    $region23: #{tpu_custom_call.1} parent=1 // pred_check_branch
      %49 = sbr.rel (0) target = $region25
    $region24: #{tpu_custom_call.1} parent=1 // pred_region
      %s51 = ssub.s32 4096, 4096
      %52 = vsyncadd [#allocation7], %s51
      %s53 = sshll.u32 [#allocation8], 4
      %s54 = int_to_ptr.vmem [resolvable:$true] %s53
      %59 = dma.hbm_to_vmem [thread:$0]  %s5, 4096, %s54, [#allocation7], 256, 256, 16
    $region25: #{tpu_custom_call.1} parent=1 // pred_fallthru
      _
    // Predicated region
    $region26: #{tpu_custom_call.1} parent=1 // pred_check
      _
    $region27: #{tpu_custom_call.1} parent=1 // pred_check_branch
      %61 = sbr.rel (0) target = $region29
    $region28: #{tpu_custom_call.1} parent=1 // pred_region
      _
    $region29: #{tpu_custom_call.1} parent=1 // pred_fallthru
      _
    // Predicated region
    $region30: #{tpu_custom_call.1} parent=1 // pred_check
      _
    $region31: #{tpu_custom_call.1} parent=1 // pred_check_branch
      %63 = sbr.rel (0) target = $region33
    $region32: #{tpu_custom_call.1} parent=1 // pred_region
      %s65 = ssub.s32 1024, 1024
      %66 = vsyncadd [#allocation10], %s65
      %s67 = sshll.u32 [#allocation9], 4
      %s68 = int_to_ptr.vmem [resolvable:$true] %s67
      %73 = dma.hbm_to_vmem [thread:$0]  %s7, 1024, %s68, [#allocation10], 64, 64, 4
    $region33: #{tpu_custom_call.1} parent=1 // pred_fallthru
      _
    // Predicated region
    $region34: #{tpu_custom_call.1} parent=1 // pred_check
      _
    $region35: #{tpu_custom_call.1} parent=1 // pred_check_branch
      %75 = sbr.rel (0) target = $region37
    $region36: #{tpu_custom_call.1} parent=1 // pred_region
      _
    $region37: #{tpu_custom_call.1} parent=1 // pred_fallthru
      _
    // Predicated region
    $region38: #{tpu_custom_call.1} parent=1 // pred_check
      _
    $region39: #{tpu_custom_call.1} parent=1 // pred_check_branch
      %77 = sbr.rel (0) target = $region41
    $region40: #{tpu_custom_call.1} parent=1 // pred_region
      %78 = dma.done [#allocation4], 4096
    $region41: #{tpu_custom_call.1} parent=1 // pred_fallthru
      _
    // Predicated region
    $region42: #{tpu_custom_call.1} parent=1 // pred_check
      _
    $region43: #{tpu_custom_call.1} parent=1 // pred_check_branch
      %80 = sbr.rel (0) target = $region45
    $region44: #{tpu_custom_call.1} parent=1 // pred_region
      %81 = dma.done [#allocation7], 4096
    $region45: #{tpu_custom_call.1} parent=1 // pred_fallthru
      _
    // Predicated region
    $region46: #{tpu_custom_call.1} parent=1 // pred_check
      _
    $region47: #{tpu_custom_call.1} parent=1 // pred_check_branch
      %83 = sbr.rel (0) target = $region49
    $region48: #{tpu_custom_call.1} parent=1 // pred_region
      %84 = dma.done [#allocation7], 4096
    $region49: #{tpu_custom_call.1} parent=1 // pred_fallthru
      _
    // Predicated region
    $region50: #{tpu_custom_call.1} parent=1 // pred_check
      _
    $region51: #{tpu_custom_call.1} parent=1 // pred_check_branch
      %86 = sbr.rel (0) target = $region53
    $region52: #{tpu_custom_call.1} parent=1 // pred_region
      %87 = dma.done [#allocation10], 1024
    $region53: #{tpu_custom_call.1} parent=1 // pred_fallthru
      _
    %v89 = vld [vmem:[%s0] sm:$0xf]
    %v90 = vld [vmem:[%s0 + $0x4] sm:$0xf]
    %v91 = vld [vmem:[%s0 + $0x8] sm:$0xf]
    %v92 = vld [vmem:[%s0 + $0xc] sm:$0xf]
    %v93 = vld [vmem:[%s0 + $0x10] sm:$0xf]
    %v94 = vld [vmem:[%s0 + $0x14] sm:$0xf]
    %v95 = vld [vmem:[%s0 + $0x18] sm:$0xf]
    %v96 = vld [vmem:[%s0 + $0x1c] sm:$0xf]
    %v97 = vld [vmem:[%s0 + $0x20] sm:$0xf]
    %v98 = vld [vmem:[%s0 + $0x24] sm:$0xf]
    %v99 = vld [vmem:[%s0 + $0x28] sm:$0xf]
    %v100 = vld [vmem:[%s0 + $0x2c] sm:$0xf]
    %v101 = vld [vmem:[%s0 + $0x30] sm:$0xf]
    %v102 = vld [vmem:[%s0 + $0x34] sm:$0xf]
    %v103 = vld [vmem:[%s0 + $0x38] sm:$0xf]
    %v104 = vld [vmem:[%s0 + $0x3c] sm:$0xf]
    %v105 = vld [vmem:[%s1] sm:$0xff]
    %v106 = vld [vmem:[%s1 + $0x8] sm:$0xff]
    %v107 = vld [vmem:[%s1 + $0x10] sm:$0xff]
    %v108 = vld [vmem:[%s1 + $0x18] sm:$0xff]
    %v109 = vld [vmem:[%s1 + $0x20] sm:$0xff]
    %v110 = vld [vmem:[%s1 + $0x28] sm:$0xff]
    %v111 = vld [vmem:[%s1 + $0x30] sm:$0xff]
    %v112 = vld [vmem:[%s1 + $0x38] sm:$0xff]
    %v113 = vld [vmem:[%s2] sm:$0xf]
    %v115 = vlaneseq
    %v116 = vshrl.u32 %v115, 7
    %v117 = vsub.s32 0, %v116
    %v118 = vrot.slane %v113, %v117
    %v119 = vlaneseq
    %v120 = vshrl.u32 %v119, 7
    %v121 = vsub.s32 1, %v120
    %v122 = vrot.slane %v113, %v121
    %v123 = vlaneseq
    %v124 = vshrl.u32 %v123, 7
    %v125 = vsub.s32 2, %v124
    %v126 = vrot.slane %v113, %v125
    %v127 = vlaneseq
    %v128 = vshrl.u32 %v127, 7
    %v129 = vsub.s32 3, %v128
    %v130 = vrot.slane %v113, %v129
    %v151 = vunpack.c.l.b16 %v89
    %v152 = vunpack.c.l.b16 %v90
    %v153 = vunpack.c.l.b16 %v91
    %v154 = vunpack.c.l.b16 %v92
    %v155 = vunpack.c.l.b16 %v93
    %v156 = vunpack.c.l.b16 %v94
    %v157 = vunpack.c.l.b16 %v95
    %v158 = vunpack.c.l.b16 %v96
    %v159 = vunpack.c.l.b16 %v97
    %v160 = vunpack.c.l.b16 %v98
    %v161 = vunpack.c.l.b16 %v99
    %v162 = vunpack.c.l.b16 %v100
    %v163 = vunpack.c.l.b16 %v101
    %v164 = vunpack.c.l.b16 %v102
    %v165 = vunpack.c.l.b16 %v103
    %v166 = vunpack.c.l.b16 %v104
    %v167 = vpack.c.b16 %v152, %v151
    %v168 = vpack.c.b16 %v154, %v153
    %v169 = vpack.c.b16 %v156, %v155
    %v170 = vpack.c.b16 %v158, %v157
    %v171 = vpack.c.b16 %v160, %v159
    %v172 = vpack.c.b16 %v162, %v161
    %v173 = vpack.c.b16 %v164, %v163
    %v174 = vpack.c.b16 %v166, %v165
    %v183 = vunpack.c.l.b16 %v105
    %v184 = vunpack.c.h.b16 %v105
    %v185 = vunpack.c.l.b16 %v106
    %v186 = vunpack.c.h.b16 %v106
    %v187 = vunpack.c.l.b16 %v107
    %v188 = vunpack.c.h.b16 %v107
    %v189 = vunpack.c.l.b16 %v108
    %v190 = vunpack.c.h.b16 %v108
    %v191 = vunpack.c.l.b16 %v109
    %v192 = vunpack.c.h.b16 %v109
    %v193 = vunpack.c.l.b16 %v110
    %v194 = vunpack.c.h.b16 %v110
    %v195 = vunpack.c.l.b16 %v111
    %v196 = vunpack.c.h.b16 %v111
    %v197 = vunpack.c.l.b16 %v112
    %v198 = vunpack.c.h.b16 %v112
    %v199 = vpack.c.b16 %v187, %v183
    %v200 = vpack.c.b16 %v188, %v184
    %v201 = vpack.c.b16 %v189, %v185
    %v202 = vpack.c.b16 %v190, %v186
    %v203 = vpack.c.b16 %v195, %v191
    %v204 = vpack.c.b16 %v196, %v192
    %v205 = vpack.c.b16 %v197, %v193
    %v206 = vpack.c.b16 %v198, %v194
    %vm215 = vcmask 261120
    %v217 = vsel %vm215, %v167, 0
    %v220 = vsel %vm215, %v168, 0
    %v223 = vsel %vm215, %v169, 0
    %v226 = vsel %vm215, %v170, 0
    %v229 = vsel %vm215, %v171, 0
    %v232 = vsel %vm215, %v172, 0
    %v235 = vsel %vm215, %v173, 0
    %v238 = vsel %vm215, %v174, 0
    %240 = vmatprep.subr.bf16.mxu0 %v200
    %241 = vmatpush1.bf16.msra.mxu0 %v199
    %242 = vmatprep.subr.bf16.mxu0 %v204
    %243 = vmatpush1.bf16.msra.mxu0 %v203
    %244 = vmatprep.subr.bf16.mxu0 0
    %245 = vmatpush1.bf16.msra.mxu0 0
    %246 = vmatprep.subr.bf16.mxu0 0
    %247 = vmatpush1.bf16.msra.mxu0 0
    %248 = vmatprep.subr.bf16.mxu0 0
    %249 = vmatpush1.bf16.msra.mxu0 0
    %250 = vmatprep.subr.bf16.mxu0 0
    %251 = vmatpush1.bf16.msra.mxu0 0
    %252 = vmatprep.subr.bf16.mxu0 0
    %253 = vmatpush1.bf16.msra.mxu0 0
    %254 = vmatprep.subr.bf16.mxu0 0
    %255 = vmatpush1.bf16.msra.mxu0 0
    %256 = vmatprep.subr.bf16.mxu0 0
    %257 = vmatpush1.bf16.msra.mxu0 0
    %258 = vmatprep.subr.bf16.mxu0 0
    %259 = vmatpush1.bf16.msra.mxu0 0
    %260 = vmatprep.subr.bf16.mxu0 0
    %261 = vmatpush1.bf16.msra.mxu0 0
    %262 = vmatprep.subr.bf16.mxu0 0
    %263 = vmatpush1.bf16.msra.mxu0 0
    %264 = vmatprep.subr.bf16.mxu0 0
    %265 = vmatpush1.bf16.msra.mxu0 0
    %266 = vmatprep.subr.bf16.mxu0 0
    %267 = vmatpush1.bf16.msra.mxu0 0
    %268 = vmatprep.subr.bf16.mxu0 0
    %269 = vmatpush1.bf16.msra.mxu0 0
    %270 = vmatprep.subr.bf16.mxu0 0
    %271 = vmatpush1.bf16.msra.mxu0 0
    %272 = vmatprep.mubr.bf16.mxu0 0
    %273 = vmatmul.mubr.bf16.gmra.mrb[0].mxu0 %v217
    %v274 = vpop.f32.mrb[0].mxu0
    %v275 = vadd.f32 %v118, %v274
    %v276 = vpop.f32.mrb[0].mxu0
    %v277 = vadd.f32 %v122, %v276
    %v278 = vpop.f32.mrb[0].mxu0
    %v279 = vadd.f32 %v118, %v278
    %v280 = vpop.f32.mrb[0].mxu0
    %v281 = vadd.f32 %v122, %v280
    %282 = vmatprep.mubr.bf16.mxu0 0
    %283 = vmatmul.mubr.bf16.gmra.mrb[0].mxu0 %v220
    %v284 = vpop.f32.mrb[0].mxu0
    %v285 = vadd.f32 %v118, %v284
    %v286 = vpop.f32.mrb[0].mxu0
    %v287 = vadd.f32 %v122, %v286
    %v288 = vpop.f32.mrb[0].mxu0
    %v289 = vadd.f32 %v118, %v288
    %v290 = vpop.f32.mrb[0].mxu0
    %v291 = vadd.f32 %v122, %v290
    %292 = vmatprep.mubr.bf16.mxu0 0
    %293 = vmatmul.mubr.bf16.gmra.mrb[0].mxu0 %v223
    %v294 = vpop.f32.mrb[0].mxu0
    %v295 = vadd.f32 %v118, %v294
    %v296 = vpop.f32.mrb[0].mxu0
    %v297 = vadd.f32 %v122, %v296
    %v298 = vpop.f32.mrb[0].mxu0
    %v299 = vadd.f32 %v118, %v298
    %v300 = vpop.f32.mrb[0].mxu0
    %v301 = vadd.f32 %v122, %v300
    %302 = vmatprep.mubr.bf16.mxu0 0
    %303 = vmatmul.mubr.bf16.gmra.mrb[0].mxu0 %v226
    %v304 = vpop.f32.mrb[0].mxu0
    %v305 = vadd.f32 %v118, %v304
    %v306 = vpop.f32.mrb[0].mxu0
    %v307 = vadd.f32 %v122, %v306
    %v308 = vpop.f32.mrb[0].mxu0
    %v309 = vadd.f32 %v118, %v308
    %v310 = vpop.f32.mrb[0].mxu0
    %v311 = vadd.f32 %v122, %v310
    %312 = vmatprep.mubr.bf16.mxu0 0
    %313 = vmatmul.mubr.bf16.gmra.mrb[0].mxu0 %v229
    %v314 = vpop.f32.mrb[0].mxu0
    %v315 = vadd.f32 %v118, %v314
    %v316 = vpop.f32.mrb[0].mxu0
    %v317 = vadd.f32 %v122, %v316
    %v318 = vpop.f32.mrb[0].mxu0
    %v319 = vadd.f32 %v118, %v318
    %v320 = vpop.f32.mrb[0].mxu0
    %v321 = vadd.f32 %v122, %v320
    %322 = vmatprep.mubr.bf16.mxu0 0
    %323 = vmatmul.mubr.bf16.gmra.mrb[0].mxu0 %v232
    %v324 = vpop.f32.mrb[0].mxu0
    %v325 = vadd.f32 %v118, %v324
    %v326 = vpop.f32.mrb[0].mxu0
    %v327 = vadd.f32 %v122, %v326
    %v328 = vpop.f32.mrb[0].mxu0
    %v329 = vadd.f32 %v118, %v328
    %v330 = vpop.f32.mrb[0].mxu0
    %v331 = vadd.f32 %v122, %v330
    %332 = vmatprep.mubr.bf16.mxu0 0
    %333 = vmatmul.mubr.bf16.gmra.mrb[0].mxu0 %v235
    %v334 = vpop.f32.mrb[0].mxu0
    %v335 = vadd.f32 %v118, %v334
    %v336 = vpop.f32.mrb[0].mxu0
    %v337 = vadd.f32 %v122, %v336
    %v338 = vpop.f32.mrb[0].mxu0
    %v339 = vadd.f32 %v118, %v338
    %v340 = vpop.f32.mrb[0].mxu0
    %v341 = vadd.f32 %v122, %v340
    %342 = vmatprep.mubr.bf16.mxu0 0
    %343 = vmatmul.mubr.bf16.gmra.mrb[0].mxu0 %v238
    %v344 = vpop.f32.mrb[0].mxu0
    %v345 = vadd.f32 %v118, %v344
    %v346 = vpop.f32.mrb[0].mxu0
    %v347 = vadd.f32 %v122, %v346
    %v348 = vpop.f32.mrb[0].mxu0
    %v349 = vadd.f32 %v118, %v348
    %v350 = vpop.f32.mrb[0].mxu0
    %v351 = vadd.f32 %v122, %v350
    %352 = vdwg.mxu0
    %353 = vmatprep.subr.bf16.mxu0 %v202
    %354 = vmatpush1.bf16.msra.mxu0 %v201
    %355 = vmatprep.subr.bf16.mxu0 %v206
    %356 = vmatpush1.bf16.msra.mxu0 %v205
    %357 = vmatprep.subr.bf16.mxu0 0
    %358 = vmatpush1.bf16.msra.mxu0 0
    %359 = vmatprep.subr.bf16.mxu0 0
    %360 = vmatpush1.bf16.msra.mxu0 0
    %361 = vmatprep.subr.bf16.mxu0 0
    %362 = vmatpush1.bf16.msra.mxu0 0
    %363 = vmatprep.subr.bf16.mxu0 0
    %364 = vmatpush1.bf16.msra.mxu0 0
    %365 = vmatprep.subr.bf16.mxu0 0
    %366 = vmatpush1.bf16.msra.mxu0 0
    %367 = vmatprep.subr.bf16.mxu0 0
    %368 = vmatpush1.bf16.msra.mxu0 0
    %369 = vmatprep.subr.bf16.mxu0 0
    %370 = vmatpush1.bf16.msra.mxu0 0
    %371 = vmatprep.subr.bf16.mxu0 0
    %372 = vmatpush1.bf16.msra.mxu0 0
    %373 = vmatprep.subr.bf16.mxu0 0
    %374 = vmatpush1.bf16.msra.mxu0 0
    %375 = vmatprep.subr.bf16.mxu0 0
    %376 = vmatpush1.bf16.msra.mxu0 0
    %377 = vmatprep.subr.bf16.mxu0 0
    %378 = vmatpush1.bf16.msra.mxu0 0
    %379 = vmatprep.subr.bf16.mxu0 0
    %380 = vmatpush1.bf16.msra.mxu0 0
    %381 = vmatprep.subr.bf16.mxu0 0
    %382 = vmatpush1.bf16.msra.mxu0 0
    %383 = vmatprep.subr.bf16.mxu0 0
    %384 = vmatpush1.bf16.msra.mxu0 0
    %385 = vmatprep.mubr.bf16.mxu0 0
    %386 = vmatmul.mubr.bf16.gmra.mrb[0].mxu0 %v217
    %v387 = vpop.f32.mrb[0].mxu0
    %v388 = vadd.f32 %v126, %v387
    %v389 = vpop.f32.mrb[0].mxu0
    %v390 = vadd.f32 %v130, %v389
    %v391 = vpop.f32.mrb[0].mxu0
    %v392 = vadd.f32 %v126, %v391
    %v393 = vpop.f32.mrb[0].mxu0
    %v394 = vadd.f32 %v130, %v393
    %395 = vmatprep.mubr.bf16.mxu0 0
    %396 = vmatmul.mubr.bf16.gmra.mrb[0].mxu0 %v220
    %v397 = vpop.f32.mrb[0].mxu0
    %v398 = vadd.f32 %v126, %v397
    %v399 = vpop.f32.mrb[0].mxu0
    %v400 = vadd.f32 %v130, %v399
    %v401 = vpop.f32.mrb[0].mxu0
    %v402 = vadd.f32 %v126, %v401
    %v403 = vpop.f32.mrb[0].mxu0
    %v404 = vadd.f32 %v130, %v403
    %405 = vmatprep.mubr.bf16.mxu0 0
    %406 = vmatmul.mubr.bf16.gmra.mrb[0].mxu0 %v223
    %v407 = vpop.f32.mrb[0].mxu0
    %v408 = vadd.f32 %v126, %v407
    %v409 = vpop.f32.mrb[0].mxu0
    %v410 = vadd.f32 %v130, %v409
    %v411 = vpop.f32.mrb[0].mxu0
    %v412 = vadd.f32 %v126, %v411
    %v413 = vpop.f32.mrb[0].mxu0
    %v414 = vadd.f32 %v130, %v413
    %415 = vmatprep.mubr.bf16.mxu0 0
    %416 = vmatmul.mubr.bf16.gmra.mrb[0].mxu0 %v226
    %v417 = vpop.f32.mrb[0].mxu0
    %v418 = vadd.f32 %v126, %v417
    %v419 = vpop.f32.mrb[0].mxu0
    %v420 = vadd.f32 %v130, %v419
    %v421 = vpop.f32.mrb[0].mxu0
    %v422 = vadd.f32 %v126, %v421
    %v423 = vpop.f32.mrb[0].mxu0
    %v424 = vadd.f32 %v130, %v423
    %425 = vmatprep.mubr.bf16.mxu0 0
    %426 = vmatmul.mubr.bf16.gmra.mrb[0].mxu0 %v229
    %v427 = vpop.f32.mrb[0].mxu0
    %v428 = vadd.f32 %v126, %v427
    %v429 = vpop.f32.mrb[0].mxu0
    %v430 = vadd.f32 %v130, %v429
    %v431 = vpop.f32.mrb[0].mxu0
    %v432 = vadd.f32 %v126, %v431
    %v433 = vpop.f32.mrb[0].mxu0
    %v434 = vadd.f32 %v130, %v433
    %435 = vmatprep.mubr.bf16.mxu0 0
    %436 = vmatmul.mubr.bf16.gmra.mrb[0].mxu0 %v232
    %v437 = vpop.f32.mrb[0].mxu0
    %v438 = vadd.f32 %v126, %v437
    %v439 = vpop.f32.mrb[0].mxu0
    %v440 = vadd.f32 %v130, %v439
    %v441 = vpop.f32.mrb[0].mxu0
    %v442 = vadd.f32 %v126, %v441
    %v443 = vpop.f32.mrb[0].mxu0
    %v444 = vadd.f32 %v130, %v443
    %445 = vmatprep.mubr.bf16.mxu0 0
    %446 = vmatmul.mubr.bf16.gmra.mrb[0].mxu0 %v235
    %v447 = vpop.f32.mrb[0].mxu0
    %v448 = vadd.f32 %v126, %v447
    %v449 = vpop.f32.mrb[0].mxu0
    %v450 = vadd.f32 %v130, %v449
    %v451 = vpop.f32.mrb[0].mxu0
    %v452 = vadd.f32 %v126, %v451
    %v453 = vpop.f32.mrb[0].mxu0
    %v454 = vadd.f32 %v130, %v453
    %455 = vmatprep.mubr.bf16.mxu0 0
    %456 = vmatmul.mubr.bf16.gmra.mrb[0].mxu0 %v238
    %v457 = vpop.f32.mrb[0].mxu0
    %v458 = vadd.f32 %v126, %v457
    %v459 = vpop.f32.mrb[0].mxu0
    %v460 = vadd.f32 %v130, %v459
    %v461 = vpop.f32.mrb[0].mxu0
    %v462 = vadd.f32 %v126, %v461
    %v463 = vpop.f32.mrb[0].mxu0
    %v464 = vadd.f32 %v130, %v463
    %465 = vdwg.mxu0
    %466 = vst [vmem:[#allocation2] sm:$0xff] %v275
    %467 = vst [vmem:[#allocation2 + $0x8] sm:$0xff] %v277
    %468 = vst [vmem:[#allocation2 + $0x10] sm:$0xff] %v388
    %469 = vst [vmem:[#allocation2 + $0x18] sm:$0xff] %v390
    %470 = vst [vmem:[#allocation2 + $0x20] sm:$0xff] %v279
    %471 = vst [vmem:[#allocation2 + $0x28] sm:$0xff] %v281
    %472 = vst [vmem:[#allocation2 + $0x30] sm:$0xff] %v392
    %473 = vst [vmem:[#allocation2 + $0x38] sm:$0xff] %v394
    %474 = vst [vmem:[#allocation2 + $0x40] sm:$0xff] %v285
    %475 = vst [vmem:[#allocation2 + $0x48] sm:$0xff] %v287
    %476 = vst [vmem:[#allocation2 + $0x50] sm:$0xff] %v398
    %477 = vst [vmem:[#allocation2 + $0x58] sm:$0xff] %v400
    %478 = vst [vmem:[#allocation2 + $0x60] sm:$0xff] %v289
    %479 = vst [vmem:[#allocation2 + $0x68] sm:$0xff] %v291
    %480 = vst [vmem:[#allocation2 + $0x70] sm:$0xff] %v402
    %481 = vst [vmem:[#allocation2 + $0x78] sm:$0xff] %v404
    %482 = vst [vmem:[#allocation2 + $0x80] sm:$0xff] %v295
    %483 = vst [vmem:[#allocation2 + $0x88] sm:$0xff] %v297
    %484 = vst [vmem:[#allocation2 + $0x90] sm:$0xff] %v408
    %485 = vst [vmem:[#allocation2 + $0x98] sm:$0xff] %v410
    %486 = vst [vmem:[#allocation2 + $0xa0] sm:$0xff] %v299
    %487 = vst [vmem:[#allocation2 + $0xa8] sm:$0xff] %v301
    %488 = vst [vmem:[#allocation2 + $0xb0] sm:$0xff] %v412
    %489 = vst [vmem:[#allocation2 + $0xb8] sm:$0xff] %v414
    %490 = vst [vmem:[#allocation2 + $0xc0] sm:$0xff] %v305
    %491 = vst [vmem:[#allocation2 + $0xc8] sm:$0xff] %v307
    %492 = vst [vmem:[#allocation2 + $0xd0] sm:$0xff] %v418
    %493 = vst [vmem:[#allocation2 + $0xd8] sm:$0xff] %v420
    %494 = vst [vmem:[#allocation2 + $0xe0] sm:$0xff] %v309
    %495 = vst [vmem:[#allocation2 + $0xe8] sm:$0xff] %v311
    %496 = vst [vmem:[#allocation2 + $0xf0] sm:$0xff] %v422
    %497 = vst [vmem:[#allocation2 + $0xf8] sm:$0xff] %v424
    %498 = vst [vmem:[#allocation2 + $0x100] sm:$0xff] %v315
    %499 = vst [vmem:[#allocation2 + $0x108] sm:$0xff] %v317
    %500 = vst [vmem:[#allocation2 + $0x110] sm:$0xff] %v428
    %501 = vst [vmem:[#allocation2 + $0x118] sm:$0xff] %v430
    %502 = vst [vmem:[#allocation2 + $0x120] sm:$0xff] %v319
    %503 = vst [vmem:[#allocation2 + $0x128] sm:$0xff] %v321
    %504 = vst [vmem:[#allocation2 + $0x130] sm:$0xff] %v432
    %505 = vst [vmem:[#allocation2 + $0x138] sm:$0xff] %v434
    %506 = vst [vmem:[#allocation2 + $0x140] sm:$0xff] %v325
    %507 = vst [vmem:[#allocation2 + $0x148] sm:$0xff] %v327
    %508 = vst [vmem:[#allocation2 + $0x150] sm:$0xff] %v438
    %509 = vst [vmem:[#allocation2 + $0x158] sm:$0xff] %v440
    %510 = vst [vmem:[#allocation2 + $0x160] sm:$0xff] %v329
    %511 = vst [vmem:[#allocation2 + $0x168] sm:$0xff] %v331
    %512 = vst [vmem:[#allocation2 + $0x170] sm:$0xff] %v442
    %513 = vst [vmem:[#allocation2 + $0x178] sm:$0xff] %v444
    %514 = vst [vmem:[#allocation2 + $0x180] sm:$0xff] %v335
    %515 = vst [vmem:[#allocation2 + $0x188] sm:$0xff] %v337
    %516 = vst [vmem:[#allocation2 + $0x190] sm:$0xff] %v448
    %517 = vst [vmem:[#allocation2 + $0x198] sm:$0xff] %v450
    %518 = vst [vmem:[#allocation2 + $0x1a0] sm:$0xff] %v339
    %519 = vst [vmem:[#allocation2 + $0x1a8] sm:$0xff] %v341
    %520 = vst [vmem:[#allocation2 + $0x1b0] sm:$0xff] %v452
    %521 = vst [vmem:[#allocation2 + $0x1b8] sm:$0xff] %v454
    %522 = vst [vmem:[#allocation2 + $0x1c0] sm:$0xff] %v345
    %523 = vst [vmem:[#allocation2 + $0x1c8] sm:$0xff] %v347
    %524 = vst [vmem:[#allocation2 + $0x1d0] sm:$0xff] %v458
    %525 = vst [vmem:[#allocation2 + $0x1d8] sm:$0xff] %v460
    %526 = vst [vmem:[#allocation2 + $0x1e0] sm:$0xff] %v349
    %527 = vst [vmem:[#allocation2 + $0x1e8] sm:$0xff] %v351
    %528 = vst [vmem:[#allocation2 + $0x1f0] sm:$0xff] %v462
    %529 = vst [vmem:[#allocation2 + $0x1f8] sm:$0xff] %v464
    %v530 = vld [vmem:[#allocation3] sm:$0xff]
    %v531 = vld [vmem:[#allocation3 + $0x8] sm:$0xff]
    %v532 = vld [vmem:[#allocation3 + $0x10] sm:$0xff]
    %v533 = vld [vmem:[#allocation3 + $0x18] sm:$0xff]
    %v534 = vld [vmem:[#allocation3 + $0x20] sm:$0xff]
    %v535 = vld [vmem:[#allocation3 + $0x28] sm:$0xff]
    %v536 = vld [vmem:[#allocation3 + $0x30] sm:$0xff]
    %v537 = vld [vmem:[#allocation3 + $0x38] sm:$0xff]
    %v538 = vld [vmem:[#allocation3 + $0x40] sm:$0xff]
    %v539 = vld [vmem:[#allocation3 + $0x48] sm:$0xff]
    %v540 = vld [vmem:[#allocation3 + $0x50] sm:$0xff]
    %v541 = vld [vmem:[#allocation3 + $0x58] sm:$0xff]
    %v542 = vld [vmem:[#allocation3 + $0x60] sm:$0xff]
    %v543 = vld [vmem:[#allocation3 + $0x68] sm:$0xff]
    %v544 = vld [vmem:[#allocation3 + $0x70] sm:$0xff]
    %v545 = vld [vmem:[#allocation3 + $0x78] sm:$0xff]
    %v546 = vld [vmem:[#allocation3 + $0x80] sm:$0xff]
    %v547 = vld [vmem:[#allocation3 + $0x88] sm:$0xff]
    %v548 = vld [vmem:[#allocation3 + $0x90] sm:$0xff]
    %v549 = vld [vmem:[#allocation3 + $0x98] sm:$0xff]
    %v550 = vld [vmem:[#allocation3 + $0xa0] sm:$0xff]
    %v551 = vld [vmem:[#allocation3 + $0xa8] sm:$0xff]
    %v552 = vld [vmem:[#allocation3 + $0xb0] sm:$0xff]
    %v553 = vld [vmem:[#allocation3 + $0xb8] sm:$0xff]
    %v554 = vld [vmem:[#allocation3 + $0xc0] sm:$0xff]
    %v555 = vld [vmem:[#allocation3 + $0xc8] sm:$0xff]
    %v556 = vld [vmem:[#allocation3 + $0xd0] sm:$0xff]
    %v557 = vld [vmem:[#allocation3 + $0xd8] sm:$0xff]
    %v558 = vld [vmem:[#allocation3 + $0xe0] sm:$0xff]
    %v559 = vld [vmem:[#allocation3 + $0xe8] sm:$0xff]
    %v560 = vld [vmem:[#allocation3 + $0xf0] sm:$0xff]
    %v561 = vld [vmem:[#allocation3 + $0xf8] sm:$0xff]
    %v562 = vld [vmem:[#allocation6] sm:$0xff]
    %v563 = vld [vmem:[#allocation6 + $0x8] sm:$0xff]
    %v564 = vld [vmem:[#allocation6 + $0x10] sm:$0xff]
    %v565 = vld [vmem:[#allocation6 + $0x18] sm:$0xff]
    %v566 = vld [vmem:[#allocation6 + $0x20] sm:$0xff]
    %v567 = vld [vmem:[#allocation6 + $0x28] sm:$0xff]
    %v568 = vld [vmem:[#allocation6 + $0x30] sm:$0xff]
    %v569 = vld [vmem:[#allocation6 + $0x38] sm:$0xff]
    %v570 = vld [vmem:[#allocation6 + $0x40] sm:$0xff]
    %v571 = vld [vmem:[#allocation6 + $0x48] sm:$0xff]
    %v572 = vld [vmem:[#allocation6 + $0x50] sm:$0xff]
    %v573 = vld [vmem:[#allocation6 + $0x58] sm:$0xff]
    %v574 = vld [vmem:[#allocation6 + $0x60] sm:$0xff]
    %v575 = vld [vmem:[#allocation6 + $0x68] sm:$0xff]
    %v576 = vld [vmem:[#allocation6 + $0x70] sm:$0xff]
    %v577 = vld [vmem:[#allocation6 + $0x78] sm:$0xff]
    %v578 = vld [vmem:[#allocation6 + $0x80] sm:$0xff]
    %v579 = vld [vmem:[#allocation6 + $0x88] sm:$0xff]
    %v580 = vld [vmem:[#allocation6 + $0x90] sm:$0xff]
    %v581 = vld [vmem:[#allocation6 + $0x98] sm:$0xff]
    %v582 = vld [vmem:[#allocation6 + $0xa0] sm:$0xff]
    %v583 = vld [vmem:[#allocation6 + $0xa8] sm:$0xff]
    %v584 = vld [vmem:[#allocation6 + $0xb0] sm:$0xff]
    %v585 = vld [vmem:[#allocation6 + $0xb8] sm:$0xff]
    %v586 = vld [vmem:[#allocation6 + $0xc0] sm:$0xff]
    %v587 = vld [vmem:[#allocation6 + $0xc8] sm:$0xff]
    %v588 = vld [vmem:[#allocation6 + $0xd0] sm:$0xff]
    %v589 = vld [vmem:[#allocation6 + $0xd8] sm:$0xff]
    %v590 = vld [vmem:[#allocation6 + $0xe0] sm:$0xff]
    %v591 = vld [vmem:[#allocation6 + $0xe8] sm:$0xff]
    %v592 = vld [vmem:[#allocation6 + $0xf0] sm:$0xff]
    %v593 = vld [vmem:[#allocation6 + $0xf8] sm:$0xff]
    %v594 = vld [vmem:[#allocation8] sm:$0xff]
    %v595 = vld [vmem:[#allocation8 + $0x8] sm:$0xff]
    %v596 = vld [vmem:[#allocation8 + $0x10] sm:$0xff]
    %v597 = vld [vmem:[#allocation8 + $0x18] sm:$0xff]
    %v598 = vld [vmem:[#allocation8 + $0x20] sm:$0xff]
    %v599 = vld [vmem:[#allocation8 + $0x28] sm:$0xff]
    %v600 = vld [vmem:[#allocation8 + $0x30] sm:$0xff]
    %v601 = vld [vmem:[#allocation8 + $0x38] sm:$0xff]
    %v602 = vld [vmem:[#allocation8 + $0x40] sm:$0xff]
    %v603 = vld [vmem:[#allocation8 + $0x48] sm:$0xff]
    %v604 = vld [vmem:[#allocation8 + $0x50] sm:$0xff]
    %v605 = vld [vmem:[#allocation8 + $0x58] sm:$0xff]
    %v606 = vld [vmem:[#allocation8 + $0x60] sm:$0xff]
    %v607 = vld [vmem:[#allocation8 + $0x68] sm:$0xff]
    %v608 = vld [vmem:[#allocation8 + $0x70] sm:$0xff]
    %v609 = vld [vmem:[#allocation8 + $0x78] sm:$0xff]
    %v610 = vld [vmem:[#allocation8 + $0x80] sm:$0xff]
    %v611 = vld [vmem:[#allocation8 + $0x88] sm:$0xff]
    %v612 = vld [vmem:[#allocation8 + $0x90] sm:$0xff]
    %v613 = vld [vmem:[#allocation8 + $0x98] sm:$0xff]
    %v614 = vld [vmem:[#allocation8 + $0xa0] sm:$0xff]
    %v615 = vld [vmem:[#allocation8 + $0xa8] sm:$0xff]
    %v616 = vld [vmem:[#allocation8 + $0xb0] sm:$0xff]
    %v617 = vld [vmem:[#allocation8 + $0xb8] sm:$0xff]
    %v618 = vld [vmem:[#allocation8 + $0xc0] sm:$0xff]
    %v619 = vld [vmem:[#allocation8 + $0xc8] sm:$0xff]
    %v620 = vld [vmem:[#allocation8 + $0xd0] sm:$0xff]
    %v621 = vld [vmem:[#allocation8 + $0xd8] sm:$0xff]
    %v622 = vld [vmem:[#allocation8 + $0xe0] sm:$0xff]
    %v623 = vld [vmem:[#allocation8 + $0xe8] sm:$0xff]
    %v624 = vld [vmem:[#allocation8 + $0xf0] sm:$0xff]
    %v625 = vld [vmem:[#allocation8 + $0xf8] sm:$0xff]
    %v626 = vld [vmem:[%s6] sm:$0xf]
    %v627 = vld [vmem:[#allocation2] sm:$0xff]
    %v628 = vld [vmem:[#allocation2 + $0x8] sm:$0xff]
    %v629 = vld [vmem:[#allocation2 + $0x10] sm:$0xff]
    %v630 = vld [vmem:[#allocation2 + $0x18] sm:$0xff]
    %v631 = vld [vmem:[#allocation2 + $0x20] sm:$0xff]
    %v632 = vld [vmem:[#allocation2 + $0x28] sm:$0xff]
    %v633 = vld [vmem:[#allocation2 + $0x30] sm:$0xff]
    %v634 = vld [vmem:[#allocation2 + $0x38] sm:$0xff]
    %v667 = vunpack.c.l.b16 %v530
    %v668 = vunpack.c.h.b16 %v530
    %v669 = vunpack.c.l.b16 %v531
    %v670 = vunpack.c.h.b16 %v531
    %v671 = vunpack.c.l.b16 %v532
    %v672 = vunpack.c.h.b16 %v532
    %v673 = vunpack.c.l.b16 %v533
    %v674 = vunpack.c.h.b16 %v533
    %v675 = vunpack.c.l.b16 %v534
    %v676 = vunpack.c.h.b16 %v534
    %v677 = vunpack.c.l.b16 %v535
    %v678 = vunpack.c.h.b16 %v535
    %v679 = vunpack.c.l.b16 %v536
    %v680 = vunpack.c.h.b16 %v536
    %v681 = vunpack.c.l.b16 %v537
    %v682 = vunpack.c.h.b16 %v537
    %v683 = vunpack.c.l.b16 %v538
    %v684 = vunpack.c.h.b16 %v538
    %v685 = vunpack.c.l.b16 %v539
    %v686 = vunpack.c.h.b16 %v539
    %v687 = vunpack.c.l.b16 %v540
    %v688 = vunpack.c.h.b16 %v540
    %v689 = vunpack.c.l.b16 %v541
    %v690 = vunpack.c.h.b16 %v541
    %v691 = vunpack.c.l.b16 %v542
    %v692 = vunpack.c.h.b16 %v542
    %v693 = vunpack.c.l.b16 %v543
    %v694 = vunpack.c.h.b16 %v543
    %v695 = vunpack.c.l.b16 %v544
    %v696 = vunpack.c.h.b16 %v544
    %v697 = vunpack.c.l.b16 %v545
    %v698 = vunpack.c.h.b16 %v545
    %v699 = vunpack.c.l.b16 %v546
    %v700 = vunpack.c.h.b16 %v546
    %v701 = vunpack.c.l.b16 %v547
    %v702 = vunpack.c.h.b16 %v547
    %v703 = vunpack.c.l.b16 %v548
    %v704 = vunpack.c.h.b16 %v548
    %v705 = vunpack.c.l.b16 %v549
    %v706 = vunpack.c.h.b16 %v549
    %v707 = vunpack.c.l.b16 %v550
    %v708 = vunpack.c.h.b16 %v550
    %v709 = vunpack.c.l.b16 %v551
    %v710 = vunpack.c.h.b16 %v551
    %v711 = vunpack.c.l.b16 %v552
    %v712 = vunpack.c.h.b16 %v552
    %v713 = vunpack.c.l.b16 %v553
    %v714 = vunpack.c.h.b16 %v553
    %v715 = vunpack.c.l.b16 %v554
    %v716 = vunpack.c.h.b16 %v554
    %v717 = vunpack.c.l.b16 %v555
    %v718 = vunpack.c.h.b16 %v555
    %v719 = vunpack.c.l.b16 %v556
    %v720 = vunpack.c.h.b16 %v556
    %v721 = vunpack.c.l.b16 %v557
    %v722 = vunpack.c.h.b16 %v557
    %v723 = vunpack.c.l.b16 %v558
    %v724 = vunpack.c.h.b16 %v558
    %v725 = vunpack.c.l.b16 %v559
    %v726 = vunpack.c.h.b16 %v559
    %v727 = vunpack.c.l.b16 %v560
    %v728 = vunpack.c.h.b16 %v560
    %v729 = vunpack.c.l.b16 %v561
    %v730 = vunpack.c.h.b16 %v561
    %v731 = vpack.c.b16 %v671, %v667
    %v732 = vpack.c.b16 %v672, %v668
    %v733 = vpack.c.b16 %v673, %v669
    %v734 = vpack.c.b16 %v674, %v670
    %v735 = vpack.c.b16 %v679, %v675
    %v736 = vpack.c.b16 %v680, %v676
    %v737 = vpack.c.b16 %v681, %v677
    %v738 = vpack.c.b16 %v682, %v678
    %v739 = vpack.c.b16 %v687, %v683
    %v740 = vpack.c.b16 %v688, %v684
    %v741 = vpack.c.b16 %v689, %v685
    %v742 = vpack.c.b16 %v690, %v686
    %v743 = vpack.c.b16 %v695, %v691
    %v744 = vpack.c.b16 %v696, %v692
    %v745 = vpack.c.b16 %v697, %v693
    %v746 = vpack.c.b16 %v698, %v694
    %v747 = vpack.c.b16 %v703, %v699
    %v748 = vpack.c.b16 %v704, %v700
    %v749 = vpack.c.b16 %v705, %v701
    %v750 = vpack.c.b16 %v706, %v702
    %v751 = vpack.c.b16 %v711, %v707
    %v752 = vpack.c.b16 %v712, %v708
    %v753 = vpack.c.b16 %v713, %v709
    %v754 = vpack.c.b16 %v714, %v710
    %v755 = vpack.c.b16 %v719, %v715
    %v756 = vpack.c.b16 %v720, %v716
    %v757 = vpack.c.b16 %v721, %v717
    %v758 = vpack.c.b16 %v722, %v718
    %v759 = vpack.c.b16 %v727, %v723
    %v760 = vpack.c.b16 %v728, %v724
    %v761 = vpack.c.b16 %v729, %v725
    %v762 = vpack.c.b16 %v730, %v726
    %795 = vmatprep.subr.bf16.mxu0 %v732
    %796 = vmatpush1.bf16.msra.mxu0 %v731
    %797 = vmatprep.subr.bf16.mxu0 %v736
    %798 = vmatpush1.bf16.msra.mxu0 %v735
    %799 = vmatprep.subr.bf16.mxu0 %v740
    %800 = vmatpush1.bf16.msra.mxu0 %v739
    %801 = vmatprep.subr.bf16.mxu0 %v744
    %802 = vmatpush1.bf16.msra.mxu0 %v743
    %803 = vmatprep.subr.bf16.mxu0 %v748
    %804 = vmatpush1.bf16.msra.mxu0 %v747
    %805 = vmatprep.subr.bf16.mxu0 %v752
    %806 = vmatpush1.bf16.msra.mxu0 %v751
    %807 = vmatprep.subr.bf16.mxu0 %v756
    %808 = vmatpush1.bf16.msra.mxu0 %v755
    %809 = vmatprep.subr.bf16.mxu0 %v760
    %810 = vmatpush1.bf16.msra.mxu0 %v759
    %811 = vmatprep.subr.bf16.mxu0 0
    %812 = vmatpush1.bf16.msra.mxu0 0
    %813 = vmatprep.subr.bf16.mxu0 0
    %814 = vmatpush1.bf16.msra.mxu0 0
    %815 = vmatprep.subr.bf16.mxu0 0
    %816 = vmatpush1.bf16.msra.mxu0 0
    %817 = vmatprep.subr.bf16.mxu0 0
    %818 = vmatpush1.bf16.msra.mxu0 0
    %819 = vmatprep.subr.bf16.mxu0 0
    %820 = vmatpush1.bf16.msra.mxu0 0
    %821 = vmatprep.subr.bf16.mxu0 0
    %822 = vmatpush1.bf16.msra.mxu0 0
    %823 = vmatprep.subr.bf16.mxu0 0
    %824 = vmatpush1.bf16.msra.mxu0 0
    %825 = vmatprep.subr.bf16.mxu0 0
    %826 = vmatpush1.bf16.msra.mxu0 0
    %827 = vmatprep.mubr.bf16.mxu0 0
    %828 = vmatmul.mubr.bf16.gmra.mrb[0].mxu0 0
    %v829 = vpop.f32.mrb[0].mxu0
    %v830 = vadd.f32 0.0, %v829
    %v831 = vpop.f32.mrb[0].mxu0
    %v832 = vadd.f32 0.0, %v831
    %v833 = vpop.f32.mrb[0].mxu0
    %v834 = vadd.f32 0.0, %v833
    %v835 = vpop.f32.mrb[0].mxu0
    %v836 = vadd.f32 0.0, %v835
    %837 = vdwg.mxu0
    %838 = vmatprep.subr.bf16.mxu0 %v734
    %839 = vmatpush1.bf16.msra.mxu0 %v733
    %840 = vmatprep.subr.bf16.mxu0 %v738
    %841 = vmatpush1.bf16.msra.mxu0 %v737
    %842 = vmatprep.subr.bf16.mxu0 %v742
    %843 = vmatpush1.bf16.msra.mxu0 %v741
    %844 = vmatprep.subr.bf16.mxu0 %v746
    %845 = vmatpush1.bf16.msra.mxu0 %v745
    %846 = vmatprep.subr.bf16.mxu0 %v750
    %847 = vmatpush1.bf16.msra.mxu0 %v749
    %848 = vmatprep.subr.bf16.mxu0 %v754
    %849 = vmatpush1.bf16.msra.mxu0 %v753
    %850 = vmatprep.subr.bf16.mxu0 %v758
    %851 = vmatpush1.bf16.msra.mxu0 %v757
    %852 = vmatprep.subr.bf16.mxu0 %v762
    %853 = vmatpush1.bf16.msra.mxu0 %v761
    %854 = vmatprep.subr.bf16.mxu0 0
    %855 = vmatpush1.bf16.msra.mxu0 0
    %856 = vmatprep.subr.bf16.mxu0 0
    %857 = vmatpush1.bf16.msra.mxu0 0
    %858 = vmatprep.subr.bf16.mxu0 0
    %859 = vmatpush1.bf16.msra.mxu0 0
    %860 = vmatprep.subr.bf16.mxu0 0
    %861 = vmatpush1.bf16.msra.mxu0 0
    %862 = vmatprep.subr.bf16.mxu0 0
    %863 = vmatpush1.bf16.msra.mxu0 0
    %864 = vmatprep.subr.bf16.mxu0 0
    %865 = vmatpush1.bf16.msra.mxu0 0
    %866 = vmatprep.subr.bf16.mxu0 0
    %867 = vmatpush1.bf16.msra.mxu0 0
    %868 = vmatprep.subr.bf16.mxu0 0
    %869 = vmatpush1.bf16.msra.mxu0 0
    %870 = vmatprep.mubr.bf16.mxu0 0
    %871 = vmatmul.mubr.bf16.gmra.mrb[0].mxu0 0
    %v872 = vpop.f32.mrb[0].mxu0
    %v873 = vadd.f32 0.0, %v872
    %v874 = vpop.f32.mrb[0].mxu0
    %v875 = vadd.f32 0.0, %v874
    %v876 = vpop.f32.mrb[0].mxu0
    %v877 = vadd.f32 0.0, %v876
    %v878 = vpop.f32.mrb[0].mxu0
    %v879 = vadd.f32 0.0, %v878
    %880 = vdwg.mxu0
    %v881 = vadd.f32 %v627, %v830
    %v882 = vadd.f32 %v628, %v832
    %v883 = vadd.f32 %v629, %v873
    %v884 = vadd.f32 %v630, %v875
    %v885 = vadd.f32 %v631, %v834
    %v886 = vadd.f32 %v632, %v836
    %v887 = vadd.f32 %v633, %v877
    %v888 = vadd.f32 %v634, %v879
    %v889 = vxor.u32 %v881, 2147483648
    %v890 = vxor.u32 %v885, 2147483648
    %v891 = vmul.f32 %v889, 1.442695
    %v892 = vpow.pop %v891
    %v893 = vmul.f32 %v890, 1.442695
    %v894 = vpow.pop %v893
    %v895 = vadd.f32 %v892, 1.0
    %v896 = vadd.f32 %v894, 1.0
    %v897 = vrcp.pop %v895
    %v898 = vmul.f32 1.0, %v897
    %v899 = vrcp.pop %v896
    %v900 = vmul.f32 1.0, %v899
    %v901 = vxor.u32 %v882, 2147483648
    %v902 = vxor.u32 %v886, 2147483648
    %v903 = vmul.f32 %v901, 1.442695
    %v904 = vpow.pop %v903
    %v905 = vmul.f32 %v902, 1.442695
    %v906 = vpow.pop %v905
    %v907 = vadd.f32 %v904, 1.0
    %v908 = vadd.f32 %v906, 1.0
    %v909 = vrcp.pop %v907
    %v910 = vmul.f32 1.0, %v909
    %v911 = vrcp.pop %v908
    %v912 = vmul.f32 1.0, %v911
    %v913 = vtanh.pop %v883
    %v914 = vtanh.pop %v887
    %v915 = vxor.u32 %v884, 2147483648
    %v916 = vxor.u32 %v888, 2147483648
    %v917 = vmul.f32 %v915, 1.442695
    %v918 = vpow.pop %v917
    %v919 = vmul.f32 %v916, 1.442695
    %v920 = vpow.pop %v919
    %v921 = vadd.f32 %v918, 1.0
    %v922 = vadd.f32 %v920, 1.0
    %v923 = vrcp.pop %v921
    %v924 = vmul.f32 1.0, %v923
    %v925 = vrcp.pop %v922
    %v926 = vmul.f32 1.0, %v925
    %v927 = vmul.f32 %v910, 0.0
    %v928 = vmul.f32 %v912, 0.0
    %v929 = vmul.f32 %v898, %v913
    %v930 = vmul.f32 %v900, %v914
    %v931 = vadd.f32 %v927, %v929
    %v932 = vadd.f32 %v928, %v930
    %v933 = vtanh.pop %v931
    %v934 = vtanh.pop %v932
    %v935 = vmul.f32 %v924, %v933
    %v936 = vmul.f32 %v926, %v934
    %v937 = vpack.c.bf16 %v936, %v935
    %v970 = vunpack.c.l.b16 %v594
    %v971 = vunpack.c.h.b16 %v594
    %v972 = vunpack.c.l.b16 %v595
    %v973 = vunpack.c.h.b16 %v595
    %v974 = vunpack.c.l.b16 %v596
    %v975 = vunpack.c.h.b16 %v596
    %v976 = vunpack.c.l.b16 %v597
    %v977 = vunpack.c.h.b16 %v597
    %v978 = vunpack.c.l.b16 %v598
    %v979 = vunpack.c.h.b16 %v598
    %v980 = vunpack.c.l.b16 %v599
    %v981 = vunpack.c.h.b16 %v599
    %v982 = vunpack.c.l.b16 %v600
    %v983 = vunpack.c.h.b16 %v600
    %v984 = vunpack.c.l.b16 %v601
    %v985 = vunpack.c.h.b16 %v601
    %v986 = vunpack.c.l.b16 %v602
    %v987 = vunpack.c.h.b16 %v602
    %v988 = vunpack.c.l.b16 %v603
    %v989 = vunpack.c.h.b16 %v603
    %v990 = vunpack.c.l.b16 %v604
    %v991 = vunpack.c.h.b16 %v604
    %v992 = vunpack.c.l.b16 %v605
    %v993 = vunpack.c.h.b16 %v605
    %v994 = vunpack.c.l.b16 %v606
    %v995 = vunpack.c.h.b16 %v606
    %v996 = vunpack.c.l.b16 %v607
    %v997 = vunpack.c.h.b16 %v607
    %v998 = vunpack.c.l.b16 %v608
    %v999 = vunpack.c.h.b16 %v608
    %v1000 = vunpack.c.l.b16 %v609
    %v1001 = vunpack.c.h.b16 %v609
    %v1002 = vunpack.c.l.b16 %v610
    %v1003 = vunpack.c.h.b16 %v610
    %v1004 = vunpack.c.l.b16 %v611
    %v1005 = vunpack.c.h.b16 %v611
    %v1006 = vunpack.c.l.b16 %v612
    %v1007 = vunpack.c.h.b16 %v612
    %v1008 = vunpack.c.l.b16 %v613
    %v1009 = vunpack.c.h.b16 %v613
    %v1010 = vunpack.c.l.b16 %v614
    %v1011 = vunpack.c.h.b16 %v614
    %v1012 = vunpack.c.l.b16 %v615
    %v1013 = vunpack.c.h.b16 %v615
    %v1014 = vunpack.c.l.b16 %v616
    %v1015 = vunpack.c.h.b16 %v616
    %v1016 = vunpack.c.l.b16 %v617
    %v1017 = vunpack.c.h.b16 %v617
    %v1018 = vunpack.c.l.b16 %v618
    %v1019 = vunpack.c.h.b16 %v618
    %v1020 = vunpack.c.l.b16 %v619
    %v1021 = vunpack.c.h.b16 %v619
    %v1022 = vunpack.c.l.b16 %v620
    %v1023 = vunpack.c.h.b16 %v620
    %v1024 = vunpack.c.l.b16 %v621
    %v1025 = vunpack.c.h.b16 %v621
    %v1026 = vunpack.c.l.b16 %v622
    %v1027 = vunpack.c.h.b16 %v622
    %v1028 = vunpack.c.l.b16 %v623
    %v1029 = vunpack.c.h.b16 %v623
    %v1030 = vunpack.c.l.b16 %v624
    %v1031 = vunpack.c.h.b16 %v624
    %v1032 = vunpack.c.l.b16 %v625
    %v1033 = vunpack.c.h.b16 %v625
    %v1034 = vpack.c.b16 %v974, %v970
    %v1035 = vpack.c.b16 %v975, %v971
    %v1036 = vpack.c.b16 %v976, %v972
    %v1037 = vpack.c.b16 %v977, %v973
    %v1038 = vpack.c.b16 %v982, %v978
    %v1039 = vpack.c.b16 %v983, %v979
    %v1040 = vpack.c.b16 %v984, %v980
    %v1041 = vpack.c.b16 %v985, %v981
    %v1042 = vpack.c.b16 %v990, %v986
    %v1043 = vpack.c.b16 %v991, %v987
    %v1044 = vpack.c.b16 %v992, %v988
    %v1045 = vpack.c.b16 %v993, %v989
    %v1046 = vpack.c.b16 %v998, %v994
    %v1047 = vpack.c.b16 %v999, %v995
    %v1048 = vpack.c.b16 %v1000, %v996
    %v1049 = vpack.c.b16 %v1001, %v997
    %v1050 = vpack.c.b16 %v1006, %v1002
    %v1051 = vpack.c.b16 %v1007, %v1003
    %v1052 = vpack.c.b16 %v1008, %v1004
    %v1053 = vpack.c.b16 %v1009, %v1005
    %v1054 = vpack.c.b16 %v1014, %v1010
    %v1055 = vpack.c.b16 %v1015, %v1011
    %v1056 = vpack.c.b16 %v1016, %v1012
    %v1057 = vpack.c.b16 %v1017, %v1013
    %v1058 = vpack.c.b16 %v1022, %v1018
    %v1059 = vpack.c.b16 %v1023, %v1019
    %v1060 = vpack.c.b16 %v1024, %v1020
    %v1061 = vpack.c.b16 %v1025, %v1021
    %v1062 = vpack.c.b16 %v1030, %v1026
    %v1063 = vpack.c.b16 %v1031, %v1027
    %v1064 = vpack.c.b16 %v1032, %v1028
    %v1065 = vpack.c.b16 %v1033, %v1029
    %1098 = vmatprep.subr.bf16.mxu0 %v1035
    %1099 = vmatpush1.bf16.msra.mxu0 %v1034
    %1100 = vmatprep.subr.bf16.mxu0 %v1039
    %1101 = vmatpush1.bf16.msra.mxu0 %v1038
    %1102 = vmatprep.subr.bf16.mxu0 %v1043
    %1103 = vmatpush1.bf16.msra.mxu0 %v1042
    %1104 = vmatprep.subr.bf16.mxu0 %v1047
    %1105 = vmatpush1.bf16.msra.mxu0 %v1046
    %1106 = vmatprep.subr.bf16.mxu0 %v1051
    %1107 = vmatpush1.bf16.msra.mxu0 %v1050
    %1108 = vmatprep.subr.bf16.mxu0 %v1055
    %1109 = vmatpush1.bf16.msra.mxu0 %v1054
    %1110 = vmatprep.subr.bf16.mxu0 %v1059
    %1111 = vmatpush1.bf16.msra.mxu0 %v1058
    %1112 = vmatprep.subr.bf16.mxu0 %v1063
    %1113 = vmatpush1.bf16.msra.mxu0 %v1062
    %1114 = vmatprep.subr.bf16.mxu0 0
    %1115 = vmatpush1.bf16.msra.mxu0 0
    %1116 = vmatprep.subr.bf16.mxu0 0
    %1117 = vmatpush1.bf16.msra.mxu0 0
    %1118 = vmatprep.subr.bf16.mxu0 0
    %1119 = vmatpush1.bf16.msra.mxu0 0
    %1120 = vmatprep.subr.bf16.mxu0 0
    %1121 = vmatpush1.bf16.msra.mxu0 0
    %1122 = vmatprep.subr.bf16.mxu0 0
    %1123 = vmatpush1.bf16.msra.mxu0 0
    %1124 = vmatprep.subr.bf16.mxu0 0
    %1125 = vmatpush1.bf16.msra.mxu0 0
    %1126 = vmatprep.subr.bf16.mxu0 0
    %1127 = vmatpush1.bf16.msra.mxu0 0
    %1128 = vmatprep.subr.bf16.mxu0 0
    %1129 = vmatpush1.bf16.msra.mxu0 0
    %1130 = vmatprep.mubr.bf16.mxu0 0
    %1131 = vmatmul.mubr.bf16.gmra.mrb[0].mxu0 0
    %v1132 = vpop.f32.mrb[0].mxu0
    %v1133 = vadd.f32 0.0, %v1132
    %v1134 = vpop.f32.mrb[0].mxu0
    %v1135 = vadd.f32 0.0, %v1134
    %v1136 = vpop.f32.mrb[0].mxu0
    %v1137 = vadd.f32 0.0, %v1136
    %v1138 = vpop.f32.mrb[0].mxu0
    %v1139 = vadd.f32 0.0, %v1138
    %1140 = vdwg.mxu0
    %1141 = vmatprep.subr.bf16.mxu0 %v1037
    %1142 = vmatpush1.bf16.msra.mxu0 %v1036
    %1143 = vmatprep.subr.bf16.mxu0 %v1041
    %1144 = vmatpush1.bf16.msra.mxu0 %v1040
    %1145 = vmatprep.subr.bf16.mxu0 %v1045
    %1146 = vmatpush1.bf16.msra.mxu0 %v1044
    %1147 = vmatprep.subr.bf16.mxu0 %v1049
    %1148 = vmatpush1.bf16.msra.mxu0 %v1048
    %1149 = vmatprep.subr.bf16.mxu0 %v1053
    %1150 = vmatpush1.bf16.msra.mxu0 %v1052
    %1151 = vmatprep.subr.bf16.mxu0 %v1057
    %1152 = vmatpush1.bf16.msra.mxu0 %v1056
    %1153 = vmatprep.subr.bf16.mxu0 %v1061
    %1154 = vmatpush1.bf16.msra.mxu0 %v1060
    %1155 = vmatprep.subr.bf16.mxu0 %v1065
    %1156 = vmatpush1.bf16.msra.mxu0 %v1064
    %1157 = vmatprep.subr.bf16.mxu0 0
    %1158 = vmatpush1.bf16.msra.mxu0 0
    %1159 = vmatprep.subr.bf16.mxu0 0
    %1160 = vmatpush1.bf16.msra.mxu0 0
    %1161 = vmatprep.subr.bf16.mxu0 0
    %1162 = vmatpush1.bf16.msra.mxu0 0
    %1163 = vmatprep.subr.bf16.mxu0 0
    %1164 = vmatpush1.bf16.msra.mxu0 0
    %1165 = vmatprep.subr.bf16.mxu0 0
    %1166 = vmatpush1.bf16.msra.mxu0 0
    %1167 = vmatprep.subr.bf16.mxu0 0
    %1168 = vmatpush1.bf16.msra.mxu0 0
    %1169 = vmatprep.subr.bf16.mxu0 0
    %1170 = vmatpush1.bf16.msra.mxu0 0
    %1171 = vmatprep.subr.bf16.mxu0 0
    %1172 = vmatpush1.bf16.msra.mxu0 0
    %1173 = vmatprep.mubr.bf16.mxu0 0
    %1174 = vmatmul.mubr.bf16.gmra.mrb[0].mxu0 0
    %v1175 = vpop.f32.mrb[0].mxu0
    %v1176 = vadd.f32 0.0, %v1175
    %v1177 = vpop.f32.mrb[0].mxu0
    %v1178 = vadd.f32 0.0, %v1177
    %v1179 = vpop.f32.mrb[0].mxu0
    %v1180 = vadd.f32 0.0, %v1179
    %v1181 = vpop.f32.mrb[0].mxu0
    %v1182 = vadd.f32 0.0, %v1181
    %1183 = vdwg.mxu0
    %v1216 = vunpack.c.l.b16 %v562
    %v1217 = vunpack.c.h.b16 %v562
    %v1218 = vunpack.c.l.b16 %v563
    %v1219 = vunpack.c.h.b16 %v563
    %v1220 = vunpack.c.l.b16 %v564
    %v1221 = vunpack.c.h.b16 %v564
    %v1222 = vunpack.c.l.b16 %v565
    %v1223 = vunpack.c.h.b16 %v565
    %v1224 = vunpack.c.l.b16 %v566
    %v1225 = vunpack.c.h.b16 %v566
    %v1226 = vunpack.c.l.b16 %v567
    %v1227 = vunpack.c.h.b16 %v567
    %v1228 = vunpack.c.l.b16 %v568
    %v1229 = vunpack.c.h.b16 %v568
    %v1230 = vunpack.c.l.b16 %v569
    %v1231 = vunpack.c.h.b16 %v569
    %v1232 = vunpack.c.l.b16 %v570
    %v1233 = vunpack.c.h.b16 %v570
    %v1234 = vunpack.c.l.b16 %v571
    %v1235 = vunpack.c.h.b16 %v571
    %v1236 = vunpack.c.l.b16 %v572
    %v1237 = vunpack.c.h.b16 %v572
    %v1238 = vunpack.c.l.b16 %v573
    %v1239 = vunpack.c.h.b16 %v573
    %v1240 = vunpack.c.l.b16 %v574
    %v1241 = vunpack.c.h.b16 %v574
    %v1242 = vunpack.c.l.b16 %v575
    %v1243 = vunpack.c.h.b16 %v575
    %v1244 = vunpack.c.l.b16 %v576
    %v1245 = vunpack.c.h.b16 %v576
    %v1246 = vunpack.c.l.b16 %v577
    %v1247 = vunpack.c.h.b16 %v577
    %v1248 = vunpack.c.l.b16 %v578
    %v1249 = vunpack.c.h.b16 %v578
    %v1250 = vunpack.c.l.b16 %v579
    %v1251 = vunpack.c.h.b16 %v579
    %v1252 = vunpack.c.l.b16 %v580
    %v1253 = vunpack.c.h.b16 %v580
    %v1254 = vunpack.c.l.b16 %v581
    %v1255 = vunpack.c.h.b16 %v581
    %v1256 = vunpack.c.l.b16 %v582
    %v1257 = vunpack.c.h.b16 %v582
    %v1258 = vunpack.c.l.b16 %v583
    %v1259 = vunpack.c.h.b16 %v583
    %v1260 = vunpack.c.l.b16 %v584
    %v1261 = vunpack.c.h.b16 %v584
    %v1262 = vunpack.c.l.b16 %v585
    %v1263 = vunpack.c.h.b16 %v585
    %v1264 = vunpack.c.l.b16 %v586
    %v1265 = vunpack.c.h.b16 %v586
    %v1266 = vunpack.c.l.b16 %v587
    %v1267 = vunpack.c.h.b16 %v587
    %v1268 = vunpack.c.l.b16 %v588
    %v1269 = vunpack.c.h.b16 %v588
    %v1270 = vunpack.c.l.b16 %v589
    %v1271 = vunpack.c.h.b16 %v589
    %v1272 = vunpack.c.l.b16 %v590
    %v1273 = vunpack.c.h.b16 %v590
    %v1274 = vunpack.c.l.b16 %v591
    %v1275 = vunpack.c.h.b16 %v591
    %v1276 = vunpack.c.l.b16 %v592
    %v1277 = vunpack.c.h.b16 %v592
    %v1278 = vunpack.c.l.b16 %v593
    %v1279 = vunpack.c.h.b16 %v593
    %v1280 = vpack.c.b16 %v1220, %v1216
    %v1281 = vpack.c.b16 %v1221, %v1217
    %v1282 = vpack.c.b16 %v1222, %v1218
    %v1283 = vpack.c.b16 %v1223, %v1219
    %v1284 = vpack.c.b16 %v1228, %v1224
    %v1285 = vpack.c.b16 %v1229, %v1225
    %v1286 = vpack.c.b16 %v1230, %v1226
    %v1287 = vpack.c.b16 %v1231, %v1227
    %v1288 = vpack.c.b16 %v1236, %v1232
    %v1289 = vpack.c.b16 %v1237, %v1233
    %v1290 = vpack.c.b16 %v1238, %v1234
    %v1291 = vpack.c.b16 %v1239, %v1235
    %v1292 = vpack.c.b16 %v1244, %v1240
    %v1293 = vpack.c.b16 %v1245, %v1241
    %v1294 = vpack.c.b16 %v1246, %v1242
    %v1295 = vpack.c.b16 %v1247, %v1243
    %v1296 = vpack.c.b16 %v1252, %v1248
    %v1297 = vpack.c.b16 %v1253, %v1249
    %v1298 = vpack.c.b16 %v1254, %v1250
    %v1299 = vpack.c.b16 %v1255, %v1251
    %v1300 = vpack.c.b16 %v1260, %v1256
    %v1301 = vpack.c.b16 %v1261, %v1257
    %v1302 = vpack.c.b16 %v1262, %v1258
    %v1303 = vpack.c.b16 %v1263, %v1259
    %v1304 = vpack.c.b16 %v1268, %v1264
    %v1305 = vpack.c.b16 %v1269, %v1265
    %v1306 = vpack.c.b16 %v1270, %v1266
    %v1307 = vpack.c.b16 %v1271, %v1267
    %v1308 = vpack.c.b16 %v1276, %v1272
    %v1309 = vpack.c.b16 %v1277, %v1273
    %v1310 = vpack.c.b16 %v1278, %v1274
    %v1311 = vpack.c.b16 %v1279, %v1275
    %1344 = vmatprep.subr.bf16.mxu0 %v1281
    %1345 = vmatpush1.bf16.msra.mxu0 %v1280
    %1346 = vmatprep.subr.bf16.mxu0 %v1285
    %1347 = vmatpush1.bf16.msra.mxu0 %v1284
    %1348 = vmatprep.subr.bf16.mxu0 %v1289
    %1349 = vmatpush1.bf16.msra.mxu0 %v1288
    %1350 = vmatprep.subr.bf16.mxu0 %v1293
    %1351 = vmatpush1.bf16.msra.mxu0 %v1292
    %1352 = vmatprep.subr.bf16.mxu0 %v1297
    %1353 = vmatpush1.bf16.msra.mxu0 %v1296
    %1354 = vmatprep.subr.bf16.mxu0 %v1301
    %1355 = vmatpush1.bf16.msra.mxu0 %v1300
    %1356 = vmatprep.subr.bf16.mxu0 %v1305
    %1357 = vmatpush1.bf16.msra.mxu0 %v1304
    %1358 = vmatprep.subr.bf16.mxu0 %v1309
    %1359 = vmatpush1.bf16.msra.mxu0 %v1308
    %1360 = vmatprep.subr.bf16.mxu0 0
    %1361 = vmatpush1.bf16.msra.mxu0 0
    %1362 = vmatprep.subr.bf16.mxu0 0
    %1363 = vmatpush1.bf16.msra.mxu0 0
    %1364 = vmatprep.subr.bf16.mxu0 0
    %1365 = vmatpush1.bf16.msra.mxu0 0
    %1366 = vmatprep.subr.bf16.mxu0 0
    %1367 = vmatpush1.bf16.msra.mxu0 0
    %1368 = vmatprep.subr.bf16.mxu0 0
    %1369 = vmatpush1.bf16.msra.mxu0 0
    %1370 = vmatprep.subr.bf16.mxu0 0
    %1371 = vmatpush1.bf16.msra.mxu0 0
    %1372 = vmatprep.subr.bf16.mxu0 0
    %1373 = vmatpush1.bf16.msra.mxu0 0
    %1374 = vmatprep.subr.bf16.mxu0 0
    %1375 = vmatpush1.bf16.msra.mxu0 0
    %1376 = vmatprep.mubr.bf16.mxu0 0
    %1377 = vmatmul.mubr.bf16.gmra.mrb[0].mxu0 %v937
    %v1378 = vpop.f32.mrb[0].mxu0
    %v1379 = vadd.f32 %v1133, %v1378
    %v1380 = vpop.f32.mrb[0].mxu0
    %v1381 = vadd.f32 %v1135, %v1380
    %v1382 = vpop.f32.mrb[0].mxu0
    %v1383 = vadd.f32 %v1137, %v1382
    %v1384 = vpop.f32.mrb[0].mxu0
    %v1385 = vadd.f32 %v1139, %v1384
    %1386 = vdwg.mxu0
    %1387 = vmatprep.subr.bf16.mxu0 %v1283
    %1388 = vmatpush1.bf16.msra.mxu0 %v1282
    %1389 = vmatprep.subr.bf16.mxu0 %v1287
    %1390 = vmatpush1.bf16.msra.mxu0 %v1286
    %1391 = vmatprep.subr.bf16.mxu0 %v1291
    %1392 = vmatpush1.bf16.msra.mxu0 %v1290
    %1393 = vmatprep.subr.bf16.mxu0 %v1295
    %1394 = vmatpush1.bf16.msra.mxu0 %v1294
    %1395 = vmatprep.subr.bf16.mxu0 %v1299
    %1396 = vmatpush1.bf16.msra.mxu0 %v1298
    %1397 = vmatprep.subr.bf16.mxu0 %v1303
    %1398 = vmatpush1.bf16.msra.mxu0 %v1302
    %1399 = vmatprep.subr.bf16.mxu0 %v1307
    %1400 = vmatpush1.bf16.msra.mxu0 %v1306
    %1401 = vmatprep.subr.bf16.mxu0 %v1311
    %1402 = vmatpush1.bf16.msra.mxu0 %v1310
    %1403 = vmatprep.subr.bf16.mxu0 0
    %1404 = vmatpush1.bf16.msra.mxu0 0
    %1405 = vmatprep.subr.bf16.mxu0 0
    %1406 = vmatpush1.bf16.msra.mxu0 0
    %1407 = vmatprep.subr.bf16.mxu0 0
    %1408 = vmatpush1.bf16.msra.mxu0 0
    %1409 = vmatprep.subr.bf16.mxu0 0
    %1410 = vmatpush1.bf16.msra.mxu0 0
    %1411 = vmatprep.subr.bf16.mxu0 0
    %1412 = vmatpush1.bf16.msra.mxu0 0
    %1413 = vmatprep.subr.bf16.mxu0 0
    %1414 = vmatpush1.bf16.msra.mxu0 0
    %1415 = vmatprep.subr.bf16.mxu0 0
    %1416 = vmatpush1.bf16.msra.mxu0 0
    %1417 = vmatprep.subr.bf16.mxu0 0
    %1418 = vmatpush1.bf16.msra.mxu0 0
    %1419 = vmatprep.mubr.bf16.mxu0 0
    %1420 = vmatmul.mubr.bf16.gmra.mrb[0].mxu0 %v937
    %v1421 = vpop.f32.mrb[0].mxu0
    %v1422 = vadd.f32 %v1176, %v1421
    %v1423 = vpop.f32.mrb[0].mxu0
    %v1424 = vadd.f32 %v1178, %v1423
    %v1425 = vpop.f32.mrb[0].mxu0
    %v1426 = vadd.f32 %v1180, %v1425
    %v1427 = vpop.f32.mrb[0].mxu0
    %v1428 = vadd.f32 %v1182, %v1427
    %1429 = vdwg.mxu0
    %v1431 = vlaneseq
    %v1432 = vshrl.u32 %v1431, 7
    %v1433 = vsub.s32 0, %v1432
    %v1434 = vrot.slane %v626, %v1433
    %v1435 = vlaneseq
    %v1436 = vshrl.u32 %v1435, 7
    %v1437 = vsub.s32 1, %v1436
    %v1438 = vrot.slane %v626, %v1437
    %v1439 = vlaneseq
    %v1440 = vshrl.u32 %v1439, 7
    %v1441 = vsub.s32 2, %v1440
    %v1442 = vrot.slane %v626, %v1441
    %v1443 = vlaneseq
    %v1444 = vshrl.u32 %v1443, 7
    %v1445 = vsub.s32 3, %v1444
    %v1446 = vrot.slane %v626, %v1445
    %v1451 = vadd.f32 %v1379, %v1434
    %v1452 = vadd.f32 %v1381, %v1438
    %v1453 = vadd.f32 %v1422, %v1442
    %v1454 = vadd.f32 %v1424, %v1446
    %v1455 = vadd.f32 %v1383, %v1434
    %v1456 = vadd.f32 %v1385, %v1438
    %v1457 = vadd.f32 %v1426, %v1442
    %v1458 = vadd.f32 %v1428, %v1446
    %v1459 = vxor.u32 %v1451, 2147483648
    %v1460 = vxor.u32 %v1455, 2147483648
    %v1461 = vmul.f32 %v1459, 1.442695
    %v1462 = vpow.pop %v1461
    %v1463 = vmul.f32 %v1460, 1.442695
    %v1464 = vpow.pop %v1463
    %v1465 = vadd.f32 %v1462, 1.0
    %v1466 = vadd.f32 %v1464, 1.0
    %v1467 = vrcp.pop %v1465
    %v1468 = vmul.f32 1.0, %v1467
    %v1469 = vrcp.pop %v1466
    %v1470 = vmul.f32 1.0, %v1469
    %v1471 = vxor.u32 %v1452, 2147483648
    %v1472 = vxor.u32 %v1456, 2147483648
    %v1473 = vmul.f32 %v1471, 1.442695
    %v1474 = vpow.pop %v1473
    %v1475 = vmul.f32 %v1472, 1.442695
    %v1476 = vpow.pop %v1475
    %v1477 = vadd.f32 %v1474, 1.0
    %v1478 = vadd.f32 %v1476, 1.0
    %v1479 = vrcp.pop %v1477
    %v1480 = vmul.f32 1.0, %v1479
    %v1481 = vrcp.pop %v1478
    %v1482 = vmul.f32 1.0, %v1481
    %v1483 = vtanh.pop %v1453
    %v1484 = vtanh.pop %v1457
    %v1485 = vxor.u32 %v1454, 2147483648
    %v1486 = vxor.u32 %v1458, 2147483648
    %v1487 = vmul.f32 %v1485, 1.442695
    %v1488 = vpow.pop %v1487
    %v1489 = vmul.f32 %v1486, 1.442695
    %v1490 = vpow.pop %v1489
    %v1491 = vadd.f32 %v1488, 1.0
    %v1492 = vadd.f32 %v1490, 1.0
    %v1493 = vrcp.pop %v1491
    %v1494 = vmul.f32 1.0, %v1493
    %v1495 = vrcp.pop %v1492
    %v1496 = vmul.f32 1.0, %v1495
    %v1497 = vmul.f32 %v1480, 0.0
    %v1498 = vmul.f32 %v1482, 0.0
    %v1499 = vmul.f32 %v1468, %v1483
    %v1500 = vmul.f32 %v1470, %v1484
    %v1501 = vadd.f32 %v1497, %v1499
    %v1502 = vadd.f32 %v1498, %v1500
    %v1503 = vtanh.pop %v1501
    %v1504 = vtanh.pop %v1502
    %v1505 = vmul.f32 %v1494, %v1503
    %v1506 = vmul.f32 %v1496, %v1504
    %v1507 = vld [vmem:[#allocation2 + $0x40] sm:$0xff]
    %v1508 = vld [vmem:[#allocation2 + $0x48] sm:$0xff]
    %v1509 = vld [vmem:[#allocation2 + $0x50] sm:$0xff]
    %v1510 = vld [vmem:[#allocation2 + $0x58] sm:$0xff]
    %v1511 = vld [vmem:[#allocation2 + $0x60] sm:$0xff]
    %v1512 = vld [vmem:[#allocation2 + $0x68] sm:$0xff]
    %v1513 = vld [vmem:[#allocation2 + $0x70] sm:$0xff]
    %v1514 = vld [vmem:[#allocation2 + $0x78] sm:$0xff]
    %1515 = vmatprep.subr.bf16.mxu0 %v732
    %1516 = vmatpush1.bf16.msra.mxu0 %v731
    %1517 = vmatprep.subr.bf16.mxu0 %v736
    %1518 = vmatpush1.bf16.msra.mxu0 %v735
    %1519 = vmatprep.subr.bf16.mxu0 %v740
    %1520 = vmatpush1.bf16.msra.mxu0 %v739
    %1521 = vmatprep.subr.bf16.mxu0 %v744
    %1522 = vmatpush1.bf16.msra.mxu0 %v743
    %1523 = vmatprep.subr.bf16.mxu0 %v748
    %1524 = vmatpush1.bf16.msra.mxu0 %v747
    %1525 = vmatprep.subr.bf16.mxu0 %v752
    %1526 = vmatpush1.bf16.msra.mxu0 %v751
    %1527 = vmatprep.subr.bf16.mxu0 %v756
    %1528 = vmatpush1.bf16.msra.mxu0 %v755
    %1529 = vmatprep.subr.bf16.mxu0 %v760
    %1530 = vmatpush1.bf16.msra.mxu0 %v759
    %1531 = vmatprep.subr.bf16.mxu0 0
    %1532 = vmatpush1.bf16.msra.mxu0 0
    %1533 = vmatprep.subr.bf16.mxu0 0
    %1534 = vmatpush1.bf16.msra.mxu0 0
    %1535 = vmatprep.subr.bf16.mxu0 0
    %1536 = vmatpush1.bf16.msra.mxu0 0
    %1537 = vmatprep.subr.bf16.mxu0 0
    %1538 = vmatpush1.bf16.msra.mxu0 0
    %1539 = vmatprep.subr.bf16.mxu0 0
    %1540 = vmatpush1.bf16.msra.mxu0 0
    %1541 = vmatprep.subr.bf16.mxu0 0
    %1542 = vmatpush1.bf16.msra.mxu0 0
    %1543 = vmatprep.subr.bf16.mxu0 0
    %1544 = vmatpush1.bf16.msra.mxu0 0
    %1545 = vmatprep.subr.bf16.mxu0 0
    %1546 = vmatpush1.bf16.msra.mxu0 0
    %1547 = vmatprep.mubr.bf16.mxu0 0
    %1548 = vmatmul.mubr.bf16.gmra.mrb[0].mxu0 %v937
    %v1549 = vpop.f32.mrb[0].mxu0
    %v1550 = vadd.f32 0.0, %v1549
    %v1551 = vpop.f32.mrb[0].mxu0
    %v1552 = vadd.f32 0.0, %v1551
    %v1553 = vpop.f32.mrb[0].mxu0
    %v1554 = vadd.f32 0.0, %v1553
    %v1555 = vpop.f32.mrb[0].mxu0
    %v1556 = vadd.f32 0.0, %v1555
    %1557 = vdwg.mxu0
    %1558 = vmatprep.subr.bf16.mxu0 %v734
    %1559 = vmatpush1.bf16.msra.mxu0 %v733
    %1560 = vmatprep.subr.bf16.mxu0 %v738
    %1561 = vmatpush1.bf16.msra.mxu0 %v737
    %1562 = vmatprep.subr.bf16.mxu0 %v742
    %1563 = vmatpush1.bf16.msra.mxu0 %v741
    %1564 = vmatprep.subr.bf16.mxu0 %v746
    %1565 = vmatpush1.bf16.msra.mxu0 %v745
    %1566 = vmatprep.subr.bf16.mxu0 %v750
    %1567 = vmatpush1.bf16.msra.mxu0 %v749
    %1568 = vmatprep.subr.bf16.mxu0 %v754
    %1569 = vmatpush1.bf16.msra.mxu0 %v753
    %1570 = vmatprep.subr.bf16.mxu0 %v758
    %1571 = vmatpush1.bf16.msra.mxu0 %v757
    %1572 = vmatprep.subr.bf16.mxu0 %v762
    %1573 = vmatpush1.bf16.msra.mxu0 %v761
    %1574 = vmatprep.subr.bf16.mxu0 0
    %1575 = vmatpush1.bf16.msra.mxu0 0
    %1576 = vmatprep.subr.bf16.mxu0 0
    %1577 = vmatpush1.bf16.msra.mxu0 0
    %1578 = vmatprep.subr.bf16.mxu0 0
    %1579 = vmatpush1.bf16.msra.mxu0 0
    %1580 = vmatprep.subr.bf16.mxu0 0
    %1581 = vmatpush1.bf16.msra.mxu0 0
    %1582 = vmatprep.subr.bf16.mxu0 0
    %1583 = vmatpush1.bf16.msra.mxu0 0
    %1584 = vmatprep.subr.bf16.mxu0 0
    %1585 = vmatpush1.bf16.msra.mxu0 0
    %1586 = vmatprep.subr.bf16.mxu0 0
    %1587 = vmatpush1.bf16.msra.mxu0 0
    %1588 = vmatprep.subr.bf16.mxu0 0
    %1589 = vmatpush1.bf16.msra.mxu0 0
    %1590 = vmatprep.mubr.bf16.mxu0 0
    %1591 = vmatmul.mubr.bf16.gmra.mrb[0].mxu0 %v937
    %v1592 = vpop.f32.mrb[0].mxu0
    %v1593 = vadd.f32 0.0, %v1592
    %v1594 = vpop.f32.mrb[0].mxu0
    %v1595 = vadd.f32 0.0, %v1594
    %v1596 = vpop.f32.mrb[0].mxu0
    %v1597 = vadd.f32 0.0, %v1596
    %v1598 = vpop.f32.mrb[0].mxu0
    %v1599 = vadd.f32 0.0, %v1598
    %1600 = vdwg.mxu0
    %v1601 = vadd.f32 %v1507, %v1550
    %v1602 = vadd.f32 %v1508, %v1552
    %v1603 = vadd.f32 %v1509, %v1593
    %v1604 = vadd.f32 %v1510, %v1595
    %v1605 = vadd.f32 %v1511, %v1554
    %v1606 = vadd.f32 %v1512, %v1556
    %v1607 = vadd.f32 %v1513, %v1597
    %v1608 = vadd.f32 %v1514, %v1599
    %v1609 = vxor.u32 %v1601, 2147483648
    %v1610 = vxor.u32 %v1605, 2147483648
    %v1611 = vmul.f32 %v1609, 1.442695
    %v1612 = vpow.pop %v1611
    %v1613 = vmul.f32 %v1610, 1.442695
    %v1614 = vpow.pop %v1613
    %v1615 = vadd.f32 %v1612, 1.0
    %v1616 = vadd.f32 %v1614, 1.0
    %v1617 = vrcp.pop %v1615
    %v1618 = vmul.f32 1.0, %v1617
    %v1619 = vrcp.pop %v1616
    %v1620 = vmul.f32 1.0, %v1619
    %v1621 = vxor.u32 %v1602, 2147483648
    %v1622 = vxor.u32 %v1606, 2147483648
    %v1623 = vmul.f32 %v1621, 1.442695
    %v1624 = vpow.pop %v1623
    %v1625 = vmul.f32 %v1622, 1.442695
    %v1626 = vpow.pop %v1625
    %v1627 = vadd.f32 %v1624, 1.0
    %v1628 = vadd.f32 %v1626, 1.0
    %v1629 = vrcp.pop %v1627
    %v1630 = vmul.f32 1.0, %v1629
    %v1631 = vrcp.pop %v1628
    %v1632 = vmul.f32 1.0, %v1631
    %v1633 = vtanh.pop %v1603
    %v1634 = vtanh.pop %v1607
    %v1635 = vxor.u32 %v1604, 2147483648
    %v1636 = vxor.u32 %v1608, 2147483648
    %v1637 = vmul.f32 %v1635, 1.442695
    %v1638 = vpow.pop %v1637
    %v1639 = vmul.f32 %v1636, 1.442695
    %v1640 = vpow.pop %v1639
    %v1641 = vadd.f32 %v1638, 1.0
    %v1642 = vadd.f32 %v1640, 1.0
    %v1643 = vrcp.pop %v1641
    %v1644 = vmul.f32 1.0, %v1643
    %v1645 = vrcp.pop %v1642
    %v1646 = vmul.f32 1.0, %v1645
    %v1647 = vmul.f32 %v1630, %v931
    %v1648 = vmul.f32 %v1632, %v932
    %v1649 = vmul.f32 %v1618, %v1633
    %v1650 = vmul.f32 %v1620, %v1634
    %v1651 = vadd.f32 %v1647, %v1649
    %v1652 = vadd.f32 %v1648, %v1650
    %v1653 = vtanh.pop %v1651
    %v1654 = vtanh.pop %v1652
    %v1655 = vmul.f32 %v1644, %v1653
    %v1656 = vmul.f32 %v1646, %v1654
    %v1657 = vpack.c.bf16 %v1656, %v1655
    %v1658 = vpack.c.bf16 %v1506, %v1505
    %1659 = vmatprep.subr.bf16.mxu0 %v1035
    %1660 = vmatpush1.bf16.msra.mxu0 %v1034
    %1661 = vmatprep.subr.bf16.mxu0 %v1039
    %1662 = vmatpush1.bf16.msra.mxu0 %v1038
    %1663 = vmatprep.subr.bf16.mxu0 %v1043
    %1664 = vmatpush1.bf16.msra.mxu0 %v1042
    %1665 = vmatprep.subr.bf16.mxu0 %v1047
    %1666 = vmatpush1.bf16.msra.mxu0 %v1046
    %1667 = vmatprep.subr.bf16.mxu0 %v1051
    %1668 = vmatpush1.bf16.msra.mxu0 %v1050
    %1669 = vmatprep.subr.bf16.mxu0 %v1055
    %1670 = vmatpush1.bf16.msra.mxu0 %v1054
    %1671 = vmatprep.subr.bf16.mxu0 %v1059
    %1672 = vmatpush1.bf16.msra.mxu0 %v1058
    %1673 = vmatprep.subr.bf16.mxu0 %v1063
    %1674 = vmatpush1.bf16.msra.mxu0 %v1062
    %1675 = vmatprep.subr.bf16.mxu0 0
    %1676 = vmatpush1.bf16.msra.mxu0 0
    %1677 = vmatprep.subr.bf16.mxu0 0
    %1678 = vmatpush1.bf16.msra.mxu0 0
    %1679 = vmatprep.subr.bf16.mxu0 0
    %1680 = vmatpush1.bf16.msra.mxu0 0
    %1681 = vmatprep.subr.bf16.mxu0 0
    %1682 = vmatpush1.bf16.msra.mxu0 0
    %1683 = vmatprep.subr.bf16.mxu0 0
    %1684 = vmatpush1.bf16.msra.mxu0 0
    %1685 = vmatprep.subr.bf16.mxu0 0
    %1686 = vmatpush1.bf16.msra.mxu0 0
    %1687 = vmatprep.subr.bf16.mxu0 0
    %1688 = vmatpush1.bf16.msra.mxu0 0
    %1689 = vmatprep.subr.bf16.mxu0 0
    %1690 = vmatpush1.bf16.msra.mxu0 0
    %1691 = vmatprep.mubr.bf16.mxu0 0
    %1692 = vmatmul.mubr.bf16.gmra.mrb[0].mxu0 %v1658
    %v1693 = vpop.f32.mrb[0].mxu0
    %v1694 = vadd.f32 0.0, %v1693
    %v1695 = vpop.f32.mrb[0].mxu0
    %v1696 = vadd.f32 0.0, %v1695
    %v1697 = vpop.f32.mrb[0].mxu0
    %v1698 = vadd.f32 0.0, %v1697
    %v1699 = vpop.f32.mrb[0].mxu0
    %v1700 = vadd.f32 0.0, %v1699
    %1701 = vdwg.mxu0
    %1702 = vmatprep.subr.bf16.mxu0 %v1037
    %1703 = vmatpush1.bf16.msra.mxu0 %v1036
    %1704 = vmatprep.subr.bf16.mxu0 %v1041
    %1705 = vmatpush1.bf16.msra.mxu0 %v1040
    %1706 = vmatprep.subr.bf16.mxu0 %v1045
    %1707 = vmatpush1.bf16.msra.mxu0 %v1044
    %1708 = vmatprep.subr.bf16.mxu0 %v1049
    %1709 = vmatpush1.bf16.msra.mxu0 %v1048
    %1710 = vmatprep.subr.bf16.mxu0 %v1053
    %1711 = vmatpush1.bf16.msra.mxu0 %v1052
    %1712 = vmatprep.subr.bf16.mxu0 %v1057
    %1713 = vmatpush1.bf16.msra.mxu0 %v1056
    %1714 = vmatprep.subr.bf16.mxu0 %v1061
    %1715 = vmatpush1.bf16.msra.mxu0 %v1060
    %1716 = vmatprep.subr.bf16.mxu0 %v1065
    %1717 = vmatpush1.bf16.msra.mxu0 %v1064
    %1718 = vmatprep.subr.bf16.mxu0 0
    %1719 = vmatpush1.bf16.msra.mxu0 0
    %1720 = vmatprep.subr.bf16.mxu0 0
    %1721 = vmatpush1.bf16.msra.mxu0 0
    %1722 = vmatprep.subr.bf16.mxu0 0
    %1723 = vmatpush1.bf16.msra.mxu0 0
    %1724 = vmatprep.subr.bf16.mxu0 0
    %1725 = vmatpush1.bf16.msra.mxu0 0
    %1726 = vmatprep.subr.bf16.mxu0 0
    %1727 = vmatpush1.bf16.msra.mxu0 0
    %1728 = vmatprep.subr.bf16.mxu0 0
    %1729 = vmatpush1.bf16.msra.mxu0 0
    %1730 = vmatprep.subr.bf16.mxu0 0
    %1731 = vmatpush1.bf16.msra.mxu0 0
    %1732 = vmatprep.subr.bf16.mxu0 0
    %1733 = vmatpush1.bf16.msra.mxu0 0
    %1734 = vmatprep.mubr.bf16.mxu0 0
    %1735 = vmatmul.mubr.bf16.gmra.mrb[0].mxu0 %v1658
    %v1736 = vpop.f32.mrb[0].mxu0
    %v1737 = vadd.f32 0.0, %v1736
    %v1738 = vpop.f32.mrb[0].mxu0
    %v1739 = vadd.f32 0.0, %v1738
    %v1740 = vpop.f32.mrb[0].mxu0
    %v1741 = vadd.f32 0.0, %v1740
    %v1742 = vpop.f32.mrb[0].mxu0
    %v1743 = vadd.f32 0.0, %v1742
    %1744 = vdwg.mxu0
    %1745 = vmatprep.subr.bf16.mxu0 %v1281
    %1746 = vmatpush1.bf16.msra.mxu0 %v1280
    %1747 = vmatprep.subr.bf16.mxu0 %v1285
    %1748 = vmatpush1.bf16.msra.mxu0 %v1284
    %1749 = vmatprep.subr.bf16.mxu0 %v1289
    %1750 = vmatpush1.bf16.msra.mxu0 %v1288
    %1751 = vmatprep.subr.bf16.mxu0 %v1293
    %1752 = vmatpush1.bf16.msra.mxu0 %v1292
    %1753 = vmatprep.subr.bf16.mxu0 %v1297
    %1754 = vmatpush1.bf16.msra.mxu0 %v1296
    %1755 = vmatprep.subr.bf16.mxu0 %v1301
    %1756 = vmatpush1.bf16.msra.mxu0 %v1300
    %1757 = vmatprep.subr.bf16.mxu0 %v1305
    %1758 = vmatpush1.bf16.msra.mxu0 %v1304
    %1759 = vmatprep.subr.bf16.mxu0 %v1309
    %1760 = vmatpush1.bf16.msra.mxu0 %v1308
    %1761 = vmatprep.subr.bf16.mxu0 0
    %1762 = vmatpush1.bf16.msra.mxu0 0
    %1763 = vmatprep.subr.bf16.mxu0 0
    %1764 = vmatpush1.bf16.msra.mxu0 0
    %1765 = vmatprep.subr.bf16.mxu0 0
    %1766 = vmatpush1.bf16.msra.mxu0 0
    %1767 = vmatprep.subr.bf16.mxu0 0
    %1768 = vmatpush1.bf16.msra.mxu0 0
    %1769 = vmatprep.subr.bf16.mxu0 0
    %1770 = vmatpush1.bf16.msra.mxu0 0
    %1771 = vmatprep.subr.bf16.mxu0 0
    %1772 = vmatpush1.bf16.msra.mxu0 0
    %1773 = vmatprep.subr.bf16.mxu0 0
    %1774 = vmatpush1.bf16.msra.mxu0 0
    %1775 = vmatprep.subr.bf16.mxu0 0
    %1776 = vmatpush1.bf16.msra.mxu0 0
    %1777 = vmatprep.mubr.bf16.mxu0 0
    %1778 = vmatmul.mubr.bf16.gmra.mrb[0].mxu0 %v1657
    %v1779 = vpop.f32.mrb[0].mxu0
    %v1780 = vadd.f32 %v1694, %v1779
    %v1781 = vpop.f32.mrb[0].mxu0
    %v1782 = vadd.f32 %v1696, %v1781
    %v1783 = vpop.f32.mrb[0].mxu0
    %v1784 = vadd.f32 %v1698, %v1783
    %v1785 = vpop.f32.mrb[0].mxu0
    %v1786 = vadd.f32 %v1700, %v1785
    %1787 = vdwg.mxu0
    %1788 = vmatprep.subr.bf16.mxu0 %v1283
    %1789 = vmatpush1.bf16.msra.mxu0 %v1282
    %1790 = vmatprep.subr.bf16.mxu0 %v1287
    %1791 = vmatpush1.bf16.msra.mxu0 %v1286
    %1792 = vmatprep.subr.bf16.mxu0 %v1291
    %1793 = vmatpush1.bf16.msra.mxu0 %v1290
    %1794 = vmatprep.subr.bf16.mxu0 %v1295
    %1795 = vmatpush1.bf16.msra.mxu0 %v1294
    %1796 = vmatprep.subr.bf16.mxu0 %v1299
    %1797 = vmatpush1.bf16.msra.mxu0 %v1298
    %1798 = vmatprep.subr.bf16.mxu0 %v1303
    %1799 = vmatpush1.bf16.msra.mxu0 %v1302
    %1800 = vmatprep.subr.bf16.mxu0 %v1307
    %1801 = vmatpush1.bf16.msra.mxu0 %v1306
    %1802 = vmatprep.subr.bf16.mxu0 %v1311
    %1803 = vmatpush1.bf16.msra.mxu0 %v1310
    %1804 = vmatprep.subr.bf16.mxu0 0
    %1805 = vmatpush1.bf16.msra.mxu0 0
    %1806 = vmatprep.subr.bf16.mxu0 0
    %1807 = vmatpush1.bf16.msra.mxu0 0
    %1808 = vmatprep.subr.bf16.mxu0 0
    %1809 = vmatpush1.bf16.msra.mxu0 0
    %1810 = vmatprep.subr.bf16.mxu0 0
    %1811 = vmatpush1.bf16.msra.mxu0 0
    %1812 = vmatprep.subr.bf16.mxu0 0
    %1813 = vmatpush1.bf16.msra.mxu0 0
    %1814 = vmatprep.subr.bf16.mxu0 0
    %1815 = vmatpush1.bf16.msra.mxu0 0
    %1816 = vmatprep.subr.bf16.mxu0 0
    %1817 = vmatpush1.bf16.msra.mxu0 0
    %1818 = vmatprep.subr.bf16.mxu0 0
    %1819 = vmatpush1.bf16.msra.mxu0 0
    %1820 = vmatprep.mubr.bf16.mxu0 0
    %1821 = vmatmul.mubr.bf16.gmra.mrb[0].mxu0 %v1657
    %v1822 = vpop.f32.mrb[0].mxu0
    %v1823 = vadd.f32 %v1737, %v1822
    %v1824 = vpop.f32.mrb[0].mxu0
    %v1825 = vadd.f32 %v1739, %v1824
    %v1826 = vpop.f32.mrb[0].mxu0
    %v1827 = vadd.f32 %v1741, %v1826
    %v1828 = vpop.f32.mrb[0].mxu0
    %v1829 = vadd.f32 %v1743, %v1828
    %1830 = vdwg.mxu0
    %v1831 = vadd.f32 %v1780, %v1434
    %v1832 = vadd.f32 %v1782, %v1438
    %v1833 = vadd.f32 %v1823, %v1442
    %v1834 = vadd.f32 %v1825, %v1446
    %v1835 = vadd.f32 %v1784, %v1434
    %v1836 = vadd.f32 %v1786, %v1438
    %v1837 = vadd.f32 %v1827, %v1442
    %v1838 = vadd.f32 %v1829, %v1446
    %v1839 = vxor.u32 %v1831, 2147483648
    %v1840 = vxor.u32 %v1835, 2147483648
    %v1841 = vmul.f32 %v1839, 1.442695
    %v1842 = vpow.pop %v1841
    %v1843 = vmul.f32 %v1840, 1.442695
    %v1844 = vpow.pop %v1843
    %v1845 = vadd.f32 %v1842, 1.0
    %v1846 = vadd.f32 %v1844, 1.0
    %v1847 = vrcp.pop %v1845
    %v1848 = vmul.f32 1.0, %v1847
    %v1849 = vrcp.pop %v1846
    %v1850 = vmul.f32 1.0, %v1849
    %v1851 = vxor.u32 %v1832, 2147483648
    %v1852 = vxor.u32 %v1836, 2147483648
    %v1853 = vmul.f32 %v1851, 1.442695
    %v1854 = vpow.pop %v1853
    %v1855 = vmul.f32 %v1852, 1.442695
    %v1856 = vpow.pop %v1855
    %v1857 = vadd.f32 %v1854, 1.0
    %v1858 = vadd.f32 %v1856, 1.0
    %v1859 = vrcp.pop %v1857
    %v1860 = vmul.f32 1.0, %v1859
    %v1861 = vrcp.pop %v1858
    %v1862 = vmul.f32 1.0, %v1861
    %v1863 = vtanh.pop %v1833
    %v1864 = vtanh.pop %v1837
    %v1865 = vxor.u32 %v1834, 2147483648
    %v1866 = vxor.u32 %v1838, 2147483648
    %v1867 = vmul.f32 %v1865, 1.442695
    %v1868 = vpow.pop %v1867
    %v1869 = vmul.f32 %v1866, 1.442695
    %v1870 = vpow.pop %v1869
    %v1871 = vadd.f32 %v1868, 1.0
    %v1872 = vadd.f32 %v1870, 1.0
    %v1873 = vrcp.pop %v1871
    %v1874 = vmul.f32 1.0, %v1873
    %v1875 = vrcp.pop %v1872
    %v1876 = vmul.f32 1.0, %v1875
    %v1877 = vmul.f32 %v1860, %v1501
    %v1878 = vmul.f32 %v1862, %v1502
    %v1879 = vmul.f32 %v1848, %v1863
    %v1880 = vmul.f32 %v1850, %v1864
    %v1881 = vadd.f32 %v1877, %v1879
    %v1882 = vadd.f32 %v1878, %v1880
    %v1883 = vtanh.pop %v1881
    %v1884 = vtanh.pop %v1882
    %v1885 = vmul.f32 %v1874, %v1883
    %v1886 = vmul.f32 %v1876, %v1884
    %v1887 = vld [vmem:[#allocation2 + $0x80] sm:$0xff]
    %v1888 = vld [vmem:[#allocation2 + $0x88] sm:$0xff]
    %v1889 = vld [vmem:[#allocation2 + $0x90] sm:$0xff]
    %v1890 = vld [vmem:[#allocation2 + $0x98] sm:$0xff]
    %v1891 = vld [vmem:[#allocation2 + $0xa0] sm:$0xff]
    %v1892 = vld [vmem:[#allocation2 + $0xa8] sm:$0xff]
    %v1893 = vld [vmem:[#allocation2 + $0xb0] sm:$0xff]
    %v1894 = vld [vmem:[#allocation2 + $0xb8] sm:$0xff]
    %1895 = vmatprep.subr.bf16.mxu0 %v732
    %1896 = vmatpush1.bf16.msra.mxu0 %v731
    %1897 = vmatprep.subr.bf16.mxu0 %v736
    %1898 = vmatpush1.bf16.msra.mxu0 %v735
    %1899 = vmatprep.subr.bf16.mxu0 %v740
    %1900 = vmatpush1.bf16.msra.mxu0 %v739
    %1901 = vmatprep.subr.bf16.mxu0 %v744
    %1902 = vmatpush1.bf16.msra.mxu0 %v743
    %1903 = vmatprep.subr.bf16.mxu0 %v748
    %1904 = vmatpush1.bf16.msra.mxu0 %v747
    %1905 = vmatprep.subr.bf16.mxu0 %v752
    %1906 = vmatpush1.bf16.msra.mxu0 %v751
    %1907 = vmatprep.subr.bf16.mxu0 %v756
    %1908 = vmatpush1.bf16.msra.mxu0 %v755
    %1909 = vmatprep.subr.bf16.mxu0 %v760
    %1910 = vmatpush1.bf16.msra.mxu0 %v759
    %1911 = vmatprep.subr.bf16.mxu0 0
    %1912 = vmatpush1.bf16.msra.mxu0 0
    %1913 = vmatprep.subr.bf16.mxu0 0
    %1914 = vmatpush1.bf16.msra.mxu0 0
    %1915 = vmatprep.subr.bf16.mxu0 0
    %1916 = vmatpush1.bf16.msra.mxu0 0
    %1917 = vmatprep.subr.bf16.mxu0 0
    %1918 = vmatpush1.bf16.msra.mxu0 0
    %1919 = vmatprep.subr.bf16.mxu0 0
    %1920 = vmatpush1.bf16.msra.mxu0 0
    %1921 = vmatprep.subr.bf16.mxu0 0
    %1922 = vmatpush1.bf16.msra.mxu0 0
    %1923 = vmatprep.subr.bf16.mxu0 0
    %1924 = vmatpush1.bf16.msra.mxu0 0
    %1925 = vmatprep.subr.bf16.mxu0 0
    %1926 = vmatpush1.bf16.msra.mxu0 0
    %1927 = vmatprep.mubr.bf16.mxu0 0
    %1928 = vmatmul.mubr.bf16.gmra.mrb[0].mxu0 %v1657
    %v1929 = vpop.f32.mrb[0].mxu0
    %v1930 = vadd.f32 0.0, %v1929
    %v1931 = vpop.f32.mrb[0].mxu0
    %v1932 = vadd.f32 0.0, %v1931
    %v1933 = vpop.f32.mrb[0].mxu0
    %v1934 = vadd.f32 0.0, %v1933
    %v1935 = vpop.f32.mrb[0].mxu0
    %v1936 = vadd.f32 0.0, %v1935
    %1937 = vdwg.mxu0
    %1938 = vmatprep.subr.bf16.mxu0 %v734
    %1939 = vmatpush1.bf16.msra.mxu0 %v733
    %1940 = vmatprep.subr.bf16.mxu0 %v738
    %1941 = vmatpush1.bf16.msra.mxu0 %v737
    %1942 = vmatprep.subr.bf16.mxu0 %v742
    %1943 = vmatpush1.bf16.msra.mxu0 %v741
    %1944 = vmatprep.subr.bf16.mxu0 %v746
    %1945 = vmatpush1.bf16.msra.mxu0 %v745
    %1946 = vmatprep.subr.bf16.mxu0 %v750
    %1947 = vmatpush1.bf16.msra.mxu0 %v749
    %1948 = vmatprep.subr.bf16.mxu0 %v754
    %1949 = vmatpush1.bf16.msra.mxu0 %v753
    %1950 = vmatprep.subr.bf16.mxu0 %v758
    %1951 = vmatpush1.bf16.msra.mxu0 %v757
    %1952 = vmatprep.subr.bf16.mxu0 %v762
    %1953 = vmatpush1.bf16.msra.mxu0 %v761
    %1954 = vmatprep.subr.bf16.mxu0 0
    %1955 = vmatpush1.bf16.msra.mxu0 0
    %1956 = vmatprep.subr.bf16.mxu0 0
    %1957 = vmatpush1.bf16.msra.mxu0 0
    %1958 = vmatprep.subr.bf16.mxu0 0
    %1959 = vmatpush1.bf16.msra.mxu0 0
    %1960 = vmatprep.subr.bf16.mxu0 0
    %1961 = vmatpush1.bf16.msra.mxu0 0
    %1962 = vmatprep.subr.bf16.mxu0 0
    %1963 = vmatpush1.bf16.msra.mxu0 0
    %1964 = vmatprep.subr.bf16.mxu0 0
    %1965 = vmatpush1.bf16.msra.mxu0 0
    %1966 = vmatprep.subr.bf16.mxu0 0
    %1967 = vmatpush1.bf16.msra.mxu0 0
    %1968 = vmatprep.subr.bf16.mxu0 0
    %1969 = vmatpush1.bf16.msra.mxu0 0
    %1970 = vmatprep.mubr.bf16.mxu0 0
    %1971 = vmatmul.mubr.bf16.gmra.mrb[0].mxu0 %v1657
    %v1972 = vpop.f32.mrb[0].mxu0
    %v1973 = vadd.f32 0.0, %v1972
    %v1974 = vpop.f32.mrb[0].mxu0
    %v1975 = vadd.f32 0.0, %v1974
    %v1976 = vpop.f32.mrb[0].mxu0
    %v1977 = vadd.f32 0.0, %v1976
    %v1978 = vpop.f32.mrb[0].mxu0
    %v1979 = vadd.f32 0.0, %v1978
    %1980 = vdwg.mxu0
    %v1981 = vadd.f32 %v1887, %v1930
    %v1982 = vadd.f32 %v1888, %v1932
    %v1983 = vadd.f32 %v1889, %v1973
    %v1984 = vadd.f32 %v1890, %v1975
    %v1985 = vadd.f32 %v1891, %v1934
    %v1986 = vadd.f32 %v1892, %v1936
    %v1987 = vadd.f32 %v1893, %v1977
    %v1988 = vadd.f32 %v1894, %v1979
    %v1989 = vxor.u32 %v1981, 2147483648
    %v1990 = vxor.u32 %v1985, 2147483648
    %v1991 = vmul.f32 %v1989, 1.442695
    %v1992 = vpow.pop %v1991
    %v1993 = vmul.f32 %v1990, 1.442695
    %v1994 = vpow.pop %v1993
    %v1995 = vadd.f32 %v1992, 1.0
    %v1996 = vadd.f32 %v1994, 1.0
    %v1997 = vrcp.pop %v1995
    %v1998 = vmul.f32 1.0, %v1997
    %v1999 = vrcp.pop %v1996
    %v2000 = vmul.f32 1.0, %v1999
    %v2001 = vxor.u32 %v1982, 2147483648
    %v2002 = vxor.u32 %v1986, 2147483648
    %v2003 = vmul.f32 %v2001, 1.442695
    %v2004 = vpow.pop %v2003
    %v2005 = vmul.f32 %v2002, 1.442695
    %v2006 = vpow.pop %v2005
    %v2007 = vadd.f32 %v2004, 1.0
    %v2008 = vadd.f32 %v2006, 1.0
    %v2009 = vrcp.pop %v2007
    %v2010 = vmul.f32 1.0, %v2009
    %v2011 = vrcp.pop %v2008
    %v2012 = vmul.f32 1.0, %v2011
    %v2013 = vtanh.pop %v1983
    %v2014 = vtanh.pop %v1987
    %v2015 = vxor.u32 %v1984, 2147483648
    %v2016 = vxor.u32 %v1988, 2147483648
    %v2017 = vmul.f32 %v2015, 1.442695
    %v2018 = vpow.pop %v2017
    %v2019 = vmul.f32 %v2016, 1.442695
    %v2020 = vpow.pop %v2019
    %v2021 = vadd.f32 %v2018, 1.0
    %v2022 = vadd.f32 %v2020, 1.0
    %v2023 = vrcp.pop %v2021
    %v2024 = vmul.f32 1.0, %v2023
    %v2025 = vrcp.pop %v2022
    %v2026 = vmul.f32 1.0, %v2025
    %v2027 = vmul.f32 %v2010, %v1651
    %v2028 = vmul.f32 %v2012, %v1652
    %v2029 = vmul.f32 %v1998, %v2013
    %v2030 = vmul.f32 %v2000, %v2014
    %v2031 = vadd.f32 %v2027, %v2029
    %v2032 = vadd.f32 %v2028, %v2030
    %v2033 = vtanh.pop %v2031
    %v2034 = vtanh.pop %v2032
    %v2035 = vmul.f32 %v2024, %v2033
    %v2036 = vmul.f32 %v2026, %v2034
    %v2037 = vpack.c.bf16 %v2036, %v2035
    %v2038 = vpack.c.bf16 %v1886, %v1885
    %2039 = vmatprep.subr.bf16.mxu0 %v1035
    %2040 = vmatpush1.bf16.msra.mxu0 %v1034
    %2041 = vmatprep.subr.bf16.mxu0 %v1039
    %2042 = vmatpush1.bf16.msra.mxu0 %v1038
    %2043 = vmatprep.subr.bf16.mxu0 %v1043
    %2044 = vmatpush1.bf16.msra.mxu0 %v1042
    %2045 = vmatprep.subr.bf16.mxu0 %v1047
    %2046 = vmatpush1.bf16.msra.mxu0 %v1046
    %2047 = vmatprep.subr.bf16.mxu0 %v1051
    %2048 = vmatpush1.bf16.msra.mxu0 %v1050
    %2049 = vmatprep.subr.bf16.mxu0 %v1055
    %2050 = vmatpush1.bf16.msra.mxu0 %v1054
    %2051 = vmatprep.subr.bf16.mxu0 %v1059
    %2052 = vmatpush1.bf16.msra.mxu0 %v1058
    %2053 = vmatprep.subr.bf16.mxu0 %v1063
    %2054 = vmatpush1.bf16.msra.mxu0 %v1062
    %2055 = vmatprep.subr.bf16.mxu0 0
    %2056 = vmatpush1.bf16.msra.mxu0 0
    %2057 = vmatprep.subr.bf16.mxu0 0
    %2058 = vmatpush1.bf16.msra.mxu0 0
    %2059 = vmatprep.subr.bf16.mxu0 0
    %2060 = vmatpush1.bf16.msra.mxu0 0
    %2061 = vmatprep.subr.bf16.mxu0 0
    %2062 = vmatpush1.bf16.msra.mxu0 0
    %2063 = vmatprep.subr.bf16.mxu0 0
    %2064 = vmatpush1.bf16.msra.mxu0 0
    %2065 = vmatprep.subr.bf16.mxu0 0
    %2066 = vmatpush1.bf16.msra.mxu0 0
    %2067 = vmatprep.subr.bf16.mxu0 0
    %2068 = vmatpush1.bf16.msra.mxu0 0
    %2069 = vmatprep.subr.bf16.mxu0 0
    %2070 = vmatpush1.bf16.msra.mxu0 0
    %2071 = vmatprep.mubr.bf16.mxu0 0
    %2072 = vmatmul.mubr.bf16.gmra.mrb[0].mxu0 %v2038
    %v2073 = vpop.f32.mrb[0].mxu0
    %v2074 = vadd.f32 0.0, %v2073
    %v2075 = vpop.f32.mrb[0].mxu0
    %v2076 = vadd.f32 0.0, %v2075
    %v2077 = vpop.f32.mrb[0].mxu0
    %v2078 = vadd.f32 0.0, %v2077
    %v2079 = vpop.f32.mrb[0].mxu0
    %v2080 = vadd.f32 0.0, %v2079
    %2081 = vdwg.mxu0
    %2082 = vmatprep.subr.bf16.mxu0 %v1037
    %2083 = vmatpush1.bf16.msra.mxu0 %v1036
    %2084 = vmatprep.subr.bf16.mxu0 %v1041
    %2085 = vmatpush1.bf16.msra.mxu0 %v1040
    %2086 = vmatprep.subr.bf16.mxu0 %v1045
    %2087 = vmatpush1.bf16.msra.mxu0 %v1044
    %2088 = vmatprep.subr.bf16.mxu0 %v1049
    %2089 = vmatpush1.bf16.msra.mxu0 %v1048
    %2090 = vmatprep.subr.bf16.mxu0 %v1053
    %2091 = vmatpush1.bf16.msra.mxu0 %v1052
    %2092 = vmatprep.subr.bf16.mxu0 %v1057
    %2093 = vmatpush1.bf16.msra.mxu0 %v1056
    %2094 = vmatprep.subr.bf16.mxu0 %v1061
    %2095 = vmatpush1.bf16.msra.mxu0 %v1060
    %2096 = vmatprep.subr.bf16.mxu0 %v1065
    %2097 = vmatpush1.bf16.msra.mxu0 %v1064
    %2098 = vmatprep.subr.bf16.mxu0 0
    %2099 = vmatpush1.bf16.msra.mxu0 0
    %2100 = vmatprep.subr.bf16.mxu0 0
    %2101 = vmatpush1.bf16.msra.mxu0 0
    %2102 = vmatprep.subr.bf16.mxu0 0
    %2103 = vmatpush1.bf16.msra.mxu0 0
    %2104 = vmatprep.subr.bf16.mxu0 0
    %2105 = vmatpush1.bf16.msra.mxu0 0
    %2106 = vmatprep.subr.bf16.mxu0 0
    %2107 = vmatpush1.bf16.msra.mxu0 0
    %2108 = vmatprep.subr.bf16.mxu0 0
    %2109 = vmatpush1.bf16.msra.mxu0 0
    %2110 = vmatprep.subr.bf16.mxu0 0
    %2111 = vmatpush1.bf16.msra.mxu0 0
    %2112 = vmatprep.subr.bf16.mxu0 0
    %2113 = vmatpush1.bf16.msra.mxu0 0
    %2114 = vmatprep.mubr.bf16.mxu0 0
    %2115 = vmatmul.mubr.bf16.gmra.mrb[0].mxu0 %v2038
    %v2116 = vpop.f32.mrb[0].mxu0
    %v2117 = vadd.f32 0.0, %v2116
    %v2118 = vpop.f32.mrb[0].mxu0
    %v2119 = vadd.f32 0.0, %v2118
    %v2120 = vpop.f32.mrb[0].mxu0
    %v2121 = vadd.f32 0.0, %v2120
    %v2122 = vpop.f32.mrb[0].mxu0
    %v2123 = vadd.f32 0.0, %v2122
    %2124 = vdwg.mxu0
    %2125 = vmatprep.subr.bf16.mxu0 %v1281
    %2126 = vmatpush1.bf16.msra.mxu0 %v1280
    %2127 = vmatprep.subr.bf16.mxu0 %v1285
    %2128 = vmatpush1.bf16.msra.mxu0 %v1284
    %2129 = vmatprep.subr.bf16.mxu0 %v1289
    %2130 = vmatpush1.bf16.msra.mxu0 %v1288
    %2131 = vmatprep.subr.bf16.mxu0 %v1293
    %2132 = vmatpush1.bf16.msra.mxu0 %v1292
    %2133 = vmatprep.subr.bf16.mxu0 %v1297
    %2134 = vmatpush1.bf16.msra.mxu0 %v1296
    %2135 = vmatprep.subr.bf16.mxu0 %v1301
    %2136 = vmatpush1.bf16.msra.mxu0 %v1300
    %2137 = vmatprep.subr.bf16.mxu0 %v1305
    %2138 = vmatpush1.bf16.msra.mxu0 %v1304
    %2139 = vmatprep.subr.bf16.mxu0 %v1309
    %2140 = vmatpush1.bf16.msra.mxu0 %v1308
    %2141 = vmatprep.subr.bf16.mxu0 0
    %2142 = vmatpush1.bf16.msra.mxu0 0
    %2143 = vmatprep.subr.bf16.mxu0 0
    %2144 = vmatpush1.bf16.msra.mxu0 0
    %2145 = vmatprep.subr.bf16.mxu0 0
    %2146 = vmatpush1.bf16.msra.mxu0 0
    %2147 = vmatprep.subr.bf16.mxu0 0
    %2148 = vmatpush1.bf16.msra.mxu0 0
    %2149 = vmatprep.subr.bf16.mxu0 0
    %2150 = vmatpush1.bf16.msra.mxu0 0
    %2151 = vmatprep.subr.bf16.mxu0 0
    %2152 = vmatpush1.bf16.msra.mxu0 0
    %2153 = vmatprep.subr.bf16.mxu0 0
    %2154 = vmatpush1.bf16.msra.mxu0 0
    %2155 = vmatprep.subr.bf16.mxu0 0
    %2156 = vmatpush1.bf16.msra.mxu0 0
    %2157 = vmatprep.mubr.bf16.mxu0 0
    %2158 = vmatmul.mubr.bf16.gmra.mrb[0].mxu0 %v2037
    %v2159 = vpop.f32.mrb[0].mxu0
    %v2160 = vadd.f32 %v2074, %v2159
    %v2161 = vpop.f32.mrb[0].mxu0
    %v2162 = vadd.f32 %v2076, %v2161
    %v2163 = vpop.f32.mrb[0].mxu0
    %v2164 = vadd.f32 %v2078, %v2163
    %v2165 = vpop.f32.mrb[0].mxu0
    %v2166 = vadd.f32 %v2080, %v2165
    %2167 = vdwg.mxu0
    %2168 = vmatprep.subr.bf16.mxu0 %v1283
    %2169 = vmatpush1.bf16.msra.mxu0 %v1282
    %2170 = vmatprep.subr.bf16.mxu0 %v1287
    %2171 = vmatpush1.bf16.msra.mxu0 %v1286
    %2172 = vmatprep.subr.bf16.mxu0 %v1291
    %2173 = vmatpush1.bf16.msra.mxu0 %v1290
    %2174 = vmatprep.subr.bf16.mxu0 %v1295
    %2175 = vmatpush1.bf16.msra.mxu0 %v1294
    %2176 = vmatprep.subr.bf16.mxu0 %v1299
    %2177 = vmatpush1.bf16.msra.mxu0 %v1298
    %2178 = vmatprep.subr.bf16.mxu0 %v1303
    %2179 = vmatpush1.bf16.msra.mxu0 %v1302
    %2180 = vmatprep.subr.bf16.mxu0 %v1307
    %2181 = vmatpush1.bf16.msra.mxu0 %v1306
    %2182 = vmatprep.subr.bf16.mxu0 %v1311
    %2183 = vmatpush1.bf16.msra.mxu0 %v1310
    %2184 = vmatprep.subr.bf16.mxu0 0
    %2185 = vmatpush1.bf16.msra.mxu0 0
    %2186 = vmatprep.subr.bf16.mxu0 0
    %2187 = vmatpush1.bf16.msra.mxu0 0
    %2188 = vmatprep.subr.bf16.mxu0 0
    %2189 = vmatpush1.bf16.msra.mxu0 0
    %2190 = vmatprep.subr.bf16.mxu0 0
    %2191 = vmatpush1.bf16.msra.mxu0 0
    %2192 = vmatprep.subr.bf16.mxu0 0
    %2193 = vmatpush1.bf16.msra.mxu0 0
    %2194 = vmatprep.subr.bf16.mxu0 0
    %2195 = vmatpush1.bf16.msra.mxu0 0
    %2196 = vmatprep.subr.bf16.mxu0 0
    %2197 = vmatpush1.bf16.msra.mxu0 0
    %2198 = vmatprep.subr.bf16.mxu0 0
    %2199 = vmatpush1.bf16.msra.mxu0 0
    %2200 = vmatprep.mubr.bf16.mxu0 0
    %2201 = vmatmul.mubr.bf16.gmra.mrb[0].mxu0 %v2037
    %v2202 = vpop.f32.mrb[0].mxu0
    %v2203 = vadd.f32 %v2117, %v2202
    %v2204 = vpop.f32.mrb[0].mxu0
    %v2205 = vadd.f32 %v2119, %v2204
    %v2206 = vpop.f32.mrb[0].mxu0
    %v2207 = vadd.f32 %v2121, %v2206
    %v2208 = vpop.f32.mrb[0].mxu0
    %v2209 = vadd.f32 %v2123, %v2208
    %2210 = vdwg.mxu0
    %v2211 = vadd.f32 %v2160, %v1434
    %v2212 = vadd.f32 %v2162, %v1438
    %v2213 = vadd.f32 %v2203, %v1442
    %v2214 = vadd.f32 %v2205, %v1446
    %v2215 = vadd.f32 %v2164, %v1434
    %v2216 = vadd.f32 %v2166, %v1438
    %v2217 = vadd.f32 %v2207, %v1442
    %v2218 = vadd.f32 %v2209, %v1446
    %v2219 = vxor.u32 %v2211, 2147483648
    %v2220 = vxor.u32 %v2215, 2147483648
    %v2221 = vmul.f32 %v2219, 1.442695
    %v2222 = vpow.pop %v2221
    %v2223 = vmul.f32 %v2220, 1.442695
    %v2224 = vpow.pop %v2223
    %v2225 = vadd.f32 %v2222, 1.0
    %v2226 = vadd.f32 %v2224, 1.0
    %v2227 = vrcp.pop %v2225
    %v2228 = vmul.f32 1.0, %v2227
    %v2229 = vrcp.pop %v2226
    %v2230 = vmul.f32 1.0, %v2229
    %v2231 = vxor.u32 %v2212, 2147483648
    %v2232 = vxor.u32 %v2216, 2147483648
    %v2233 = vmul.f32 %v2231, 1.442695
    %v2234 = vpow.pop %v2233
    %v2235 = vmul.f32 %v2232, 1.442695
    %v2236 = vpow.pop %v2235
    %v2237 = vadd.f32 %v2234, 1.0
    %v2238 = vadd.f32 %v2236, 1.0
    %v2239 = vrcp.pop %v2237
    %v2240 = vmul.f32 1.0, %v2239
    %v2241 = vrcp.pop %v2238
    %v2242 = vmul.f32 1.0, %v2241
    %v2243 = vtanh.pop %v2213
    %v2244 = vtanh.pop %v2217
    %v2245 = vxor.u32 %v2214, 2147483648
    %v2246 = vxor.u32 %v2218, 2147483648
    %v2247 = vmul.f32 %v2245, 1.442695
    %v2248 = vpow.pop %v2247
    %v2249 = vmul.f32 %v2246, 1.442695
    %v2250 = vpow.pop %v2249
    %v2251 = vadd.f32 %v2248, 1.0
    %v2252 = vadd.f32 %v2250, 1.0
    %v2253 = vrcp.pop %v2251
    %v2254 = vmul.f32 1.0, %v2253
    %v2255 = vrcp.pop %v2252
    %v2256 = vmul.f32 1.0, %v2255
    %v2257 = vmul.f32 %v2240, %v1881
    %v2258 = vmul.f32 %v2242, %v1882
    %v2259 = vmul.f32 %v2228, %v2243
    %v2260 = vmul.f32 %v2230, %v2244
    %v2261 = vadd.f32 %v2257, %v2259
    %v2262 = vadd.f32 %v2258, %v2260
    %v2263 = vtanh.pop %v2261
    %v2264 = vtanh.pop %v2262
    %v2265 = vmul.f32 %v2254, %v2263
    %v2266 = vmul.f32 %v2256, %v2264
    %v2267 = vld [vmem:[#allocation2 + $0xc0] sm:$0xff]
    %v2268 = vld [vmem:[#allocation2 + $0xc8] sm:$0xff]
    %v2269 = vld [vmem:[#allocation2 + $0xd0] sm:$0xff]
    %v2270 = vld [vmem:[#allocation2 + $0xd8] sm:$0xff]
    %v2271 = vld [vmem:[#allocation2 + $0xe0] sm:$0xff]
    %v2272 = vld [vmem:[#allocation2 + $0xe8] sm:$0xff]
    %v2273 = vld [vmem:[#allocation2 + $0xf0] sm:$0xff]
    %v2274 = vld [vmem:[#allocation2 + $0xf8] sm:$0xff]
    %2275 = vmatprep.subr.bf16.mxu0 %v732
    %2276 = vmatpush1.bf16.msra.mxu0 %v731
    %2277 = vmatprep.subr.bf16.mxu0 %v736
    %2278 = vmatpush1.bf16.msra.mxu0 %v735
    %2279 = vmatprep.subr.bf16.mxu0 %v740
    %2280 = vmatpush1.bf16.msra.mxu0 %v739
    %2281 = vmatprep.subr.bf16.mxu0 %v744
    %2282 = vmatpush1.bf16.msra.mxu0 %v743
    %2283 = vmatprep.subr.bf16.mxu0 %v748
    %2284 = vmatpush1.bf16.msra.mxu0 %v747
    %2285 = vmatprep.subr.bf16.mxu0 %v752
    %2286 = vmatpush1.bf16.msra.mxu0 %v751
    %2287 = vmatprep.subr.bf16.mxu0 %v756
    %2288 = vmatpush1.bf16.msra.mxu0 %v755
    %2289 = vmatprep.subr.bf16.mxu0 %v760
    %2290 = vmatpush1.bf16.msra.mxu0 %v759
    %2291 = vmatprep.subr.bf16.mxu0 0
    %2292 = vmatpush1.bf16.msra.mxu0 0
    %2293 = vmatprep.subr.bf16.mxu0 0
    %2294 = vmatpush1.bf16.msra.mxu0 0
    %2295 = vmatprep.subr.bf16.mxu0 0
    %2296 = vmatpush1.bf16.msra.mxu0 0
    %2297 = vmatprep.subr.bf16.mxu0 0
    %2298 = vmatpush1.bf16.msra.mxu0 0
    %2299 = vmatprep.subr.bf16.mxu0 0
    %2300 = vmatpush1.bf16.msra.mxu0 0
    %2301 = vmatprep.subr.bf16.mxu0 0
    %2302 = vmatpush1.bf16.msra.mxu0 0
    %2303 = vmatprep.subr.bf16.mxu0 0
    %2304 = vmatpush1.bf16.msra.mxu0 0
    %2305 = vmatprep.subr.bf16.mxu0 0
    %2306 = vmatpush1.bf16.msra.mxu0 0
    %2307 = vmatprep.mubr.bf16.mxu0 0
    %2308 = vmatmul.mubr.bf16.gmra.mrb[0].mxu0 %v2037
    %v2309 = vpop.f32.mrb[0].mxu0
    %v2310 = vadd.f32 0.0, %v2309
    %v2311 = vpop.f32.mrb[0].mxu0
    %v2312 = vadd.f32 0.0, %v2311
    %v2313 = vpop.f32.mrb[0].mxu0
    %v2314 = vadd.f32 0.0, %v2313
    %v2315 = vpop.f32.mrb[0].mxu0
    %v2316 = vadd.f32 0.0, %v2315
    %2317 = vdwg.mxu0
    %2318 = vmatprep.subr.bf16.mxu0 %v734
    %2319 = vmatpush1.bf16.msra.mxu0 %v733
    %2320 = vmatprep.subr.bf16.mxu0 %v738
    %2321 = vmatpush1.bf16.msra.mxu0 %v737
    %2322 = vmatprep.subr.bf16.mxu0 %v742
    %2323 = vmatpush1.bf16.msra.mxu0 %v741
    %2324 = vmatprep.subr.bf16.mxu0 %v746
    %2325 = vmatpush1.bf16.msra.mxu0 %v745
    %2326 = vmatprep.subr.bf16.mxu0 %v750
    %2327 = vmatpush1.bf16.msra.mxu0 %v749
    %2328 = vmatprep.subr.bf16.mxu0 %v754
    %2329 = vmatpush1.bf16.msra.mxu0 %v753
    %2330 = vmatprep.subr.bf16.mxu0 %v758
    %2331 = vmatpush1.bf16.msra.mxu0 %v757
    %2332 = vmatprep.subr.bf16.mxu0 %v762
    %2333 = vmatpush1.bf16.msra.mxu0 %v761
    %2334 = vmatprep.subr.bf16.mxu0 0
    %2335 = vmatpush1.bf16.msra.mxu0 0
    %2336 = vmatprep.subr.bf16.mxu0 0
    %2337 = vmatpush1.bf16.msra.mxu0 0
    %2338 = vmatprep.subr.bf16.mxu0 0
    %2339 = vmatpush1.bf16.msra.mxu0 0
    %2340 = vmatprep.subr.bf16.mxu0 0
    %2341 = vmatpush1.bf16.msra.mxu0 0
    %2342 = vmatprep.subr.bf16.mxu0 0
    %2343 = vmatpush1.bf16.msra.mxu0 0
    %2344 = vmatprep.subr.bf16.mxu0 0
    %2345 = vmatpush1.bf16.msra.mxu0 0
    %2346 = vmatprep.subr.bf16.mxu0 0
    %2347 = vmatpush1.bf16.msra.mxu0 0
    %2348 = vmatprep.subr.bf16.mxu0 0
    %2349 = vmatpush1.bf16.msra.mxu0 0
    %2350 = vmatprep.mubr.bf16.mxu0 0
    %2351 = vmatmul.mubr.bf16.gmra.mrb[0].mxu0 %v2037
    %v2352 = vpop.f32.mrb[0].mxu0
    %v2353 = vadd.f32 0.0, %v2352
    %v2354 = vpop.f32.mrb[0].mxu0
    %v2355 = vadd.f32 0.0, %v2354
    %v2356 = vpop.f32.mrb[0].mxu0
    %v2357 = vadd.f32 0.0, %v2356
    %v2358 = vpop.f32.mrb[0].mxu0
    %v2359 = vadd.f32 0.0, %v2358
    %2360 = vdwg.mxu0
    %v2361 = vadd.f32 %v2267, %v2310
    %v2362 = vadd.f32 %v2268, %v2312
    %v2363 = vadd.f32 %v2269, %v2353
    %v2364 = vadd.f32 %v2270, %v2355
    %v2365 = vadd.f32 %v2271, %v2314
    %v2366 = vadd.f32 %v2272, %v2316
    %v2367 = vadd.f32 %v2273, %v2357
    %v2368 = vadd.f32 %v2274, %v2359
    %v2369 = vxor.u32 %v2361, 2147483648
    %v2370 = vxor.u32 %v2365, 2147483648
    %v2371 = vmul.f32 %v2369, 1.442695
    %v2372 = vpow.pop %v2371
    %v2373 = vmul.f32 %v2370, 1.442695
    %v2374 = vpow.pop %v2373
    %v2375 = vadd.f32 %v2372, 1.0
    %v2376 = vadd.f32 %v2374, 1.0
    %v2377 = vrcp.pop %v2375
    %v2378 = vmul.f32 1.0, %v2377
    %v2379 = vrcp.pop %v2376
    %v2380 = vmul.f32 1.0, %v2379
    %v2381 = vxor.u32 %v2362, 2147483648
    %v2382 = vxor.u32 %v2366, 2147483648
    %v2383 = vmul.f32 %v2381, 1.442695
    %v2384 = vpow.pop %v2383
    %v2385 = vmul.f32 %v2382, 1.442695
    %v2386 = vpow.pop %v2385
    %v2387 = vadd.f32 %v2384, 1.0
    %v2388 = vadd.f32 %v2386, 1.0
    %v2389 = vrcp.pop %v2387
    %v2390 = vmul.f32 1.0, %v2389
    %v2391 = vrcp.pop %v2388
    %v2392 = vmul.f32 1.0, %v2391
    %v2393 = vtanh.pop %v2363
    %v2394 = vtanh.pop %v2367
    %v2395 = vxor.u32 %v2364, 2147483648
    %v2396 = vxor.u32 %v2368, 2147483648
    %v2397 = vmul.f32 %v2395, 1.442695
    %v2398 = vpow.pop %v2397
    %v2399 = vmul.f32 %v2396, 1.442695
    %v2400 = vpow.pop %v2399
    %v2401 = vadd.f32 %v2398, 1.0
    %v2402 = vadd.f32 %v2400, 1.0
    %v2403 = vrcp.pop %v2401
    %v2404 = vmul.f32 1.0, %v2403
    %v2405 = vrcp.pop %v2402
    %v2406 = vmul.f32 1.0, %v2405
    %v2407 = vmul.f32 %v2390, %v2031
    %v2408 = vmul.f32 %v2392, %v2032
    %v2409 = vmul.f32 %v2378, %v2393
    %v2410 = vmul.f32 %v2380, %v2394
    %v2411 = vadd.f32 %v2407, %v2409
    %v2412 = vadd.f32 %v2408, %v2410
    %v2413 = vtanh.pop %v2411
    %v2414 = vtanh.pop %v2412
    %v2415 = vmul.f32 %v2404, %v2413
    %v2416 = vmul.f32 %v2406, %v2414
    %v2417 = vpack.c.bf16 %v2416, %v2415
    %v2418 = vpack.c.bf16 %v2266, %v2265
    %2419 = vmatprep.subr.bf16.mxu0 %v1035
    %2420 = vmatpush1.bf16.msra.mxu0 %v1034
    %2421 = vmatprep.subr.bf16.mxu0 %v1039
    %2422 = vmatpush1.bf16.msra.mxu0 %v1038
    %2423 = vmatprep.subr.bf16.mxu0 %v1043
    %2424 = vmatpush1.bf16.msra.mxu0 %v1042
    %2425 = vmatprep.subr.bf16.mxu0 %v1047
    %2426 = vmatpush1.bf16.msra.mxu0 %v1046
    %2427 = vmatprep.subr.bf16.mxu0 %v1051
    %2428 = vmatpush1.bf16.msra.mxu0 %v1050
    %2429 = vmatprep.subr.bf16.mxu0 %v1055
    %2430 = vmatpush1.bf16.msra.mxu0 %v1054
    %2431 = vmatprep.subr.bf16.mxu0 %v1059
    %2432 = vmatpush1.bf16.msra.mxu0 %v1058
    %2433 = vmatprep.subr.bf16.mxu0 %v1063
    %2434 = vmatpush1.bf16.msra.mxu0 %v1062
    %2435 = vmatprep.subr.bf16.mxu0 0
    %2436 = vmatpush1.bf16.msra.mxu0 0
    %2437 = vmatprep.subr.bf16.mxu0 0
    %2438 = vmatpush1.bf16.msra.mxu0 0
    %2439 = vmatprep.subr.bf16.mxu0 0
    %2440 = vmatpush1.bf16.msra.mxu0 0
    %2441 = vmatprep.subr.bf16.mxu0 0
    %2442 = vmatpush1.bf16.msra.mxu0 0
    %2443 = vmatprep.subr.bf16.mxu0 0
    %2444 = vmatpush1.bf16.msra.mxu0 0
    %2445 = vmatprep.subr.bf16.mxu0 0
    %2446 = vmatpush1.bf16.msra.mxu0 0
    %2447 = vmatprep.subr.bf16.mxu0 0
    %2448 = vmatpush1.bf16.msra.mxu0 0
    %2449 = vmatprep.subr.bf16.mxu0 0
    %2450 = vmatpush1.bf16.msra.mxu0 0
    %2451 = vmatprep.mubr.bf16.mxu0 0
    %2452 = vmatmul.mubr.bf16.gmra.mrb[0].mxu0 %v2418
    %v2453 = vpop.f32.mrb[0].mxu0
    %v2454 = vadd.f32 0.0, %v2453
    %v2455 = vpop.f32.mrb[0].mxu0
    %v2456 = vadd.f32 0.0, %v2455
    %v2457 = vpop.f32.mrb[0].mxu0
    %v2458 = vadd.f32 0.0, %v2457
    %v2459 = vpop.f32.mrb[0].mxu0
    %v2460 = vadd.f32 0.0, %v2459
    %2461 = vdwg.mxu0
    %2462 = vmatprep.subr.bf16.mxu0 %v1037
    %2463 = vmatpush1.bf16.msra.mxu0 %v1036
    %2464 = vmatprep.subr.bf16.mxu0 %v1041
    %2465 = vmatpush1.bf16.msra.mxu0 %v1040
    %2466 = vmatprep.subr.bf16.mxu0 %v1045
    %2467 = vmatpush1.bf16.msra.mxu0 %v1044
    %2468 = vmatprep.subr.bf16.mxu0 %v1049
    %2469 = vmatpush1.bf16.msra.mxu0 %v1048
    %2470 = vmatprep.subr.bf16.mxu0 %v1053
    %2471 = vmatpush1.bf16.msra.mxu0 %v1052
    %2472 = vmatprep.subr.bf16.mxu0 %v1057
    %2473 = vmatpush1.bf16.msra.mxu0 %v1056
    %2474 = vmatprep.subr.bf16.mxu0 %v1061
    %2475 = vmatpush1.bf16.msra.mxu0 %v1060
    %2476 = vmatprep.subr.bf16.mxu0 %v1065
    %2477 = vmatpush1.bf16.msra.mxu0 %v1064
    %2478 = vmatprep.subr.bf16.mxu0 0
    %2479 = vmatpush1.bf16.msra.mxu0 0
    %2480 = vmatprep.subr.bf16.mxu0 0
    %2481 = vmatpush1.bf16.msra.mxu0 0
    %2482 = vmatprep.subr.bf16.mxu0 0
    %2483 = vmatpush1.bf16.msra.mxu0 0
    %2484 = vmatprep.subr.bf16.mxu0 0
    %2485 = vmatpush1.bf16.msra.mxu0 0
    %2486 = vmatprep.subr.bf16.mxu0 0
    %2487 = vmatpush1.bf16.msra.mxu0 0
    %2488 = vmatprep.subr.bf16.mxu0 0
    %2489 = vmatpush1.bf16.msra.mxu0 0
    %2490 = vmatprep.subr.bf16.mxu0 0
    %2491 = vmatpush1.bf16.msra.mxu0 0
    %2492 = vmatprep.subr.bf16.mxu0 0
    %2493 = vmatpush1.bf16.msra.mxu0 0
    %2494 = vmatprep.mubr.bf16.mxu0 0
    %2495 = vmatmul.mubr.bf16.gmra.mrb[0].mxu0 %v2418
    %v2496 = vpop.f32.mrb[0].mxu0
    %v2497 = vadd.f32 0.0, %v2496
    %v2498 = vpop.f32.mrb[0].mxu0
    %v2499 = vadd.f32 0.0, %v2498
    %v2500 = vpop.f32.mrb[0].mxu0
    %v2501 = vadd.f32 0.0, %v2500
    %v2502 = vpop.f32.mrb[0].mxu0
    %v2503 = vadd.f32 0.0, %v2502
    %2504 = vdwg.mxu0
    %2505 = vmatprep.subr.bf16.mxu0 %v1281
    %2506 = vmatpush1.bf16.msra.mxu0 %v1280
    %2507 = vmatprep.subr.bf16.mxu0 %v1285
    %2508 = vmatpush1.bf16.msra.mxu0 %v1284
    %2509 = vmatprep.subr.bf16.mxu0 %v1289
    %2510 = vmatpush1.bf16.msra.mxu0 %v1288
    %2511 = vmatprep.subr.bf16.mxu0 %v1293
    %2512 = vmatpush1.bf16.msra.mxu0 %v1292
    %2513 = vmatprep.subr.bf16.mxu0 %v1297
    %2514 = vmatpush1.bf16.msra.mxu0 %v1296
    %2515 = vmatprep.subr.bf16.mxu0 %v1301
    %2516 = vmatpush1.bf16.msra.mxu0 %v1300
    %2517 = vmatprep.subr.bf16.mxu0 %v1305
    %2518 = vmatpush1.bf16.msra.mxu0 %v1304
    %2519 = vmatprep.subr.bf16.mxu0 %v1309
    %2520 = vmatpush1.bf16.msra.mxu0 %v1308
    %2521 = vmatprep.subr.bf16.mxu0 0
    %2522 = vmatpush1.bf16.msra.mxu0 0
    %2523 = vmatprep.subr.bf16.mxu0 0
    %2524 = vmatpush1.bf16.msra.mxu0 0
    %2525 = vmatprep.subr.bf16.mxu0 0
    %2526 = vmatpush1.bf16.msra.mxu0 0
    %2527 = vmatprep.subr.bf16.mxu0 0
    %2528 = vmatpush1.bf16.msra.mxu0 0
    %2529 = vmatprep.subr.bf16.mxu0 0
    %2530 = vmatpush1.bf16.msra.mxu0 0
    %2531 = vmatprep.subr.bf16.mxu0 0
    %2532 = vmatpush1.bf16.msra.mxu0 0
    %2533 = vmatprep.subr.bf16.mxu0 0
    %2534 = vmatpush1.bf16.msra.mxu0 0
    %2535 = vmatprep.subr.bf16.mxu0 0
    %2536 = vmatpush1.bf16.msra.mxu0 0
    %2537 = vmatprep.mubr.bf16.mxu0 0
    %2538 = vmatmul.mubr.bf16.gmra.mrb[0].mxu0 %v2417
    %v2539 = vpop.f32.mrb[0].mxu0
    %v2540 = vadd.f32 %v2454, %v2539
    %v2541 = vpop.f32.mrb[0].mxu0
    %v2542 = vadd.f32 %v2456, %v2541
    %v2543 = vpop.f32.mrb[0].mxu0
    %v2544 = vadd.f32 %v2458, %v2543
    %v2545 = vpop.f32.mrb[0].mxu0
    %v2546 = vadd.f32 %v2460, %v2545
    %2547 = vdwg.mxu0
    %2548 = vmatprep.subr.bf16.mxu0 %v1283
    %2549 = vmatpush1.bf16.msra.mxu0 %v1282
    %2550 = vmatprep.subr.bf16.mxu0 %v1287
    %2551 = vmatpush1.bf16.msra.mxu0 %v1286
    %2552 = vmatprep.subr.bf16.mxu0 %v1291
    %2553 = vmatpush1.bf16.msra.mxu0 %v1290
    %2554 = vmatprep.subr.bf16.mxu0 %v1295
    %2555 = vmatpush1.bf16.msra.mxu0 %v1294
    %2556 = vmatprep.subr.bf16.mxu0 %v1299
    %2557 = vmatpush1.bf16.msra.mxu0 %v1298
    %2558 = vmatprep.subr.bf16.mxu0 %v1303
    %2559 = vmatpush1.bf16.msra.mxu0 %v1302
    %2560 = vmatprep.subr.bf16.mxu0 %v1307
    %2561 = vmatpush1.bf16.msra.mxu0 %v1306
    %2562 = vmatprep.subr.bf16.mxu0 %v1311
    %2563 = vmatpush1.bf16.msra.mxu0 %v1310
    %2564 = vmatprep.subr.bf16.mxu0 0
    %2565 = vmatpush1.bf16.msra.mxu0 0
    %2566 = vmatprep.subr.bf16.mxu0 0
    %2567 = vmatpush1.bf16.msra.mxu0 0
    %2568 = vmatprep.subr.bf16.mxu0 0
    %2569 = vmatpush1.bf16.msra.mxu0 0
    %2570 = vmatprep.subr.bf16.mxu0 0
    %2571 = vmatpush1.bf16.msra.mxu0 0
    %2572 = vmatprep.subr.bf16.mxu0 0
    %2573 = vmatpush1.bf16.msra.mxu0 0
    %2574 = vmatprep.subr.bf16.mxu0 0
    %2575 = vmatpush1.bf16.msra.mxu0 0
    %2576 = vmatprep.subr.bf16.mxu0 0
    %2577 = vmatpush1.bf16.msra.mxu0 0
    %2578 = vmatprep.subr.bf16.mxu0 0
    %2579 = vmatpush1.bf16.msra.mxu0 0
    %2580 = vmatprep.mubr.bf16.mxu0 0
    %2581 = vmatmul.mubr.bf16.gmra.mrb[0].mxu0 %v2417
    %v2582 = vpop.f32.mrb[0].mxu0
    %v2583 = vadd.f32 %v2497, %v2582
    %v2584 = vpop.f32.mrb[0].mxu0
    %v2585 = vadd.f32 %v2499, %v2584
    %v2586 = vpop.f32.mrb[0].mxu0
    %v2587 = vadd.f32 %v2501, %v2586
    %v2588 = vpop.f32.mrb[0].mxu0
    %v2589 = vadd.f32 %v2503, %v2588
    %2590 = vdwg.mxu0
    %v2591 = vadd.f32 %v2540, %v1434
    %v2592 = vadd.f32 %v2542, %v1438
    %v2593 = vadd.f32 %v2583, %v1442
    %v2594 = vadd.f32 %v2585, %v1446
    %v2595 = vadd.f32 %v2544, %v1434
    %v2596 = vadd.f32 %v2546, %v1438
    %v2597 = vadd.f32 %v2587, %v1442
    %v2598 = vadd.f32 %v2589, %v1446
    %v2599 = vxor.u32 %v2591, 2147483648
    %v2600 = vxor.u32 %v2595, 2147483648
    %v2601 = vmul.f32 %v2599, 1.442695
    %v2602 = vpow.pop %v2601
    %v2603 = vmul.f32 %v2600, 1.442695
    %v2604 = vpow.pop %v2603
    %v2605 = vadd.f32 %v2602, 1.0
    %v2606 = vadd.f32 %v2604, 1.0
    %v2607 = vrcp.pop %v2605
    %v2608 = vmul.f32 1.0, %v2607
    %v2609 = vrcp.pop %v2606
    %v2610 = vmul.f32 1.0, %v2609
    %v2611 = vxor.u32 %v2592, 2147483648
    %v2612 = vxor.u32 %v2596, 2147483648
    %v2613 = vmul.f32 %v2611, 1.442695
    %v2614 = vpow.pop %v2613
    %v2615 = vmul.f32 %v2612, 1.442695
    %v2616 = vpow.pop %v2615
    %v2617 = vadd.f32 %v2614, 1.0
    %v2618 = vadd.f32 %v2616, 1.0
    %v2619 = vrcp.pop %v2617
    %v2620 = vmul.f32 1.0, %v2619
    %v2621 = vrcp.pop %v2618
    %v2622 = vmul.f32 1.0, %v2621
    %v2623 = vtanh.pop %v2593
    %v2624 = vtanh.pop %v2597
    %v2625 = vxor.u32 %v2594, 2147483648
    %v2626 = vxor.u32 %v2598, 2147483648
    %v2627 = vmul.f32 %v2625, 1.442695
    %v2628 = vpow.pop %v2627
    %v2629 = vmul.f32 %v2626, 1.442695
    %v2630 = vpow.pop %v2629
    %v2631 = vadd.f32 %v2628, 1.0
    %v2632 = vadd.f32 %v2630, 1.0
    %v2633 = vrcp.pop %v2631
    %v2634 = vmul.f32 1.0, %v2633
    %v2635 = vrcp.pop %v2632
    %v2636 = vmul.f32 1.0, %v2635
    %v2637 = vmul.f32 %v2620, %v2261
    %v2638 = vmul.f32 %v2622, %v2262
    %v2639 = vmul.f32 %v2608, %v2623
    %v2640 = vmul.f32 %v2610, %v2624
    %v2641 = vadd.f32 %v2637, %v2639
    %v2642 = vadd.f32 %v2638, %v2640
    %v2643 = vtanh.pop %v2641
    %v2644 = vtanh.pop %v2642
    %v2645 = vmul.f32 %v2634, %v2643
    %v2646 = vmul.f32 %v2636, %v2644
    %v2647 = vld [vmem:[#allocation2 + $0x100] sm:$0xff]
    %v2648 = vld [vmem:[#allocation2 + $0x108] sm:$0xff]
    %v2649 = vld [vmem:[#allocation2 + $0x110] sm:$0xff]
    %v2650 = vld [vmem:[#allocation2 + $0x118] sm:$0xff]
    %v2651 = vld [vmem:[#allocation2 + $0x120] sm:$0xff]
    %v2652 = vld [vmem:[#allocation2 + $0x128] sm:$0xff]
    %v2653 = vld [vmem:[#allocation2 + $0x130] sm:$0xff]
    %v2654 = vld [vmem:[#allocation2 + $0x138] sm:$0xff]
    %2655 = vmatprep.subr.bf16.mxu0 %v732
    %2656 = vmatpush1.bf16.msra.mxu0 %v731
    %2657 = vmatprep.subr.bf16.mxu0 %v736
    %2658 = vmatpush1.bf16.msra.mxu0 %v735
    %2659 = vmatprep.subr.bf16.mxu0 %v740
    %2660 = vmatpush1.bf16.msra.mxu0 %v739
    %2661 = vmatprep.subr.bf16.mxu0 %v744
    %2662 = vmatpush1.bf16.msra.mxu0 %v743
    %2663 = vmatprep.subr.bf16.mxu0 %v748
    %2664 = vmatpush1.bf16.msra.mxu0 %v747
    %2665 = vmatprep.subr.bf16.mxu0 %v752
    %2666 = vmatpush1.bf16.msra.mxu0 %v751
    %2667 = vmatprep.subr.bf16.mxu0 %v756
    %2668 = vmatpush1.bf16.msra.mxu0 %v755
    %2669 = vmatprep.subr.bf16.mxu0 %v760
    %2670 = vmatpush1.bf16.msra.mxu0 %v759
    %2671 = vmatprep.subr.bf16.mxu0 0
    %2672 = vmatpush1.bf16.msra.mxu0 0
    %2673 = vmatprep.subr.bf16.mxu0 0
    %2674 = vmatpush1.bf16.msra.mxu0 0
    %2675 = vmatprep.subr.bf16.mxu0 0
    %2676 = vmatpush1.bf16.msra.mxu0 0
    %2677 = vmatprep.subr.bf16.mxu0 0
    %2678 = vmatpush1.bf16.msra.mxu0 0
    %2679 = vmatprep.subr.bf16.mxu0 0
    %2680 = vmatpush1.bf16.msra.mxu0 0
    %2681 = vmatprep.subr.bf16.mxu0 0
    %2682 = vmatpush1.bf16.msra.mxu0 0
    %2683 = vmatprep.subr.bf16.mxu0 0
    %2684 = vmatpush1.bf16.msra.mxu0 0
    %2685 = vmatprep.subr.bf16.mxu0 0
    %2686 = vmatpush1.bf16.msra.mxu0 0
    %2687 = vmatprep.mubr.bf16.mxu0 0
    %2688 = vmatmul.mubr.bf16.gmra.mrb[0].mxu0 %v2417
    %v2689 = vpop.f32.mrb[0].mxu0
    %v2690 = vadd.f32 0.0, %v2689
    %v2691 = vpop.f32.mrb[0].mxu0
    %v2692 = vadd.f32 0.0, %v2691
    %v2693 = vpop.f32.mrb[0].mxu0
    %v2694 = vadd.f32 0.0, %v2693
    %v2695 = vpop.f32.mrb[0].mxu0
    %v2696 = vadd.f32 0.0, %v2695
    %2697 = vdwg.mxu0
    %2698 = vmatprep.subr.bf16.mxu0 %v734
    %2699 = vmatpush1.bf16.msra.mxu0 %v733
    %2700 = vmatprep.subr.bf16.mxu0 %v738
    %2701 = vmatpush1.bf16.msra.mxu0 %v737
    %2702 = vmatprep.subr.bf16.mxu0 %v742
    %2703 = vmatpush1.bf16.msra.mxu0 %v741
    %2704 = vmatprep.subr.bf16.mxu0 %v746
    %2705 = vmatpush1.bf16.msra.mxu0 %v745
    %2706 = vmatprep.subr.bf16.mxu0 %v750
    %2707 = vmatpush1.bf16.msra.mxu0 %v749
    %2708 = vmatprep.subr.bf16.mxu0 %v754
    %2709 = vmatpush1.bf16.msra.mxu0 %v753
    %2710 = vmatprep.subr.bf16.mxu0 %v758
    %2711 = vmatpush1.bf16.msra.mxu0 %v757
    %2712 = vmatprep.subr.bf16.mxu0 %v762
    %2713 = vmatpush1.bf16.msra.mxu0 %v761
    %2714 = vmatprep.subr.bf16.mxu0 0
    %2715 = vmatpush1.bf16.msra.mxu0 0
    %2716 = vmatprep.subr.bf16.mxu0 0
    %2717 = vmatpush1.bf16.msra.mxu0 0
    %2718 = vmatprep.subr.bf16.mxu0 0
    %2719 = vmatpush1.bf16.msra.mxu0 0
    %2720 = vmatprep.subr.bf16.mxu0 0
    %2721 = vmatpush1.bf16.msra.mxu0 0
    %2722 = vmatprep.subr.bf16.mxu0 0
    %2723 = vmatpush1.bf16.msra.mxu0 0
    %2724 = vmatprep.subr.bf16.mxu0 0
    %2725 = vmatpush1.bf16.msra.mxu0 0
    %2726 = vmatprep.subr.bf16.mxu0 0
    %2727 = vmatpush1.bf16.msra.mxu0 0
    %2728 = vmatprep.subr.bf16.mxu0 0
    %2729 = vmatpush1.bf16.msra.mxu0 0
    %2730 = vmatprep.mubr.bf16.mxu0 0
    %2731 = vmatmul.mubr.bf16.gmra.mrb[0].mxu0 %v2417
    %v2732 = vpop.f32.mrb[0].mxu0
    %v2733 = vadd.f32 0.0, %v2732
    %v2734 = vpop.f32.mrb[0].mxu0
    %v2735 = vadd.f32 0.0, %v2734
    %v2736 = vpop.f32.mrb[0].mxu0
    %v2737 = vadd.f32 0.0, %v2736
    %v2738 = vpop.f32.mrb[0].mxu0
    %v2739 = vadd.f32 0.0, %v2738
    %2740 = vdwg.mxu0
    %v2741 = vadd.f32 %v2647, %v2690
    %v2742 = vadd.f32 %v2648, %v2692
    %v2743 = vadd.f32 %v2649, %v2733
    %v2744 = vadd.f32 %v2650, %v2735
    %v2745 = vadd.f32 %v2651, %v2694
    %v2746 = vadd.f32 %v2652, %v2696
    %v2747 = vadd.f32 %v2653, %v2737
    %v2748 = vadd.f32 %v2654, %v2739
    %v2749 = vxor.u32 %v2741, 2147483648
    %v2750 = vxor.u32 %v2745, 2147483648
    %v2751 = vmul.f32 %v2749, 1.442695
    %v2752 = vpow.pop %v2751
    %v2753 = vmul.f32 %v2750, 1.442695
    %v2754 = vpow.pop %v2753
    %v2755 = vadd.f32 %v2752, 1.0
    %v2756 = vadd.f32 %v2754, 1.0
    %v2757 = vrcp.pop %v2755
    %v2758 = vmul.f32 1.0, %v2757
    %v2759 = vrcp.pop %v2756
    %v2760 = vmul.f32 1.0, %v2759
    %v2761 = vxor.u32 %v2742, 2147483648
    %v2762 = vxor.u32 %v2746, 2147483648
    %v2763 = vmul.f32 %v2761, 1.442695
    %v2764 = vpow.pop %v2763
    %v2765 = vmul.f32 %v2762, 1.442695
    %v2766 = vpow.pop %v2765
    %v2767 = vadd.f32 %v2764, 1.0
    %v2768 = vadd.f32 %v2766, 1.0
    %v2769 = vrcp.pop %v2767
    %v2770 = vmul.f32 1.0, %v2769
    %v2771 = vrcp.pop %v2768
    %v2772 = vmul.f32 1.0, %v2771
    %v2773 = vtanh.pop %v2743
    %v2774 = vtanh.pop %v2747
    %v2775 = vxor.u32 %v2744, 2147483648
    %v2776 = vxor.u32 %v2748, 2147483648
    %v2777 = vmul.f32 %v2775, 1.442695
    %v2778 = vpow.pop %v2777
    %v2779 = vmul.f32 %v2776, 1.442695
    %v2780 = vpow.pop %v2779
    %v2781 = vadd.f32 %v2778, 1.0
    %v2782 = vadd.f32 %v2780, 1.0
    %v2783 = vrcp.pop %v2781
    %v2784 = vmul.f32 1.0, %v2783
    %v2785 = vrcp.pop %v2782
    %v2786 = vmul.f32 1.0, %v2785
    %v2787 = vmul.f32 %v2770, %v2411
    %v2788 = vmul.f32 %v2772, %v2412
    %v2789 = vmul.f32 %v2758, %v2773
    %v2790 = vmul.f32 %v2760, %v2774
    %v2791 = vadd.f32 %v2787, %v2789
    %v2792 = vadd.f32 %v2788, %v2790
    %v2793 = vtanh.pop %v2791
    %v2794 = vtanh.pop %v2792
    %v2795 = vmul.f32 %v2784, %v2793
    %v2796 = vmul.f32 %v2786, %v2794
    %v2797 = vpack.c.bf16 %v2796, %v2795
    %v2798 = vpack.c.bf16 %v2646, %v2645
    %2799 = vmatprep.subr.bf16.mxu0 %v1035
    %2800 = vmatpush1.bf16.msra.mxu0 %v1034
    %2801 = vmatprep.subr.bf16.mxu0 %v1039
    %2802 = vmatpush1.bf16.msra.mxu0 %v1038
    %2803 = vmatprep.subr.bf16.mxu0 %v1043
    %2804 = vmatpush1.bf16.msra.mxu0 %v1042
    %2805 = vmatprep.subr.bf16.mxu0 %v1047
    %2806 = vmatpush1.bf16.msra.mxu0 %v1046
    %2807 = vmatprep.subr.bf16.mxu0 %v1051
    %2808 = vmatpush1.bf16.msra.mxu0 %v1050
    %2809 = vmatprep.subr.bf16.mxu0 %v1055
    %2810 = vmatpush1.bf16.msra.mxu0 %v1054
    %2811 = vmatprep.subr.bf16.mxu0 %v1059
    %2812 = vmatpush1.bf16.msra.mxu0 %v1058
    %2813 = vmatprep.subr.bf16.mxu0 %v1063
    %2814 = vmatpush1.bf16.msra.mxu0 %v1062
    %2815 = vmatprep.subr.bf16.mxu0 0
    %2816 = vmatpush1.bf16.msra.mxu0 0
    %2817 = vmatprep.subr.bf16.mxu0 0
    %2818 = vmatpush1.bf16.msra.mxu0 0
    %2819 = vmatprep.subr.bf16.mxu0 0
    %2820 = vmatpush1.bf16.msra.mxu0 0
    %2821 = vmatprep.subr.bf16.mxu0 0
    %2822 = vmatpush1.bf16.msra.mxu0 0
    %2823 = vmatprep.subr.bf16.mxu0 0
    %2824 = vmatpush1.bf16.msra.mxu0 0
    %2825 = vmatprep.subr.bf16.mxu0 0
    %2826 = vmatpush1.bf16.msra.mxu0 0
    %2827 = vmatprep.subr.bf16.mxu0 0
    %2828 = vmatpush1.bf16.msra.mxu0 0
    %2829 = vmatprep.subr.bf16.mxu0 0
    %2830 = vmatpush1.bf16.msra.mxu0 0
    %2831 = vmatprep.mubr.bf16.mxu0 0
    %2832 = vmatmul.mubr.bf16.gmra.mrb[0].mxu0 %v2798
    %v2833 = vpop.f32.mrb[0].mxu0
    %v2834 = vadd.f32 0.0, %v2833
    %v2835 = vpop.f32.mrb[0].mxu0
    %v2836 = vadd.f32 0.0, %v2835
    %v2837 = vpop.f32.mrb[0].mxu0
    %v2838 = vadd.f32 0.0, %v2837
    %v2839 = vpop.f32.mrb[0].mxu0
    %v2840 = vadd.f32 0.0, %v2839
    %2841 = vdwg.mxu0
    %2842 = vmatprep.subr.bf16.mxu0 %v1037
    %2843 = vmatpush1.bf16.msra.mxu0 %v1036
    %2844 = vmatprep.subr.bf16.mxu0 %v1041
    %2845 = vmatpush1.bf16.msra.mxu0 %v1040
    %2846 = vmatprep.subr.bf16.mxu0 %v1045
    %2847 = vmatpush1.bf16.msra.mxu0 %v1044
    %2848 = vmatprep.subr.bf16.mxu0 %v1049
    %2849 = vmatpush1.bf16.msra.mxu0 %v1048
    %2850 = vmatprep.subr.bf16.mxu0 %v1053
    %2851 = vmatpush1.bf16.msra.mxu0 %v1052
    %2852 = vmatprep.subr.bf16.mxu0 %v1057
    %2853 = vmatpush1.bf16.msra.mxu0 %v1056
    %2854 = vmatprep.subr.bf16.mxu0 %v1061
    %2855 = vmatpush1.bf16.msra.mxu0 %v1060
    %2856 = vmatprep.subr.bf16.mxu0 %v1065
    %2857 = vmatpush1.bf16.msra.mxu0 %v1064
    %2858 = vmatprep.subr.bf16.mxu0 0
    %2859 = vmatpush1.bf16.msra.mxu0 0
    %2860 = vmatprep.subr.bf16.mxu0 0
    %2861 = vmatpush1.bf16.msra.mxu0 0
    %2862 = vmatprep.subr.bf16.mxu0 0
    %2863 = vmatpush1.bf16.msra.mxu0 0
    %2864 = vmatprep.subr.bf16.mxu0 0
    %2865 = vmatpush1.bf16.msra.mxu0 0
    %2866 = vmatprep.subr.bf16.mxu0 0
    %2867 = vmatpush1.bf16.msra.mxu0 0
    %2868 = vmatprep.subr.bf16.mxu0 0
    %2869 = vmatpush1.bf16.msra.mxu0 0
    %2870 = vmatprep.subr.bf16.mxu0 0
    %2871 = vmatpush1.bf16.msra.mxu0 0
    %2872 = vmatprep.subr.bf16.mxu0 0
    %2873 = vmatpush1.bf16.msra.mxu0 0
    %2874 = vmatprep.mubr.bf16.mxu0 0
    %2875 = vmatmul.mubr.bf16.gmra.mrb[0].mxu0 %v2798
    %v2876 = vpop.f32.mrb[0].mxu0
    %v2877 = vadd.f32 0.0, %v2876
    %v2878 = vpop.f32.mrb[0].mxu0
    %v2879 = vadd.f32 0.0, %v2878
    %v2880 = vpop.f32.mrb[0].mxu0
    %v2881 = vadd.f32 0.0, %v2880
    %v2882 = vpop.f32.mrb[0].mxu0
    %v2883 = vadd.f32 0.0, %v2882
    %2884 = vdwg.mxu0
    %2885 = vmatprep.subr.bf16.mxu0 %v1281
    %2886 = vmatpush1.bf16.msra.mxu0 %v1280
    %2887 = vmatprep.subr.bf16.mxu0 %v1285
    %2888 = vmatpush1.bf16.msra.mxu0 %v1284
    %2889 = vmatprep.subr.bf16.mxu0 %v1289
    %2890 = vmatpush1.bf16.msra.mxu0 %v1288
    %2891 = vmatprep.subr.bf16.mxu0 %v1293
    %2892 = vmatpush1.bf16.msra.mxu0 %v1292
    %2893 = vmatprep.subr.bf16.mxu0 %v1297
    %2894 = vmatpush1.bf16.msra.mxu0 %v1296
    %2895 = vmatprep.subr.bf16.mxu0 %v1301
    %2896 = vmatpush1.bf16.msra.mxu0 %v1300
    %2897 = vmatprep.subr.bf16.mxu0 %v1305
    %2898 = vmatpush1.bf16.msra.mxu0 %v1304
    %2899 = vmatprep.subr.bf16.mxu0 %v1309
    %2900 = vmatpush1.bf16.msra.mxu0 %v1308
    %2901 = vmatprep.subr.bf16.mxu0 0
    %2902 = vmatpush1.bf16.msra.mxu0 0
    %2903 = vmatprep.subr.bf16.mxu0 0
    %2904 = vmatpush1.bf16.msra.mxu0 0
    %2905 = vmatprep.subr.bf16.mxu0 0
    %2906 = vmatpush1.bf16.msra.mxu0 0
    %2907 = vmatprep.subr.bf16.mxu0 0
    %2908 = vmatpush1.bf16.msra.mxu0 0
    %2909 = vmatprep.subr.bf16.mxu0 0
    %2910 = vmatpush1.bf16.msra.mxu0 0
    %2911 = vmatprep.subr.bf16.mxu0 0
    %2912 = vmatpush1.bf16.msra.mxu0 0
    %2913 = vmatprep.subr.bf16.mxu0 0
    %2914 = vmatpush1.bf16.msra.mxu0 0
    %2915 = vmatprep.subr.bf16.mxu0 0
    %2916 = vmatpush1.bf16.msra.mxu0 0
    %2917 = vmatprep.mubr.bf16.mxu0 0
    %2918 = vmatmul.mubr.bf16.gmra.mrb[0].mxu0 %v2797
    %v2919 = vpop.f32.mrb[0].mxu0
    %v2920 = vadd.f32 %v2834, %v2919
    %v2921 = vpop.f32.mrb[0].mxu0
    %v2922 = vadd.f32 %v2836, %v2921
    %v2923 = vpop.f32.mrb[0].mxu0
    %v2924 = vadd.f32 %v2838, %v2923
    %v2925 = vpop.f32.mrb[0].mxu0
    %v2926 = vadd.f32 %v2840, %v2925
    %2927 = vdwg.mxu0
    %2928 = vmatprep.subr.bf16.mxu0 %v1283
    %2929 = vmatpush1.bf16.msra.mxu0 %v1282
    %2930 = vmatprep.subr.bf16.mxu0 %v1287
    %2931 = vmatpush1.bf16.msra.mxu0 %v1286
    %2932 = vmatprep.subr.bf16.mxu0 %v1291
    %2933 = vmatpush1.bf16.msra.mxu0 %v1290
    %2934 = vmatprep.subr.bf16.mxu0 %v1295
    %2935 = vmatpush1.bf16.msra.mxu0 %v1294
    %2936 = vmatprep.subr.bf16.mxu0 %v1299
    %2937 = vmatpush1.bf16.msra.mxu0 %v1298
    %2938 = vmatprep.subr.bf16.mxu0 %v1303
    %2939 = vmatpush1.bf16.msra.mxu0 %v1302
    %2940 = vmatprep.subr.bf16.mxu0 %v1307
    %2941 = vmatpush1.bf16.msra.mxu0 %v1306
    %2942 = vmatprep.subr.bf16.mxu0 %v1311
    %2943 = vmatpush1.bf16.msra.mxu0 %v1310
    %2944 = vmatprep.subr.bf16.mxu0 0
    %2945 = vmatpush1.bf16.msra.mxu0 0
    %2946 = vmatprep.subr.bf16.mxu0 0
    %2947 = vmatpush1.bf16.msra.mxu0 0
    %2948 = vmatprep.subr.bf16.mxu0 0
    %2949 = vmatpush1.bf16.msra.mxu0 0
    %2950 = vmatprep.subr.bf16.mxu0 0
    %2951 = vmatpush1.bf16.msra.mxu0 0
    %2952 = vmatprep.subr.bf16.mxu0 0
    %2953 = vmatpush1.bf16.msra.mxu0 0
    %2954 = vmatprep.subr.bf16.mxu0 0
    %2955 = vmatpush1.bf16.msra.mxu0 0
    %2956 = vmatprep.subr.bf16.mxu0 0
    %2957 = vmatpush1.bf16.msra.mxu0 0
    %2958 = vmatprep.subr.bf16.mxu0 0
    %2959 = vmatpush1.bf16.msra.mxu0 0
    %2960 = vmatprep.mubr.bf16.mxu0 0
    %2961 = vmatmul.mubr.bf16.gmra.mrb[0].mxu0 %v2797
    %v2962 = vpop.f32.mrb[0].mxu0
    %v2963 = vadd.f32 %v2877, %v2962
    %v2964 = vpop.f32.mrb[0].mxu0
    %v2965 = vadd.f32 %v2879, %v2964
    %v2966 = vpop.f32.mrb[0].mxu0
    %v2967 = vadd.f32 %v2881, %v2966
    %v2968 = vpop.f32.mrb[0].mxu0
    %v2969 = vadd.f32 %v2883, %v2968
    %2970 = vdwg.mxu0
    %v2971 = vadd.f32 %v2920, %v1434
    %v2972 = vadd.f32 %v2922, %v1438
    %v2973 = vadd.f32 %v2963, %v1442
    %v2974 = vadd.f32 %v2965, %v1446
    %v2975 = vadd.f32 %v2924, %v1434
    %v2976 = vadd.f32 %v2926, %v1438
    %v2977 = vadd.f32 %v2967, %v1442
    %v2978 = vadd.f32 %v2969, %v1446
    %v2979 = vxor.u32 %v2971, 2147483648
    %v2980 = vxor.u32 %v2975, 2147483648
    %v2981 = vmul.f32 %v2979, 1.442695
    %v2982 = vpow.pop %v2981
    %v2983 = vmul.f32 %v2980, 1.442695
    %v2984 = vpow.pop %v2983
    %v2985 = vadd.f32 %v2982, 1.0
    %v2986 = vadd.f32 %v2984, 1.0
    %v2987 = vrcp.pop %v2985
    %v2988 = vmul.f32 1.0, %v2987
    %v2989 = vrcp.pop %v2986
    %v2990 = vmul.f32 1.0, %v2989
    %v2991 = vxor.u32 %v2972, 2147483648
    %v2992 = vxor.u32 %v2976, 2147483648
    %v2993 = vmul.f32 %v2991, 1.442695
    %v2994 = vpow.pop %v2993
    %v2995 = vmul.f32 %v2992, 1.442695
    %v2996 = vpow.pop %v2995
    %v2997 = vadd.f32 %v2994, 1.0
    %v2998 = vadd.f32 %v2996, 1.0
    %v2999 = vrcp.pop %v2997
    %v3000 = vmul.f32 1.0, %v2999
    %v3001 = vrcp.pop %v2998
    %v3002 = vmul.f32 1.0, %v3001
    %v3003 = vtanh.pop %v2973
    %v3004 = vtanh.pop %v2977
    %v3005 = vxor.u32 %v2974, 2147483648
    %v3006 = vxor.u32 %v2978, 2147483648
    %v3007 = vmul.f32 %v3005, 1.442695
    %v3008 = vpow.pop %v3007
    %v3009 = vmul.f32 %v3006, 1.442695
    %v3010 = vpow.pop %v3009
    %v3011 = vadd.f32 %v3008, 1.0
    %v3012 = vadd.f32 %v3010, 1.0
    %v3013 = vrcp.pop %v3011
    %v3014 = vmul.f32 1.0, %v3013
    %v3015 = vrcp.pop %v3012
    %v3016 = vmul.f32 1.0, %v3015
    %v3017 = vmul.f32 %v3000, %v2641
    %v3018 = vmul.f32 %v3002, %v2642
    %v3019 = vmul.f32 %v2988, %v3003
    %v3020 = vmul.f32 %v2990, %v3004
    %v3021 = vadd.f32 %v3017, %v3019
    %v3022 = vadd.f32 %v3018, %v3020
    %v3023 = vtanh.pop %v3021
    %v3024 = vtanh.pop %v3022
    %v3025 = vmul.f32 %v3014, %v3023
    %v3026 = vmul.f32 %v3016, %v3024
    %v3027 = vld [vmem:[#allocation2 + $0x140] sm:$0xff]
    %v3028 = vld [vmem:[#allocation2 + $0x148] sm:$0xff]
    %v3029 = vld [vmem:[#allocation2 + $0x150] sm:$0xff]
    %v3030 = vld [vmem:[#allocation2 + $0x158] sm:$0xff]
    %v3031 = vld [vmem:[#allocation2 + $0x160] sm:$0xff]
    %v3032 = vld [vmem:[#allocation2 + $0x168] sm:$0xff]
    %v3033 = vld [vmem:[#allocation2 + $0x170] sm:$0xff]
    %v3034 = vld [vmem:[#allocation2 + $0x178] sm:$0xff]
    %3035 = vmatprep.subr.bf16.mxu0 %v732
    %3036 = vmatpush1.bf16.msra.mxu0 %v731
    %3037 = vmatprep.subr.bf16.mxu0 %v736
    %3038 = vmatpush1.bf16.msra.mxu0 %v735
    %3039 = vmatprep.subr.bf16.mxu0 %v740
    %3040 = vmatpush1.bf16.msra.mxu0 %v739
    %3041 = vmatprep.subr.bf16.mxu0 %v744
    %3042 = vmatpush1.bf16.msra.mxu0 %v743
    %3043 = vmatprep.subr.bf16.mxu0 %v748
    %3044 = vmatpush1.bf16.msra.mxu0 %v747
    %3045 = vmatprep.subr.bf16.mxu0 %v752
    %3046 = vmatpush1.bf16.msra.mxu0 %v751
    %3047 = vmatprep.subr.bf16.mxu0 %v756
    %3048 = vmatpush1.bf16.msra.mxu0 %v755
    %3049 = vmatprep.subr.bf16.mxu0 %v760
    %3050 = vmatpush1.bf16.msra.mxu0 %v759
    %3051 = vmatprep.subr.bf16.mxu0 0
    %3052 = vmatpush1.bf16.msra.mxu0 0
    %3053 = vmatprep.subr.bf16.mxu0 0
    %3054 = vmatpush1.bf16.msra.mxu0 0
    %3055 = vmatprep.subr.bf16.mxu0 0
    %3056 = vmatpush1.bf16.msra.mxu0 0
    %3057 = vmatprep.subr.bf16.mxu0 0
    %3058 = vmatpush1.bf16.msra.mxu0 0
    %3059 = vmatprep.subr.bf16.mxu0 0
    %3060 = vmatpush1.bf16.msra.mxu0 0
    %3061 = vmatprep.subr.bf16.mxu0 0
    %3062 = vmatpush1.bf16.msra.mxu0 0
    %3063 = vmatprep.subr.bf16.mxu0 0
    %3064 = vmatpush1.bf16.msra.mxu0 0
    %3065 = vmatprep.subr.bf16.mxu0 0
    %3066 = vmatpush1.bf16.msra.mxu0 0
    %3067 = vmatprep.mubr.bf16.mxu0 0
    %3068 = vmatmul.mubr.bf16.gmra.mrb[0].mxu0 %v2797
    %v3069 = vpop.f32.mrb[0].mxu0
    %v3070 = vadd.f32 0.0, %v3069
    %v3071 = vpop.f32.mrb[0].mxu0
    %v3072 = vadd.f32 0.0, %v3071
    %v3073 = vpop.f32.mrb[0].mxu0
    %v3074 = vadd.f32 0.0, %v3073
    %v3075 = vpop.f32.mrb[0].mxu0
    %v3076 = vadd.f32 0.0, %v3075
    %3077 = vdwg.mxu0
    %3078 = vmatprep.subr.bf16.mxu0 %v734
    %3079 = vmatpush1.bf16.msra.mxu0 %v733
    %3080 = vmatprep.subr.bf16.mxu0 %v738
    %3081 = vmatpush1.bf16.msra.mxu0 %v737
    %3082 = vmatprep.subr.bf16.mxu0 %v742
    %3083 = vmatpush1.bf16.msra.mxu0 %v741
    %3084 = vmatprep.subr.bf16.mxu0 %v746
    %3085 = vmatpush1.bf16.msra.mxu0 %v745
    %3086 = vmatprep.subr.bf16.mxu0 %v750
    %3087 = vmatpush1.bf16.msra.mxu0 %v749
    %3088 = vmatprep.subr.bf16.mxu0 %v754
    %3089 = vmatpush1.bf16.msra.mxu0 %v753
    %3090 = vmatprep.subr.bf16.mxu0 %v758
    %3091 = vmatpush1.bf16.msra.mxu0 %v757
    %3092 = vmatprep.subr.bf16.mxu0 %v762
    %3093 = vmatpush1.bf16.msra.mxu0 %v761
    %3094 = vmatprep.subr.bf16.mxu0 0
    %3095 = vmatpush1.bf16.msra.mxu0 0
    %3096 = vmatprep.subr.bf16.mxu0 0
    %3097 = vmatpush1.bf16.msra.mxu0 0
    %3098 = vmatprep.subr.bf16.mxu0 0
    %3099 = vmatpush1.bf16.msra.mxu0 0
    %3100 = vmatprep.subr.bf16.mxu0 0
    %3101 = vmatpush1.bf16.msra.mxu0 0
    %3102 = vmatprep.subr.bf16.mxu0 0
    %3103 = vmatpush1.bf16.msra.mxu0 0
    %3104 = vmatprep.subr.bf16.mxu0 0
    %3105 = vmatpush1.bf16.msra.mxu0 0
    %3106 = vmatprep.subr.bf16.mxu0 0
    %3107 = vmatpush1.bf16.msra.mxu0 0
    %3108 = vmatprep.subr.bf16.mxu0 0
    %3109 = vmatpush1.bf16.msra.mxu0 0
    %3110 = vmatprep.mubr.bf16.mxu0 0
    %3111 = vmatmul.mubr.bf16.gmra.mrb[0].mxu0 %v2797
    %v3112 = vpop.f32.mrb[0].mxu0
    %v3113 = vadd.f32 0.0, %v3112
    %v3114 = vpop.f32.mrb[0].mxu0
    %v3115 = vadd.f32 0.0, %v3114
    %v3116 = vpop.f32.mrb[0].mxu0
    %v3117 = vadd.f32 0.0, %v3116
    %v3118 = vpop.f32.mrb[0].mxu0
    %v3119 = vadd.f32 0.0, %v3118
    %3120 = vdwg.mxu0
    %v3121 = vadd.f32 %v3027, %v3070
    %v3122 = vadd.f32 %v3028, %v3072
    %v3123 = vadd.f32 %v3029, %v3113
    %v3124 = vadd.f32 %v3030, %v3115
    %v3125 = vadd.f32 %v3031, %v3074
    %v3126 = vadd.f32 %v3032, %v3076
    %v3127 = vadd.f32 %v3033, %v3117
    %v3128 = vadd.f32 %v3034, %v3119
    %v3129 = vxor.u32 %v3121, 2147483648
    %v3130 = vxor.u32 %v3125, 2147483648
    %v3131 = vmul.f32 %v3129, 1.442695
    %v3132 = vpow.pop %v3131
    %v3133 = vmul.f32 %v3130, 1.442695
    %v3134 = vpow.pop %v3133
    %v3135 = vadd.f32 %v3132, 1.0
    %v3136 = vadd.f32 %v3134, 1.0
    %v3137 = vrcp.pop %v3135
    %v3138 = vmul.f32 1.0, %v3137
    %v3139 = vrcp.pop %v3136
    %v3140 = vmul.f32 1.0, %v3139
    %v3141 = vxor.u32 %v3122, 2147483648
    %v3142 = vxor.u32 %v3126, 2147483648
    %v3143 = vmul.f32 %v3141, 1.442695
    %v3144 = vpow.pop %v3143
    %v3145 = vmul.f32 %v3142, 1.442695
    %v3146 = vpow.pop %v3145
    %v3147 = vadd.f32 %v3144, 1.0
    %v3148 = vadd.f32 %v3146, 1.0
    %v3149 = vrcp.pop %v3147
    %v3150 = vmul.f32 1.0, %v3149
    %v3151 = vrcp.pop %v3148
    %v3152 = vmul.f32 1.0, %v3151
    %v3153 = vtanh.pop %v3123
    %v3154 = vtanh.pop %v3127
    %v3155 = vxor.u32 %v3124, 2147483648
    %v3156 = vxor.u32 %v3128, 2147483648
    %v3157 = vmul.f32 %v3155, 1.442695
    %v3158 = vpow.pop %v3157
    %v3159 = vmul.f32 %v3156, 1.442695
    %v3160 = vpow.pop %v3159
    %v3161 = vadd.f32 %v3158, 1.0
    %v3162 = vadd.f32 %v3160, 1.0
    %v3163 = vrcp.pop %v3161
    %v3164 = vmul.f32 1.0, %v3163
    %v3165 = vrcp.pop %v3162
    %v3166 = vmul.f32 1.0, %v3165
    %v3167 = vmul.f32 %v3150, %v2791
    %v3168 = vmul.f32 %v3152, %v2792
    %v3169 = vmul.f32 %v3138, %v3153
    %v3170 = vmul.f32 %v3140, %v3154
    %v3171 = vadd.f32 %v3167, %v3169
    %v3172 = vadd.f32 %v3168, %v3170
    %v3173 = vtanh.pop %v3171
    %v3174 = vtanh.pop %v3172
    %v3175 = vmul.f32 %v3164, %v3173
    %v3176 = vmul.f32 %v3166, %v3174
    %v3177 = vpack.c.bf16 %v3176, %v3175
    %v3178 = vpack.c.bf16 %v3026, %v3025
    %3179 = vmatprep.subr.bf16.mxu0 %v1035
    %3180 = vmatpush1.bf16.msra.mxu0 %v1034
    %3181 = vmatprep.subr.bf16.mxu0 %v1039
    %3182 = vmatpush1.bf16.msra.mxu0 %v1038
    %3183 = vmatprep.subr.bf16.mxu0 %v1043
    %3184 = vmatpush1.bf16.msra.mxu0 %v1042
    %3185 = vmatprep.subr.bf16.mxu0 %v1047
    %3186 = vmatpush1.bf16.msra.mxu0 %v1046
    %3187 = vmatprep.subr.bf16.mxu0 %v1051
    %3188 = vmatpush1.bf16.msra.mxu0 %v1050
    %3189 = vmatprep.subr.bf16.mxu0 %v1055
    %3190 = vmatpush1.bf16.msra.mxu0 %v1054
    %3191 = vmatprep.subr.bf16.mxu0 %v1059
    %3192 = vmatpush1.bf16.msra.mxu0 %v1058
    %3193 = vmatprep.subr.bf16.mxu0 %v1063
    %3194 = vmatpush1.bf16.msra.mxu0 %v1062
    %3195 = vmatprep.subr.bf16.mxu0 0
    %3196 = vmatpush1.bf16.msra.mxu0 0
    %3197 = vmatprep.subr.bf16.mxu0 0
    %3198 = vmatpush1.bf16.msra.mxu0 0
    %3199 = vmatprep.subr.bf16.mxu0 0
    %3200 = vmatpush1.bf16.msra.mxu0 0
    %3201 = vmatprep.subr.bf16.mxu0 0
    %3202 = vmatpush1.bf16.msra.mxu0 0
    %3203 = vmatprep.subr.bf16.mxu0 0
    %3204 = vmatpush1.bf16.msra.mxu0 0
    %3205 = vmatprep.subr.bf16.mxu0 0
    %3206 = vmatpush1.bf16.msra.mxu0 0
    %3207 = vmatprep.subr.bf16.mxu0 0
    %3208 = vmatpush1.bf16.msra.mxu0 0
    %3209 = vmatprep.subr.bf16.mxu0 0
    %3210 = vmatpush1.bf16.msra.mxu0 0
    %3211 = vmatprep.mubr.bf16.mxu0 0
    %3212 = vmatmul.mubr.bf16.gmra.mrb[0].mxu0 %v3178
    %v3213 = vpop.f32.mrb[0].mxu0
    %v3214 = vadd.f32 0.0, %v3213
    %v3215 = vpop.f32.mrb[0].mxu0
    %v3216 = vadd.f32 0.0, %v3215
    %v3217 = vpop.f32.mrb[0].mxu0
    %v3218 = vadd.f32 0.0, %v3217
    %v3219 = vpop.f32.mrb[0].mxu0
    %v3220 = vadd.f32 0.0, %v3219
    %3221 = vdwg.mxu0
    %3222 = vmatprep.subr.bf16.mxu0 %v1037
    %3223 = vmatpush1.bf16.msra.mxu0 %v1036
    %3224 = vmatprep.subr.bf16.mxu0 %v1041
    %3225 = vmatpush1.bf16.msra.mxu0 %v1040
    %3226 = vmatprep.subr.bf16.mxu0 %v1045
    %3227 = vmatpush1.bf16.msra.mxu0 %v1044
    %3228 = vmatprep.subr.bf16.mxu0 %v1049
    %3229 = vmatpush1.bf16.msra.mxu0 %v1048
    %3230 = vmatprep.subr.bf16.mxu0 %v1053
    %3231 = vmatpush1.bf16.msra.mxu0 %v1052
    %3232 = vmatprep.subr.bf16.mxu0 %v1057
    %3233 = vmatpush1.bf16.msra.mxu0 %v1056
    %3234 = vmatprep.subr.bf16.mxu0 %v1061
    %3235 = vmatpush1.bf16.msra.mxu0 %v1060
    %3236 = vmatprep.subr.bf16.mxu0 %v1065
    %3237 = vmatpush1.bf16.msra.mxu0 %v1064
    %3238 = vmatprep.subr.bf16.mxu0 0
    %3239 = vmatpush1.bf16.msra.mxu0 0
    %3240 = vmatprep.subr.bf16.mxu0 0
    %3241 = vmatpush1.bf16.msra.mxu0 0
    %3242 = vmatprep.subr.bf16.mxu0 0
    %3243 = vmatpush1.bf16.msra.mxu0 0
    %3244 = vmatprep.subr.bf16.mxu0 0
    %3245 = vmatpush1.bf16.msra.mxu0 0
    %3246 = vmatprep.subr.bf16.mxu0 0
    %3247 = vmatpush1.bf16.msra.mxu0 0
    %3248 = vmatprep.subr.bf16.mxu0 0
    %3249 = vmatpush1.bf16.msra.mxu0 0
    %3250 = vmatprep.subr.bf16.mxu0 0
    %3251 = vmatpush1.bf16.msra.mxu0 0
    %3252 = vmatprep.subr.bf16.mxu0 0
    %3253 = vmatpush1.bf16.msra.mxu0 0
    %3254 = vmatprep.mubr.bf16.mxu0 0
    %3255 = vmatmul.mubr.bf16.gmra.mrb[0].mxu0 %v3178
    %v3256 = vpop.f32.mrb[0].mxu0
    %v3257 = vadd.f32 0.0, %v3256
    %v3258 = vpop.f32.mrb[0].mxu0
    %v3259 = vadd.f32 0.0, %v3258
    %v3260 = vpop.f32.mrb[0].mxu0
    %v3261 = vadd.f32 0.0, %v3260
    %v3262 = vpop.f32.mrb[0].mxu0
    %v3263 = vadd.f32 0.0, %v3262
    %3264 = vdwg.mxu0
    %3265 = vmatprep.subr.bf16.mxu0 %v1281
    %3266 = vmatpush1.bf16.msra.mxu0 %v1280
    %3267 = vmatprep.subr.bf16.mxu0 %v1285
    %3268 = vmatpush1.bf16.msra.mxu0 %v1284
    %3269 = vmatprep.subr.bf16.mxu0 %v1289
    %3270 = vmatpush1.bf16.msra.mxu0 %v1288
    %3271 = vmatprep.subr.bf16.mxu0 %v1293
    %3272 = vmatpush1.bf16.msra.mxu0 %v1292
    %3273 = vmatprep.subr.bf16.mxu0 %v1297
    %3274 = vmatpush1.bf16.msra.mxu0 %v1296
    %3275 = vmatprep.subr.bf16.mxu0 %v1301
    %3276 = vmatpush1.bf16.msra.mxu0 %v1300
    %3277 = vmatprep.subr.bf16.mxu0 %v1305
    %3278 = vmatpush1.bf16.msra.mxu0 %v1304
    %3279 = vmatprep.subr.bf16.mxu0 %v1309
    %3280 = vmatpush1.bf16.msra.mxu0 %v1308
    %3281 = vmatprep.subr.bf16.mxu0 0
    %3282 = vmatpush1.bf16.msra.mxu0 0
    %3283 = vmatprep.subr.bf16.mxu0 0
    %3284 = vmatpush1.bf16.msra.mxu0 0
    %3285 = vmatprep.subr.bf16.mxu0 0
    %3286 = vmatpush1.bf16.msra.mxu0 0
    %3287 = vmatprep.subr.bf16.mxu0 0
    %3288 = vmatpush1.bf16.msra.mxu0 0
    %3289 = vmatprep.subr.bf16.mxu0 0
    %3290 = vmatpush1.bf16.msra.mxu0 0
    %3291 = vmatprep.subr.bf16.mxu0 0
    %3292 = vmatpush1.bf16.msra.mxu0 0
    %3293 = vmatprep.subr.bf16.mxu0 0
    %3294 = vmatpush1.bf16.msra.mxu0 0
    %3295 = vmatprep.subr.bf16.mxu0 0
    %3296 = vmatpush1.bf16.msra.mxu0 0
    %3297 = vmatprep.mubr.bf16.mxu0 0
    %3298 = vmatmul.mubr.bf16.gmra.mrb[0].mxu0 %v3177
    %v3299 = vpop.f32.mrb[0].mxu0
    %v3300 = vadd.f32 %v3214, %v3299
    %v3301 = vpop.f32.mrb[0].mxu0
    %v3302 = vadd.f32 %v3216, %v3301
    %v3303 = vpop.f32.mrb[0].mxu0
    %v3304 = vadd.f32 %v3218, %v3303
    %v3305 = vpop.f32.mrb[0].mxu0
    %v3306 = vadd.f32 %v3220, %v3305
    %3307 = vdwg.mxu0
    %3308 = vmatprep.subr.bf16.mxu0 %v1283
    %3309 = vmatpush1.bf16.msra.mxu0 %v1282
    %3310 = vmatprep.subr.bf16.mxu0 %v1287
    %3311 = vmatpush1.bf16.msra.mxu0 %v1286
    %3312 = vmatprep.subr.bf16.mxu0 %v1291
    %3313 = vmatpush1.bf16.msra.mxu0 %v1290
    %3314 = vmatprep.subr.bf16.mxu0 %v1295
    %3315 = vmatpush1.bf16.msra.mxu0 %v1294
    %3316 = vmatprep.subr.bf16.mxu0 %v1299
    %3317 = vmatpush1.bf16.msra.mxu0 %v1298
    %3318 = vmatprep.subr.bf16.mxu0 %v1303
    %3319 = vmatpush1.bf16.msra.mxu0 %v1302
    %3320 = vmatprep.subr.bf16.mxu0 %v1307
    %3321 = vmatpush1.bf16.msra.mxu0 %v1306
    %3322 = vmatprep.subr.bf16.mxu0 %v1311
    %3323 = vmatpush1.bf16.msra.mxu0 %v1310
    %3324 = vmatprep.subr.bf16.mxu0 0
    %3325 = vmatpush1.bf16.msra.mxu0 0
    %3326 = vmatprep.subr.bf16.mxu0 0
    %3327 = vmatpush1.bf16.msra.mxu0 0
    %3328 = vmatprep.subr.bf16.mxu0 0
    %3329 = vmatpush1.bf16.msra.mxu0 0
    %3330 = vmatprep.subr.bf16.mxu0 0
    %3331 = vmatpush1.bf16.msra.mxu0 0
    %3332 = vmatprep.subr.bf16.mxu0 0
    %3333 = vmatpush1.bf16.msra.mxu0 0
    %3334 = vmatprep.subr.bf16.mxu0 0
    %3335 = vmatpush1.bf16.msra.mxu0 0
    %3336 = vmatprep.subr.bf16.mxu0 0
    %3337 = vmatpush1.bf16.msra.mxu0 0
    %3338 = vmatprep.subr.bf16.mxu0 0
    %3339 = vmatpush1.bf16.msra.mxu0 0
    %3340 = vmatprep.mubr.bf16.mxu0 0
    %3341 = vmatmul.mubr.bf16.gmra.mrb[0].mxu0 %v3177
    %v3342 = vpop.f32.mrb[0].mxu0
    %v3343 = vadd.f32 %v3257, %v3342
    %v3344 = vpop.f32.mrb[0].mxu0
    %v3345 = vadd.f32 %v3259, %v3344
    %v3346 = vpop.f32.mrb[0].mxu0
    %v3347 = vadd.f32 %v3261, %v3346
    %v3348 = vpop.f32.mrb[0].mxu0
    %v3349 = vadd.f32 %v3263, %v3348
    %3350 = vdwg.mxu0
    %v3351 = vadd.f32 %v3300, %v1434
    %v3352 = vadd.f32 %v3302, %v1438
    %v3353 = vadd.f32 %v3343, %v1442
    %v3354 = vadd.f32 %v3345, %v1446
    %v3355 = vadd.f32 %v3304, %v1434
    %v3356 = vadd.f32 %v3306, %v1438
    %v3357 = vadd.f32 %v3347, %v1442
    %v3358 = vadd.f32 %v3349, %v1446
    %v3359 = vxor.u32 %v3351, 2147483648
    %v3360 = vxor.u32 %v3355, 2147483648
    %v3361 = vmul.f32 %v3359, 1.442695
    %v3362 = vpow.pop %v3361
    %v3363 = vmul.f32 %v3360, 1.442695
    %v3364 = vpow.pop %v3363
    %v3365 = vadd.f32 %v3362, 1.0
    %v3366 = vadd.f32 %v3364, 1.0
    %v3367 = vrcp.pop %v3365
    %v3368 = vmul.f32 1.0, %v3367
    %v3369 = vrcp.pop %v3366
    %v3370 = vmul.f32 1.0, %v3369
    %v3371 = vxor.u32 %v3352, 2147483648
    %v3372 = vxor.u32 %v3356, 2147483648
    %v3373 = vmul.f32 %v3371, 1.442695
    %v3374 = vpow.pop %v3373
    %v3375 = vmul.f32 %v3372, 1.442695
    %v3376 = vpow.pop %v3375
    %v3377 = vadd.f32 %v3374, 1.0
    %v3378 = vadd.f32 %v3376, 1.0
    %v3379 = vrcp.pop %v3377
    %v3380 = vmul.f32 1.0, %v3379
    %v3381 = vrcp.pop %v3378
    %v3382 = vmul.f32 1.0, %v3381
    %v3383 = vtanh.pop %v3353
    %v3384 = vtanh.pop %v3357
    %v3385 = vxor.u32 %v3354, 2147483648
    %v3386 = vxor.u32 %v3358, 2147483648
    %v3387 = vmul.f32 %v3385, 1.442695
    %v3388 = vpow.pop %v3387
    %v3389 = vmul.f32 %v3386, 1.442695
    %v3390 = vpow.pop %v3389
    %v3391 = vadd.f32 %v3388, 1.0
    %v3392 = vadd.f32 %v3390, 1.0
    %v3393 = vrcp.pop %v3391
    %v3394 = vmul.f32 1.0, %v3393
    %v3395 = vrcp.pop %v3392
    %v3396 = vmul.f32 1.0, %v3395
    %v3397 = vmul.f32 %v3380, %v3021
    %v3398 = vmul.f32 %v3382, %v3022
    %v3399 = vmul.f32 %v3368, %v3383
    %v3400 = vmul.f32 %v3370, %v3384
    %v3401 = vadd.f32 %v3397, %v3399
    %v3402 = vadd.f32 %v3398, %v3400
    %v3403 = vtanh.pop %v3401
    %v3404 = vtanh.pop %v3402
    %v3405 = vmul.f32 %v3394, %v3403
    %v3406 = vmul.f32 %v3396, %v3404
    %v3407 = vld [vmem:[#allocation2 + $0x180] sm:$0xff]
    %v3408 = vld [vmem:[#allocation2 + $0x188] sm:$0xff]
    %v3409 = vld [vmem:[#allocation2 + $0x190] sm:$0xff]
    %v3410 = vld [vmem:[#allocation2 + $0x198] sm:$0xff]
    %v3411 = vld [vmem:[#allocation2 + $0x1a0] sm:$0xff]
    %v3412 = vld [vmem:[#allocation2 + $0x1a8] sm:$0xff]
    %v3413 = vld [vmem:[#allocation2 + $0x1b0] sm:$0xff]
    %v3414 = vld [vmem:[#allocation2 + $0x1b8] sm:$0xff]
    %3415 = vmatprep.subr.bf16.mxu0 %v732
    %3416 = vmatpush1.bf16.msra.mxu0 %v731
    %3417 = vmatprep.subr.bf16.mxu0 %v736
    %3418 = vmatpush1.bf16.msra.mxu0 %v735
    %3419 = vmatprep.subr.bf16.mxu0 %v740
    %3420 = vmatpush1.bf16.msra.mxu0 %v739
    %3421 = vmatprep.subr.bf16.mxu0 %v744
    %3422 = vmatpush1.bf16.msra.mxu0 %v743
    %3423 = vmatprep.subr.bf16.mxu0 %v748
    %3424 = vmatpush1.bf16.msra.mxu0 %v747
    %3425 = vmatprep.subr.bf16.mxu0 %v752
    %3426 = vmatpush1.bf16.msra.mxu0 %v751
    %3427 = vmatprep.subr.bf16.mxu0 %v756
    %3428 = vmatpush1.bf16.msra.mxu0 %v755
    %3429 = vmatprep.subr.bf16.mxu0 %v760
    %3430 = vmatpush1.bf16.msra.mxu0 %v759
    %3431 = vmatprep.subr.bf16.mxu0 0
    %3432 = vmatpush1.bf16.msra.mxu0 0
    %3433 = vmatprep.subr.bf16.mxu0 0
    %3434 = vmatpush1.bf16.msra.mxu0 0
    %3435 = vmatprep.subr.bf16.mxu0 0
    %3436 = vmatpush1.bf16.msra.mxu0 0
    %3437 = vmatprep.subr.bf16.mxu0 0
    %3438 = vmatpush1.bf16.msra.mxu0 0
    %3439 = vmatprep.subr.bf16.mxu0 0
    %3440 = vmatpush1.bf16.msra.mxu0 0
    %3441 = vmatprep.subr.bf16.mxu0 0
    %3442 = vmatpush1.bf16.msra.mxu0 0
    %3443 = vmatprep.subr.bf16.mxu0 0
    %3444 = vmatpush1.bf16.msra.mxu0 0
    %3445 = vmatprep.subr.bf16.mxu0 0
    %3446 = vmatpush1.bf16.msra.mxu0 0
    %3447 = vmatprep.mubr.bf16.mxu0 0
    %3448 = vmatmul.mubr.bf16.gmra.mrb[0].mxu0 %v3177
    %v3449 = vpop.f32.mrb[0].mxu0
    %v3450 = vadd.f32 0.0, %v3449
    %v3451 = vpop.f32.mrb[0].mxu0
    %v3452 = vadd.f32 0.0, %v3451
    %v3453 = vpop.f32.mrb[0].mxu0
    %v3454 = vadd.f32 0.0, %v3453
    %v3455 = vpop.f32.mrb[0].mxu0
    %v3456 = vadd.f32 0.0, %v3455
    %3457 = vdwg.mxu0
    %3458 = vmatprep.subr.bf16.mxu0 %v734
    %3459 = vmatpush1.bf16.msra.mxu0 %v733
    %3460 = vmatprep.subr.bf16.mxu0 %v738
    %3461 = vmatpush1.bf16.msra.mxu0 %v737
    %3462 = vmatprep.subr.bf16.mxu0 %v742
    %3463 = vmatpush1.bf16.msra.mxu0 %v741
    %3464 = vmatprep.subr.bf16.mxu0 %v746
    %3465 = vmatpush1.bf16.msra.mxu0 %v745
    %3466 = vmatprep.subr.bf16.mxu0 %v750
    %3467 = vmatpush1.bf16.msra.mxu0 %v749
    %3468 = vmatprep.subr.bf16.mxu0 %v754
    %3469 = vmatpush1.bf16.msra.mxu0 %v753
    %3470 = vmatprep.subr.bf16.mxu0 %v758
    %3471 = vmatpush1.bf16.msra.mxu0 %v757
    %3472 = vmatprep.subr.bf16.mxu0 %v762
    %3473 = vmatpush1.bf16.msra.mxu0 %v761
    %3474 = vmatprep.subr.bf16.mxu0 0
    %3475 = vmatpush1.bf16.msra.mxu0 0
    %3476 = vmatprep.subr.bf16.mxu0 0
    %3477 = vmatpush1.bf16.msra.mxu0 0
    %3478 = vmatprep.subr.bf16.mxu0 0
    %3479 = vmatpush1.bf16.msra.mxu0 0
    %3480 = vmatprep.subr.bf16.mxu0 0
    %3481 = vmatpush1.bf16.msra.mxu0 0
    %3482 = vmatprep.subr.bf16.mxu0 0
    %3483 = vmatpush1.bf16.msra.mxu0 0
    %3484 = vmatprep.subr.bf16.mxu0 0
    %3485 = vmatpush1.bf16.msra.mxu0 0
    %3486 = vmatprep.subr.bf16.mxu0 0
    %3487 = vmatpush1.bf16.msra.mxu0 0
    %3488 = vmatprep.subr.bf16.mxu0 0
    %3489 = vmatpush1.bf16.msra.mxu0 0
    %3490 = vmatprep.mubr.bf16.mxu0 0
    %3491 = vmatmul.mubr.bf16.gmra.mrb[0].mxu0 %v3177
    %v3492 = vpop.f32.mrb[0].mxu0
    %v3493 = vadd.f32 0.0, %v3492
    %v3494 = vpop.f32.mrb[0].mxu0
    %v3495 = vadd.f32 0.0, %v3494
    %v3496 = vpop.f32.mrb[0].mxu0
    %v3497 = vadd.f32 0.0, %v3496
    %v3498 = vpop.f32.mrb[0].mxu0
    %v3499 = vadd.f32 0.0, %v3498
    %3500 = vdwg.mxu0
    %v3501 = vadd.f32 %v3407, %v3450
    %v3502 = vadd.f32 %v3408, %v3452
    %v3503 = vadd.f32 %v3409, %v3493
    %v3504 = vadd.f32 %v3410, %v3495
    %v3505 = vadd.f32 %v3411, %v3454
    %v3506 = vadd.f32 %v3412, %v3456
    %v3507 = vadd.f32 %v3413, %v3497
    %v3508 = vadd.f32 %v3414, %v3499
    %v3509 = vxor.u32 %v3501, 2147483648
    %v3510 = vxor.u32 %v3505, 2147483648
    %v3511 = vmul.f32 %v3509, 1.442695
    %v3512 = vpow.pop %v3511
    %v3513 = vmul.f32 %v3510, 1.442695
    %v3514 = vpow.pop %v3513
    %v3515 = vadd.f32 %v3512, 1.0
    %v3516 = vadd.f32 %v3514, 1.0
    %v3517 = vrcp.pop %v3515
    %v3518 = vmul.f32 1.0, %v3517
    %v3519 = vrcp.pop %v3516
    %v3520 = vmul.f32 1.0, %v3519
    %v3521 = vxor.u32 %v3502, 2147483648
    %v3522 = vxor.u32 %v3506, 2147483648
    %v3523 = vmul.f32 %v3521, 1.442695
    %v3524 = vpow.pop %v3523
    %v3525 = vmul.f32 %v3522, 1.442695
    %v3526 = vpow.pop %v3525
    %v3527 = vadd.f32 %v3524, 1.0
    %v3528 = vadd.f32 %v3526, 1.0
    %v3529 = vrcp.pop %v3527
    %v3530 = vmul.f32 1.0, %v3529
    %v3531 = vrcp.pop %v3528
    %v3532 = vmul.f32 1.0, %v3531
    %v3533 = vtanh.pop %v3503
    %v3534 = vtanh.pop %v3507
    %v3535 = vxor.u32 %v3504, 2147483648
    %v3536 = vxor.u32 %v3508, 2147483648
    %v3537 = vmul.f32 %v3535, 1.442695
    %v3538 = vpow.pop %v3537
    %v3539 = vmul.f32 %v3536, 1.442695
    %v3540 = vpow.pop %v3539
    %v3541 = vadd.f32 %v3538, 1.0
    %v3542 = vadd.f32 %v3540, 1.0
    %v3543 = vrcp.pop %v3541
    %v3544 = vmul.f32 1.0, %v3543
    %v3545 = vrcp.pop %v3542
    %v3546 = vmul.f32 1.0, %v3545
    %v3547 = vmul.f32 %v3530, %v3171
    %v3548 = vmul.f32 %v3532, %v3172
    %v3549 = vmul.f32 %v3518, %v3533
    %v3550 = vmul.f32 %v3520, %v3534
    %v3551 = vadd.f32 %v3547, %v3549
    %v3552 = vadd.f32 %v3548, %v3550
    %v3553 = vtanh.pop %v3551
    %v3554 = vtanh.pop %v3552
    %v3555 = vmul.f32 %v3544, %v3553
    %v3556 = vmul.f32 %v3546, %v3554
    %v3557 = vpack.c.bf16 %v3556, %v3555
    %v3558 = vpack.c.bf16 %v3406, %v3405
    %3559 = vmatprep.subr.bf16.mxu0 %v1035
    %3560 = vmatpush1.bf16.msra.mxu0 %v1034
    %3561 = vmatprep.subr.bf16.mxu0 %v1039
    %3562 = vmatpush1.bf16.msra.mxu0 %v1038
    %3563 = vmatprep.subr.bf16.mxu0 %v1043
    %3564 = vmatpush1.bf16.msra.mxu0 %v1042
    %3565 = vmatprep.subr.bf16.mxu0 %v1047
    %3566 = vmatpush1.bf16.msra.mxu0 %v1046
    %3567 = vmatprep.subr.bf16.mxu0 %v1051
    %3568 = vmatpush1.bf16.msra.mxu0 %v1050
    %3569 = vmatprep.subr.bf16.mxu0 %v1055
    %3570 = vmatpush1.bf16.msra.mxu0 %v1054
    %3571 = vmatprep.subr.bf16.mxu0 %v1059
    %3572 = vmatpush1.bf16.msra.mxu0 %v1058
    %3573 = vmatprep.subr.bf16.mxu0 %v1063
    %3574 = vmatpush1.bf16.msra.mxu0 %v1062
    %3575 = vmatprep.subr.bf16.mxu0 0
    %3576 = vmatpush1.bf16.msra.mxu0 0
    %3577 = vmatprep.subr.bf16.mxu0 0
    %3578 = vmatpush1.bf16.msra.mxu0 0
    %3579 = vmatprep.subr.bf16.mxu0 0
    %3580 = vmatpush1.bf16.msra.mxu0 0
    %3581 = vmatprep.subr.bf16.mxu0 0
    %3582 = vmatpush1.bf16.msra.mxu0 0
    %3583 = vmatprep.subr.bf16.mxu0 0
    %3584 = vmatpush1.bf16.msra.mxu0 0
    %3585 = vmatprep.subr.bf16.mxu0 0
    %3586 = vmatpush1.bf16.msra.mxu0 0
    %3587 = vmatprep.subr.bf16.mxu0 0
    %3588 = vmatpush1.bf16.msra.mxu0 0
    %3589 = vmatprep.subr.bf16.mxu0 0
    %3590 = vmatpush1.bf16.msra.mxu0 0
    %3591 = vmatprep.mubr.bf16.mxu0 0
    %3592 = vmatmul.mubr.bf16.gmra.mrb[0].mxu0 %v3558
    %v3593 = vpop.f32.mrb[0].mxu0
    %v3594 = vadd.f32 0.0, %v3593
    %v3595 = vpop.f32.mrb[0].mxu0
    %v3596 = vadd.f32 0.0, %v3595
    %v3597 = vpop.f32.mrb[0].mxu0
    %v3598 = vadd.f32 0.0, %v3597
    %v3599 = vpop.f32.mrb[0].mxu0
    %v3600 = vadd.f32 0.0, %v3599
    %3601 = vdwg.mxu0
    %3602 = vmatprep.subr.bf16.mxu0 %v1037
    %3603 = vmatpush1.bf16.msra.mxu0 %v1036
    %3604 = vmatprep.subr.bf16.mxu0 %v1041
    %3605 = vmatpush1.bf16.msra.mxu0 %v1040
    %3606 = vmatprep.subr.bf16.mxu0 %v1045
    %3607 = vmatpush1.bf16.msra.mxu0 %v1044
    %3608 = vmatprep.subr.bf16.mxu0 %v1049
    %3609 = vmatpush1.bf16.msra.mxu0 %v1048
    %3610 = vmatprep.subr.bf16.mxu0 %v1053
    %3611 = vmatpush1.bf16.msra.mxu0 %v1052
    %3612 = vmatprep.subr.bf16.mxu0 %v1057
    %3613 = vmatpush1.bf16.msra.mxu0 %v1056
    %3614 = vmatprep.subr.bf16.mxu0 %v1061
    %3615 = vmatpush1.bf16.msra.mxu0 %v1060
    %3616 = vmatprep.subr.bf16.mxu0 %v1065
    %3617 = vmatpush1.bf16.msra.mxu0 %v1064
    %3618 = vmatprep.subr.bf16.mxu0 0
    %3619 = vmatpush1.bf16.msra.mxu0 0
    %3620 = vmatprep.subr.bf16.mxu0 0
    %3621 = vmatpush1.bf16.msra.mxu0 0
    %3622 = vmatprep.subr.bf16.mxu0 0
    %3623 = vmatpush1.bf16.msra.mxu0 0
    %3624 = vmatprep.subr.bf16.mxu0 0
    %3625 = vmatpush1.bf16.msra.mxu0 0
    %3626 = vmatprep.subr.bf16.mxu0 0
    %3627 = vmatpush1.bf16.msra.mxu0 0
    %3628 = vmatprep.subr.bf16.mxu0 0
    %3629 = vmatpush1.bf16.msra.mxu0 0
    %3630 = vmatprep.subr.bf16.mxu0 0
    %3631 = vmatpush1.bf16.msra.mxu0 0
    %3632 = vmatprep.subr.bf16.mxu0 0
    %3633 = vmatpush1.bf16.msra.mxu0 0
    %3634 = vmatprep.mubr.bf16.mxu0 0
    %3635 = vmatmul.mubr.bf16.gmra.mrb[0].mxu0 %v3558
    %v3636 = vpop.f32.mrb[0].mxu0
    %v3637 = vadd.f32 0.0, %v3636
    %v3638 = vpop.f32.mrb[0].mxu0
    %v3639 = vadd.f32 0.0, %v3638
    %v3640 = vpop.f32.mrb[0].mxu0
    %v3641 = vadd.f32 0.0, %v3640
    %v3642 = vpop.f32.mrb[0].mxu0
    %v3643 = vadd.f32 0.0, %v3642
    %3644 = vdwg.mxu0
    %3645 = vmatprep.subr.bf16.mxu0 %v1281
    %3646 = vmatpush1.bf16.msra.mxu0 %v1280
    %3647 = vmatprep.subr.bf16.mxu0 %v1285
    %3648 = vmatpush1.bf16.msra.mxu0 %v1284
    %3649 = vmatprep.subr.bf16.mxu0 %v1289
    %3650 = vmatpush1.bf16.msra.mxu0 %v1288
    %3651 = vmatprep.subr.bf16.mxu0 %v1293
    %3652 = vmatpush1.bf16.msra.mxu0 %v1292
    %3653 = vmatprep.subr.bf16.mxu0 %v1297
    %3654 = vmatpush1.bf16.msra.mxu0 %v1296
    %3655 = vmatprep.subr.bf16.mxu0 %v1301
    %3656 = vmatpush1.bf16.msra.mxu0 %v1300
    %3657 = vmatprep.subr.bf16.mxu0 %v1305
    %3658 = vmatpush1.bf16.msra.mxu0 %v1304
    %3659 = vmatprep.subr.bf16.mxu0 %v1309
    %3660 = vmatpush1.bf16.msra.mxu0 %v1308
    %3661 = vmatprep.subr.bf16.mxu0 0
    %3662 = vmatpush1.bf16.msra.mxu0 0
    %3663 = vmatprep.subr.bf16.mxu0 0
    %3664 = vmatpush1.bf16.msra.mxu0 0
    %3665 = vmatprep.subr.bf16.mxu0 0
    %3666 = vmatpush1.bf16.msra.mxu0 0
    %3667 = vmatprep.subr.bf16.mxu0 0
    %3668 = vmatpush1.bf16.msra.mxu0 0
    %3669 = vmatprep.subr.bf16.mxu0 0
    %3670 = vmatpush1.bf16.msra.mxu0 0
    %3671 = vmatprep.subr.bf16.mxu0 0
    %3672 = vmatpush1.bf16.msra.mxu0 0
    %3673 = vmatprep.subr.bf16.mxu0 0
    %3674 = vmatpush1.bf16.msra.mxu0 0
    %3675 = vmatprep.subr.bf16.mxu0 0
    %3676 = vmatpush1.bf16.msra.mxu0 0
    %3677 = vmatprep.mubr.bf16.mxu0 0
    %3678 = vmatmul.mubr.bf16.gmra.mrb[0].mxu0 %v3557
    %v3679 = vpop.f32.mrb[0].mxu0
    %v3680 = vadd.f32 %v3594, %v3679
    %v3681 = vpop.f32.mrb[0].mxu0
    %v3682 = vadd.f32 %v3596, %v3681
    %v3683 = vpop.f32.mrb[0].mxu0
    %v3684 = vadd.f32 %v3598, %v3683
    %v3685 = vpop.f32.mrb[0].mxu0
    %v3686 = vadd.f32 %v3600, %v3685
    %3687 = vdwg.mxu0
    %3688 = vmatprep.subr.bf16.mxu0 %v1283
    %3689 = vmatpush1.bf16.msra.mxu0 %v1282
    %3690 = vmatprep.subr.bf16.mxu0 %v1287
    %3691 = vmatpush1.bf16.msra.mxu0 %v1286
    %3692 = vmatprep.subr.bf16.mxu0 %v1291
    %3693 = vmatpush1.bf16.msra.mxu0 %v1290
    %3694 = vmatprep.subr.bf16.mxu0 %v1295
    %3695 = vmatpush1.bf16.msra.mxu0 %v1294
    %3696 = vmatprep.subr.bf16.mxu0 %v1299
    %3697 = vmatpush1.bf16.msra.mxu0 %v1298
    %3698 = vmatprep.subr.bf16.mxu0 %v1303
    %3699 = vmatpush1.bf16.msra.mxu0 %v1302
    %3700 = vmatprep.subr.bf16.mxu0 %v1307
    %3701 = vmatpush1.bf16.msra.mxu0 %v1306
    %3702 = vmatprep.subr.bf16.mxu0 %v1311
    %3703 = vmatpush1.bf16.msra.mxu0 %v1310
    %3704 = vmatprep.subr.bf16.mxu0 0
    %3705 = vmatpush1.bf16.msra.mxu0 0
    %3706 = vmatprep.subr.bf16.mxu0 0
    %3707 = vmatpush1.bf16.msra.mxu0 0
    %3708 = vmatprep.subr.bf16.mxu0 0
    %3709 = vmatpush1.bf16.msra.mxu0 0
    %3710 = vmatprep.subr.bf16.mxu0 0
    %3711 = vmatpush1.bf16.msra.mxu0 0
    %3712 = vmatprep.subr.bf16.mxu0 0
    %3713 = vmatpush1.bf16.msra.mxu0 0
    %3714 = vmatprep.subr.bf16.mxu0 0
    %3715 = vmatpush1.bf16.msra.mxu0 0
    %3716 = vmatprep.subr.bf16.mxu0 0
    %3717 = vmatpush1.bf16.msra.mxu0 0
    %3718 = vmatprep.subr.bf16.mxu0 0
    %3719 = vmatpush1.bf16.msra.mxu0 0
    %3720 = vmatprep.mubr.bf16.mxu0 0
    %3721 = vmatmul.mubr.bf16.gmra.mrb[0].mxu0 %v3557
    %v3722 = vpop.f32.mrb[0].mxu0
    %v3723 = vadd.f32 %v3637, %v3722
    %v3724 = vpop.f32.mrb[0].mxu0
    %v3725 = vadd.f32 %v3639, %v3724
    %v3726 = vpop.f32.mrb[0].mxu0
    %v3727 = vadd.f32 %v3641, %v3726
    %v3728 = vpop.f32.mrb[0].mxu0
    %v3729 = vadd.f32 %v3643, %v3728
    %3730 = vdwg.mxu0
    %v3731 = vadd.f32 %v3680, %v1434
    %v3732 = vadd.f32 %v3682, %v1438
    %v3733 = vadd.f32 %v3723, %v1442
    %v3734 = vadd.f32 %v3725, %v1446
    %v3735 = vadd.f32 %v3684, %v1434
    %v3736 = vadd.f32 %v3686, %v1438
    %v3737 = vadd.f32 %v3727, %v1442
    %v3738 = vadd.f32 %v3729, %v1446
    %v3739 = vxor.u32 %v3731, 2147483648
    %v3740 = vxor.u32 %v3735, 2147483648
    %v3741 = vmul.f32 %v3739, 1.442695
    %v3742 = vpow.pop %v3741
    %v3743 = vmul.f32 %v3740, 1.442695
    %v3744 = vpow.pop %v3743
    %v3745 = vadd.f32 %v3742, 1.0
    %v3746 = vadd.f32 %v3744, 1.0
    %v3747 = vrcp.pop %v3745
    %v3748 = vmul.f32 1.0, %v3747
    %v3749 = vrcp.pop %v3746
    %v3750 = vmul.f32 1.0, %v3749
    %v3751 = vxor.u32 %v3732, 2147483648
    %v3752 = vxor.u32 %v3736, 2147483648
    %v3753 = vmul.f32 %v3751, 1.442695
    %v3754 = vpow.pop %v3753
    %v3755 = vmul.f32 %v3752, 1.442695
    %v3756 = vpow.pop %v3755
    %v3757 = vadd.f32 %v3754, 1.0
    %v3758 = vadd.f32 %v3756, 1.0
    %v3759 = vrcp.pop %v3757
    %v3760 = vmul.f32 1.0, %v3759
    %v3761 = vrcp.pop %v3758
    %v3762 = vmul.f32 1.0, %v3761
    %v3763 = vtanh.pop %v3733
    %v3764 = vtanh.pop %v3737
    %v3765 = vxor.u32 %v3734, 2147483648
    %v3766 = vxor.u32 %v3738, 2147483648
    %v3767 = vmul.f32 %v3765, 1.442695
    %v3768 = vpow.pop %v3767
    %v3769 = vmul.f32 %v3766, 1.442695
    %v3770 = vpow.pop %v3769
    %v3771 = vadd.f32 %v3768, 1.0
    %v3772 = vadd.f32 %v3770, 1.0
    %v3773 = vrcp.pop %v3771
    %v3774 = vmul.f32 1.0, %v3773
    %v3775 = vrcp.pop %v3772
    %v3776 = vmul.f32 1.0, %v3775
    %v3777 = vmul.f32 %v3760, %v3401
    %v3778 = vmul.f32 %v3762, %v3402
    %v3779 = vmul.f32 %v3748, %v3763
    %v3780 = vmul.f32 %v3750, %v3764
    %v3781 = vadd.f32 %v3777, %v3779
    %v3782 = vadd.f32 %v3778, %v3780
    %v3783 = vtanh.pop %v3781
    %v3784 = vtanh.pop %v3782
    %v3785 = vmul.f32 %v3774, %v3783
    %v3786 = vmul.f32 %v3776, %v3784
    %v3787 = vld [vmem:[#allocation2 + $0x1c0] sm:$0xff]
    %v3788 = vld [vmem:[#allocation2 + $0x1c8] sm:$0xff]
    %v3789 = vld [vmem:[#allocation2 + $0x1d0] sm:$0xff]
    %v3790 = vld [vmem:[#allocation2 + $0x1d8] sm:$0xff]
    %v3791 = vld [vmem:[#allocation2 + $0x1e0] sm:$0xff]
    %v3792 = vld [vmem:[#allocation2 + $0x1e8] sm:$0xff]
    %v3793 = vld [vmem:[#allocation2 + $0x1f0] sm:$0xff]
    %v3794 = vld [vmem:[#allocation2 + $0x1f8] sm:$0xff]
    %3795 = vmatprep.subr.bf16.mxu0 %v732
    %3796 = vmatpush1.bf16.msra.mxu0 %v731
    %3797 = vmatprep.subr.bf16.mxu0 %v736
    %3798 = vmatpush1.bf16.msra.mxu0 %v735
    %3799 = vmatprep.subr.bf16.mxu0 %v740
    %3800 = vmatpush1.bf16.msra.mxu0 %v739
    %3801 = vmatprep.subr.bf16.mxu0 %v744
    %3802 = vmatpush1.bf16.msra.mxu0 %v743
    %3803 = vmatprep.subr.bf16.mxu0 %v748
    %3804 = vmatpush1.bf16.msra.mxu0 %v747
    %3805 = vmatprep.subr.bf16.mxu0 %v752
    %3806 = vmatpush1.bf16.msra.mxu0 %v751
    %3807 = vmatprep.subr.bf16.mxu0 %v756
    %3808 = vmatpush1.bf16.msra.mxu0 %v755
    %3809 = vmatprep.subr.bf16.mxu0 %v760
    %3810 = vmatpush1.bf16.msra.mxu0 %v759
    %3811 = vmatprep.subr.bf16.mxu0 0
    %3812 = vmatpush1.bf16.msra.mxu0 0
    %3813 = vmatprep.subr.bf16.mxu0 0
    %3814 = vmatpush1.bf16.msra.mxu0 0
    %3815 = vmatprep.subr.bf16.mxu0 0
    %3816 = vmatpush1.bf16.msra.mxu0 0
    %3817 = vmatprep.subr.bf16.mxu0 0
    %3818 = vmatpush1.bf16.msra.mxu0 0
    %3819 = vmatprep.subr.bf16.mxu0 0
    %3820 = vmatpush1.bf16.msra.mxu0 0
    %3821 = vmatprep.subr.bf16.mxu0 0
    %3822 = vmatpush1.bf16.msra.mxu0 0
    %3823 = vmatprep.subr.bf16.mxu0 0
    %3824 = vmatpush1.bf16.msra.mxu0 0
    %3825 = vmatprep.subr.bf16.mxu0 0
    %3826 = vmatpush1.bf16.msra.mxu0 0
    %3827 = vmatprep.mubr.bf16.mxu0 0
    %3828 = vmatmul.mubr.bf16.gmra.mrb[0].mxu0 %v3557
    %v3829 = vpop.f32.mrb[0].mxu0
    %v3830 = vadd.f32 0.0, %v3829
    %v3831 = vpop.f32.mrb[0].mxu0
    %v3832 = vadd.f32 0.0, %v3831
    %v3833 = vpop.f32.mrb[0].mxu0
    %v3834 = vadd.f32 0.0, %v3833
    %v3835 = vpop.f32.mrb[0].mxu0
    %v3836 = vadd.f32 0.0, %v3835
    %3837 = vdwg.mxu0
    %3838 = vmatprep.subr.bf16.mxu0 %v734
    %3839 = vmatpush1.bf16.msra.mxu0 %v733
    %3840 = vmatprep.subr.bf16.mxu0 %v738
    %3841 = vmatpush1.bf16.msra.mxu0 %v737
    %3842 = vmatprep.subr.bf16.mxu0 %v742
    %3843 = vmatpush1.bf16.msra.mxu0 %v741
    %3844 = vmatprep.subr.bf16.mxu0 %v746
    %3845 = vmatpush1.bf16.msra.mxu0 %v745
    %3846 = vmatprep.subr.bf16.mxu0 %v750
    %3847 = vmatpush1.bf16.msra.mxu0 %v749
    %3848 = vmatprep.subr.bf16.mxu0 %v754
    %3849 = vmatpush1.bf16.msra.mxu0 %v753
    %3850 = vmatprep.subr.bf16.mxu0 %v758
    %3851 = vmatpush1.bf16.msra.mxu0 %v757
    %3852 = vmatprep.subr.bf16.mxu0 %v762
    %3853 = vmatpush1.bf16.msra.mxu0 %v761
    %3854 = vmatprep.subr.bf16.mxu0 0
    %3855 = vmatpush1.bf16.msra.mxu0 0
    %3856 = vmatprep.subr.bf16.mxu0 0
    %3857 = vmatpush1.bf16.msra.mxu0 0
    %3858 = vmatprep.subr.bf16.mxu0 0
    %3859 = vmatpush1.bf16.msra.mxu0 0
    %3860 = vmatprep.subr.bf16.mxu0 0
    %3861 = vmatpush1.bf16.msra.mxu0 0
    %3862 = vmatprep.subr.bf16.mxu0 0
    %3863 = vmatpush1.bf16.msra.mxu0 0
    %3864 = vmatprep.subr.bf16.mxu0 0
    %3865 = vmatpush1.bf16.msra.mxu0 0
    %3866 = vmatprep.subr.bf16.mxu0 0
    %3867 = vmatpush1.bf16.msra.mxu0 0
    %3868 = vmatprep.subr.bf16.mxu0 0
    %3869 = vmatpush1.bf16.msra.mxu0 0
    %3870 = vmatprep.mubr.bf16.mxu0 0
    %3871 = vmatmul.mubr.bf16.gmra.mrb[0].mxu0 %v3557
    %v3872 = vpop.f32.mrb[0].mxu0
    %v3873 = vadd.f32 0.0, %v3872
    %v3874 = vpop.f32.mrb[0].mxu0
    %v3875 = vadd.f32 0.0, %v3874
    %v3876 = vpop.f32.mrb[0].mxu0
    %v3877 = vadd.f32 0.0, %v3876
    %v3878 = vpop.f32.mrb[0].mxu0
    %v3879 = vadd.f32 0.0, %v3878
    %3880 = vdwg.mxu0
    %v3881 = vadd.f32 %v3787, %v3830
    %v3882 = vadd.f32 %v3788, %v3832
    %v3883 = vadd.f32 %v3789, %v3873
    %v3884 = vadd.f32 %v3790, %v3875
    %v3885 = vadd.f32 %v3791, %v3834
    %v3886 = vadd.f32 %v3792, %v3836
    %v3887 = vadd.f32 %v3793, %v3877
    %v3888 = vadd.f32 %v3794, %v3879
    %v3889 = vxor.u32 %v3881, 2147483648
    %v3890 = vxor.u32 %v3885, 2147483648
    %v3891 = vmul.f32 %v3889, 1.442695
    %v3892 = vpow.pop %v3891
    %v3893 = vmul.f32 %v3890, 1.442695
    %v3894 = vpow.pop %v3893
    %v3895 = vadd.f32 %v3892, 1.0
    %v3896 = vadd.f32 %v3894, 1.0
    %v3897 = vrcp.pop %v3895
    %v3898 = vmul.f32 1.0, %v3897
    %v3899 = vrcp.pop %v3896
    %v3900 = vmul.f32 1.0, %v3899
    %v3901 = vxor.u32 %v3882, 2147483648
    %v3902 = vxor.u32 %v3886, 2147483648
    %v3903 = vmul.f32 %v3901, 1.442695
    %v3904 = vpow.pop %v3903
    %v3905 = vmul.f32 %v3902, 1.442695
    %v3906 = vpow.pop %v3905
    %v3907 = vadd.f32 %v3904, 1.0
    %v3908 = vadd.f32 %v3906, 1.0
    %v3909 = vrcp.pop %v3907
    %v3910 = vmul.f32 1.0, %v3909
    %v3911 = vrcp.pop %v3908
    %v3912 = vmul.f32 1.0, %v3911
    %v3913 = vtanh.pop %v3883
    %v3914 = vtanh.pop %v3887
    %v3915 = vxor.u32 %v3884, 2147483648
    %v3916 = vxor.u32 %v3888, 2147483648
    %v3917 = vmul.f32 %v3915, 1.442695
    %v3918 = vpow.pop %v3917
    %v3919 = vmul.f32 %v3916, 1.442695
    %v3920 = vpow.pop %v3919
    %v3921 = vadd.f32 %v3918, 1.0
    %v3922 = vadd.f32 %v3920, 1.0
    %v3923 = vrcp.pop %v3921
    %v3924 = vmul.f32 1.0, %v3923
    %v3925 = vrcp.pop %v3922
    %v3926 = vmul.f32 1.0, %v3925
    %v3927 = vmul.f32 %v3910, %v3551
    %v3928 = vmul.f32 %v3912, %v3552
    %v3929 = vmul.f32 %v3898, %v3913
    %v3930 = vmul.f32 %v3900, %v3914
    %v3931 = vadd.f32 %v3927, %v3929
    %v3932 = vadd.f32 %v3928, %v3930
    %v3933 = vtanh.pop %v3931
    %v3934 = vtanh.pop %v3932
    %v3935 = vmul.f32 %v3924, %v3933
    %v3936 = vmul.f32 %v3926, %v3934
    %v3937 = vpack.c.bf16 %v3936, %v3935
    %v3938 = vpack.c.bf16 %v3786, %v3785
    %3939 = vmatprep.subr.bf16.mxu0 %v1035
    %3940 = vmatpush1.bf16.msra.mxu0 %v1034
    %3941 = vmatprep.subr.bf16.mxu0 %v1039
    %3942 = vmatpush1.bf16.msra.mxu0 %v1038
    %3943 = vmatprep.subr.bf16.mxu0 %v1043
    %3944 = vmatpush1.bf16.msra.mxu0 %v1042
    %3945 = vmatprep.subr.bf16.mxu0 %v1047
    %3946 = vmatpush1.bf16.msra.mxu0 %v1046
    %3947 = vmatprep.subr.bf16.mxu0 %v1051
    %3948 = vmatpush1.bf16.msra.mxu0 %v1050
    %3949 = vmatprep.subr.bf16.mxu0 %v1055
    %3950 = vmatpush1.bf16.msra.mxu0 %v1054
    %3951 = vmatprep.subr.bf16.mxu0 %v1059
    %3952 = vmatpush1.bf16.msra.mxu0 %v1058
    %3953 = vmatprep.subr.bf16.mxu0 %v1063
    %3954 = vmatpush1.bf16.msra.mxu0 %v1062
    %3955 = vmatprep.subr.bf16.mxu0 0
    %3956 = vmatpush1.bf16.msra.mxu0 0
    %3957 = vmatprep.subr.bf16.mxu0 0
    %3958 = vmatpush1.bf16.msra.mxu0 0
    %3959 = vmatprep.subr.bf16.mxu0 0
    %3960 = vmatpush1.bf16.msra.mxu0 0
    %3961 = vmatprep.subr.bf16.mxu0 0
    %3962 = vmatpush1.bf16.msra.mxu0 0
    %3963 = vmatprep.subr.bf16.mxu0 0
    %3964 = vmatpush1.bf16.msra.mxu0 0
    %3965 = vmatprep.subr.bf16.mxu0 0
    %3966 = vmatpush1.bf16.msra.mxu0 0
    %3967 = vmatprep.subr.bf16.mxu0 0
    %3968 = vmatpush1.bf16.msra.mxu0 0
    %3969 = vmatprep.subr.bf16.mxu0 0
    %3970 = vmatpush1.bf16.msra.mxu0 0
    %3971 = vmatprep.mubr.bf16.mxu0 0
    %3972 = vmatmul.mubr.bf16.gmra.mrb[0].mxu0 %v3938
    %v3973 = vpop.f32.mrb[0].mxu0
    %v3974 = vadd.f32 0.0, %v3973
    %v3975 = vpop.f32.mrb[0].mxu0
    %v3976 = vadd.f32 0.0, %v3975
    %v3977 = vpop.f32.mrb[0].mxu0
    %v3978 = vadd.f32 0.0, %v3977
    %v3979 = vpop.f32.mrb[0].mxu0
    %v3980 = vadd.f32 0.0, %v3979
    %3981 = vdwg.mxu0
    %3982 = vmatprep.subr.bf16.mxu0 %v1037
    %3983 = vmatpush1.bf16.msra.mxu0 %v1036
    %3984 = vmatprep.subr.bf16.mxu0 %v1041
    %3985 = vmatpush1.bf16.msra.mxu0 %v1040
    %3986 = vmatprep.subr.bf16.mxu0 %v1045
    %3987 = vmatpush1.bf16.msra.mxu0 %v1044
    %3988 = vmatprep.subr.bf16.mxu0 %v1049
    %3989 = vmatpush1.bf16.msra.mxu0 %v1048
    %3990 = vmatprep.subr.bf16.mxu0 %v1053
    %3991 = vmatpush1.bf16.msra.mxu0 %v1052
    %3992 = vmatprep.subr.bf16.mxu0 %v1057
    %3993 = vmatpush1.bf16.msra.mxu0 %v1056
    %3994 = vmatprep.subr.bf16.mxu0 %v1061
    %3995 = vmatpush1.bf16.msra.mxu0 %v1060
    %3996 = vmatprep.subr.bf16.mxu0 %v1065
    %3997 = vmatpush1.bf16.msra.mxu0 %v1064
    %3998 = vmatprep.subr.bf16.mxu0 0
    %3999 = vmatpush1.bf16.msra.mxu0 0
    %4000 = vmatprep.subr.bf16.mxu0 0
    %4001 = vmatpush1.bf16.msra.mxu0 0
    %4002 = vmatprep.subr.bf16.mxu0 0
    %4003 = vmatpush1.bf16.msra.mxu0 0
    %4004 = vmatprep.subr.bf16.mxu0 0
    %4005 = vmatpush1.bf16.msra.mxu0 0
    %4006 = vmatprep.subr.bf16.mxu0 0
    %4007 = vmatpush1.bf16.msra.mxu0 0
    %4008 = vmatprep.subr.bf16.mxu0 0
    %4009 = vmatpush1.bf16.msra.mxu0 0
    %4010 = vmatprep.subr.bf16.mxu0 0
    %4011 = vmatpush1.bf16.msra.mxu0 0
    %4012 = vmatprep.subr.bf16.mxu0 0
    %4013 = vmatpush1.bf16.msra.mxu0 0
    %4014 = vmatprep.mubr.bf16.mxu0 0
    %4015 = vmatmul.mubr.bf16.gmra.mrb[0].mxu0 %v3938
    %v4016 = vpop.f32.mrb[0].mxu0
    %v4017 = vadd.f32 0.0, %v4016
    %v4018 = vpop.f32.mrb[0].mxu0
    %v4019 = vadd.f32 0.0, %v4018
    %v4020 = vpop.f32.mrb[0].mxu0
    %v4021 = vadd.f32 0.0, %v4020
    %v4022 = vpop.f32.mrb[0].mxu0
    %v4023 = vadd.f32 0.0, %v4022
    %4024 = vdwg.mxu0
    %4025 = vmatprep.subr.bf16.mxu0 %v1281
    %4026 = vmatpush1.bf16.msra.mxu0 %v1280
    %4027 = vmatprep.subr.bf16.mxu0 %v1285
    %4028 = vmatpush1.bf16.msra.mxu0 %v1284
    %4029 = vmatprep.subr.bf16.mxu0 %v1289
    %4030 = vmatpush1.bf16.msra.mxu0 %v1288
    %4031 = vmatprep.subr.bf16.mxu0 %v1293
    %4032 = vmatpush1.bf16.msra.mxu0 %v1292
    %4033 = vmatprep.subr.bf16.mxu0 %v1297
    %4034 = vmatpush1.bf16.msra.mxu0 %v1296
    %4035 = vmatprep.subr.bf16.mxu0 %v1301
    %4036 = vmatpush1.bf16.msra.mxu0 %v1300
    %4037 = vmatprep.subr.bf16.mxu0 %v1305
    %4038 = vmatpush1.bf16.msra.mxu0 %v1304
    %4039 = vmatprep.subr.bf16.mxu0 %v1309
    %4040 = vmatpush1.bf16.msra.mxu0 %v1308
    %4041 = vmatprep.subr.bf16.mxu0 0
    %4042 = vmatpush1.bf16.msra.mxu0 0
    %4043 = vmatprep.subr.bf16.mxu0 0
    %4044 = vmatpush1.bf16.msra.mxu0 0
    %4045 = vmatprep.subr.bf16.mxu0 0
    %4046 = vmatpush1.bf16.msra.mxu0 0
    %4047 = vmatprep.subr.bf16.mxu0 0
    %4048 = vmatpush1.bf16.msra.mxu0 0
    %4049 = vmatprep.subr.bf16.mxu0 0
    %4050 = vmatpush1.bf16.msra.mxu0 0
    %4051 = vmatprep.subr.bf16.mxu0 0
    %4052 = vmatpush1.bf16.msra.mxu0 0
    %4053 = vmatprep.subr.bf16.mxu0 0
    %4054 = vmatpush1.bf16.msra.mxu0 0
    %4055 = vmatprep.subr.bf16.mxu0 0
    %4056 = vmatpush1.bf16.msra.mxu0 0
    %4057 = vmatprep.mubr.bf16.mxu0 0
    %4058 = vmatmul.mubr.bf16.gmra.mrb[0].mxu0 %v3937
    %v4059 = vpop.f32.mrb[0].mxu0
    %v4060 = vadd.f32 %v3974, %v4059
    %v4061 = vpop.f32.mrb[0].mxu0
    %v4062 = vadd.f32 %v3976, %v4061
    %v4063 = vpop.f32.mrb[0].mxu0
    %v4064 = vadd.f32 %v3978, %v4063
    %v4065 = vpop.f32.mrb[0].mxu0
    %v4066 = vadd.f32 %v3980, %v4065
    %4067 = vdwg.mxu0
    %4068 = vmatprep.subr.bf16.mxu0 %v1283
    %4069 = vmatpush1.bf16.msra.mxu0 %v1282
    %4070 = vmatprep.subr.bf16.mxu0 %v1287
    %4071 = vmatpush1.bf16.msra.mxu0 %v1286
    %4072 = vmatprep.subr.bf16.mxu0 %v1291
    %4073 = vmatpush1.bf16.msra.mxu0 %v1290
    %4074 = vmatprep.subr.bf16.mxu0 %v1295
    %4075 = vmatpush1.bf16.msra.mxu0 %v1294
    %4076 = vmatprep.subr.bf16.mxu0 %v1299
    %4077 = vmatpush1.bf16.msra.mxu0 %v1298
    %4078 = vmatprep.subr.bf16.mxu0 %v1303
    %4079 = vmatpush1.bf16.msra.mxu0 %v1302
    %4080 = vmatprep.subr.bf16.mxu0 %v1307
    %4081 = vmatpush1.bf16.msra.mxu0 %v1306
    %4082 = vmatprep.subr.bf16.mxu0 %v1311
    %4083 = vmatpush1.bf16.msra.mxu0 %v1310
    %4084 = vmatprep.subr.bf16.mxu0 0
    %4085 = vmatpush1.bf16.msra.mxu0 0
    %4086 = vmatprep.subr.bf16.mxu0 0
    %4087 = vmatpush1.bf16.msra.mxu0 0
    %4088 = vmatprep.subr.bf16.mxu0 0
    %4089 = vmatpush1.bf16.msra.mxu0 0
    %4090 = vmatprep.subr.bf16.mxu0 0
    %4091 = vmatpush1.bf16.msra.mxu0 0
    %4092 = vmatprep.subr.bf16.mxu0 0
    %4093 = vmatpush1.bf16.msra.mxu0 0
    %4094 = vmatprep.subr.bf16.mxu0 0
    %4095 = vmatpush1.bf16.msra.mxu0 0
    %4096 = vmatprep.subr.bf16.mxu0 0
    %4097 = vmatpush1.bf16.msra.mxu0 0
    %4098 = vmatprep.subr.bf16.mxu0 0
    %4099 = vmatpush1.bf16.msra.mxu0 0
    %4100 = vmatprep.mubr.bf16.mxu0 0
    %4101 = vmatmul.mubr.bf16.gmra.mrb[0].mxu0 %v3937
    %v4102 = vpop.f32.mrb[0].mxu0
    %v4103 = vadd.f32 %v4017, %v4102
    %v4104 = vpop.f32.mrb[0].mxu0
    %v4105 = vadd.f32 %v4019, %v4104
    %v4106 = vpop.f32.mrb[0].mxu0
    %v4107 = vadd.f32 %v4021, %v4106
    %v4108 = vpop.f32.mrb[0].mxu0
    %v4109 = vadd.f32 %v4023, %v4108
    %4110 = vdwg.mxu0
    %v4111 = vadd.f32 %v4060, %v1434
    %v4112 = vadd.f32 %v4062, %v1438
    %v4113 = vadd.f32 %v4103, %v1442
    %v4114 = vadd.f32 %v4105, %v1446
    %v4115 = vadd.f32 %v4064, %v1434
    %v4116 = vadd.f32 %v4066, %v1438
    %v4117 = vadd.f32 %v4107, %v1442
    %v4118 = vadd.f32 %v4109, %v1446
    %v4119 = vxor.u32 %v4111, 2147483648
    %v4120 = vxor.u32 %v4115, 2147483648
    %v4121 = vmul.f32 %v4119, 1.442695
    %v4122 = vpow.pop %v4121
    %v4123 = vmul.f32 %v4120, 1.442695
    %v4124 = vpow.pop %v4123
    %v4125 = vadd.f32 %v4122, 1.0
    %v4126 = vadd.f32 %v4124, 1.0
    %v4127 = vrcp.pop %v4125
    %v4128 = vmul.f32 1.0, %v4127
    %v4129 = vrcp.pop %v4126
    %v4130 = vmul.f32 1.0, %v4129
    %v4131 = vxor.u32 %v4112, 2147483648
    %v4132 = vxor.u32 %v4116, 2147483648
    %v4133 = vmul.f32 %v4131, 1.442695
    %v4134 = vpow.pop %v4133
    %v4135 = vmul.f32 %v4132, 1.442695
    %v4136 = vpow.pop %v4135
    %v4137 = vadd.f32 %v4134, 1.0
    %v4138 = vadd.f32 %v4136, 1.0
    %v4139 = vrcp.pop %v4137
    %v4140 = vmul.f32 1.0, %v4139
    %v4141 = vrcp.pop %v4138
    %v4142 = vmul.f32 1.0, %v4141
    %v4143 = vtanh.pop %v4113
    %v4144 = vtanh.pop %v4117
    %v4145 = vxor.u32 %v4114, 2147483648
    %v4146 = vxor.u32 %v4118, 2147483648
    %v4147 = vmul.f32 %v4145, 1.442695
    %v4148 = vpow.pop %v4147
    %v4149 = vmul.f32 %v4146, 1.442695
    %v4150 = vpow.pop %v4149
    %v4151 = vadd.f32 %v4148, 1.0
    %v4152 = vadd.f32 %v4150, 1.0
    %v4153 = vrcp.pop %v4151
    %v4154 = vmul.f32 1.0, %v4153
    %v4155 = vrcp.pop %v4152
    %v4156 = vmul.f32 1.0, %v4155
    %v4157 = vmul.f32 %v4140, %v3781
    %v4158 = vmul.f32 %v4142, %v3782
    %v4159 = vmul.f32 %v4128, %v4143
    %v4160 = vmul.f32 %v4130, %v4144
    %v4161 = vadd.f32 %v4157, %v4159
    %v4162 = vadd.f32 %v4158, %v4160
    %v4163 = vtanh.pop %v4161
    %v4164 = vtanh.pop %v4162
    %v4165 = vmul.f32 %v4154, %v4163
    %v4166 = vmul.f32 %v4156, %v4164
    %v4167 = vpack.c.bf16 %v4166, %v4165
    %v4168 = vld [vmem:[#allocation9] sm:$0xf]
    %v4169 = vld [vmem:[#allocation9 + $0x4] sm:$0xf]
    %v4170 = vld [vmem:[#allocation9 + $0x8] sm:$0xf]
    %v4171 = vld [vmem:[#allocation9 + $0xc] sm:$0xf]
    %v4172 = vld [vmem:[#allocation9 + $0x10] sm:$0xf]
    %v4173 = vld [vmem:[#allocation9 + $0x14] sm:$0xf]
    %v4174 = vld [vmem:[#allocation9 + $0x18] sm:$0xf]
    %v4175 = vld [vmem:[#allocation9 + $0x1c] sm:$0xf]
    %v4176 = vld [vmem:[#allocation9 + $0x20] sm:$0xf]
    %v4177 = vld [vmem:[#allocation9 + $0x24] sm:$0xf]
    %v4178 = vld [vmem:[#allocation9 + $0x28] sm:$0xf]
    %v4179 = vld [vmem:[#allocation9 + $0x2c] sm:$0xf]
    %v4180 = vld [vmem:[#allocation9 + $0x30] sm:$0xf]
    %v4181 = vld [vmem:[#allocation9 + $0x34] sm:$0xf]
    %v4182 = vld [vmem:[#allocation9 + $0x38] sm:$0xf]
    %v4183 = vld [vmem:[#allocation9 + $0x3c] sm:$0xf]
    %v4184 = vld [vmem:[%s8] sm:$0x1]
    %v4186 = vlaneseq
    %v4187 = vshrl.u32 %v4186, 7
    %v4188 = vsub.s32 0, %v4187
    %v4189 = vrot.slane %v4184, %v4188
    %v4207 = vunpack.c.l.b16 %v4168
    %v4208 = vunpack.c.l.b16 %v4169
    %v4209 = vunpack.c.l.b16 %v4170
    %v4210 = vunpack.c.l.b16 %v4171
    %v4211 = vunpack.c.l.b16 %v4172
    %v4212 = vunpack.c.l.b16 %v4173
    %v4213 = vunpack.c.l.b16 %v4174
    %v4214 = vunpack.c.l.b16 %v4175
    %v4215 = vunpack.c.l.b16 %v4176
    %v4216 = vunpack.c.l.b16 %v4177
    %v4217 = vunpack.c.l.b16 %v4178
    %v4218 = vunpack.c.l.b16 %v4179
    %v4219 = vunpack.c.l.b16 %v4180
    %v4220 = vunpack.c.l.b16 %v4181
    %v4221 = vunpack.c.l.b16 %v4182
    %v4222 = vunpack.c.l.b16 %v4183
    %v4223 = vpack.c.b16 %v4208, %v4207
    %v4224 = vpack.c.b16 %v4210, %v4209
    %v4225 = vpack.c.b16 %v4212, %v4211
    %v4226 = vpack.c.b16 %v4214, %v4213
    %v4227 = vpack.c.b16 %v4216, %v4215
    %v4228 = vpack.c.b16 %v4218, %v4217
    %v4229 = vpack.c.b16 %v4220, %v4219
    %v4230 = vpack.c.b16 %v4222, %v4221
    %4239 = vmatprep.subr.bf16.mxu0 0
    %4240 = vmatpush1.bf16.msra.mxu0 %v4223
    %4241 = vmatprep.subr.bf16.mxu0 0
    %4242 = vmatpush1.bf16.msra.mxu0 %v4224
    %4243 = vmatprep.subr.bf16.mxu0 0
    %4244 = vmatpush1.bf16.msra.mxu0 %v4225
    %4245 = vmatprep.subr.bf16.mxu0 0
    %4246 = vmatpush1.bf16.msra.mxu0 %v4226
    %4247 = vmatprep.subr.bf16.mxu0 0
    %4248 = vmatpush1.bf16.msra.mxu0 %v4227
    %4249 = vmatprep.subr.bf16.mxu0 0
    %4250 = vmatpush1.bf16.msra.mxu0 %v4228
    %4251 = vmatprep.subr.bf16.mxu0 0
    %4252 = vmatpush1.bf16.msra.mxu0 %v4229
    %4253 = vmatprep.subr.bf16.mxu0 0
    %4254 = vmatpush1.bf16.msra.mxu0 %v4230
    %4255 = vmatprep.subr.bf16.mxu0 0
    %4256 = vmatpush1.bf16.msra.mxu0 0
    %4257 = vmatprep.subr.bf16.mxu0 0
    %4258 = vmatpush1.bf16.msra.mxu0 0
    %4259 = vmatprep.subr.bf16.mxu0 0
    %4260 = vmatpush1.bf16.msra.mxu0 0
    %4261 = vmatprep.subr.bf16.mxu0 0
    %4262 = vmatpush1.bf16.msra.mxu0 0
    %4263 = vmatprep.subr.bf16.mxu0 0
    %4264 = vmatpush1.bf16.msra.mxu0 0
    %4265 = vmatprep.subr.bf16.mxu0 0
    %4266 = vmatpush1.bf16.msra.mxu0 0
    %4267 = vmatprep.subr.bf16.mxu0 0
    %4268 = vmatpush1.bf16.msra.mxu0 0
    %4269 = vmatprep.subr.bf16.mxu0 0
    %4270 = vmatpush1.bf16.msra.mxu0 0
    %4271 = vmatprep.mubr.bf16.mxu0 0
    %4272 = vmatmul.mubr.bf16.gmra.mrb[0].mxu0 %v4167
    %v4273 = vpop.f32.mrb[0].mxu0
    %v4274 = vadd.f32 %v4189, %v4273
    %v4275 = vpop.f32.mrb[0].mxu0
    %v4276 = vpop.f32.mrb[0].mxu0
    %v4277 = vadd.f32 %v4189, %v4276
    %v4278 = vpop.f32.mrb[0].mxu0
    %4279 = vdwg.mxu0
    %v4280 = vmax.f32 %v4274, 0.0
    %v4281 = vmax.f32 %v4277, 0.0
    %4282 = vst [vmem:[#allocation11] sm:$0xff] %v4280
    %4283 = vst [vmem:[#allocation11 + $0x8] sm:$0xff] %v4281
    // Predicated region
    $region54: #{tpu_custom_call.1} parent=1 // pred_check
      _
    $region55: #{tpu_custom_call.1} parent=1 // pred_check_branch
      %4285 = sbr.rel (0) target = $region57
    $region56: #{tpu_custom_call.1} parent=1 // pred_region
      %s4287 = ssub.s32 256, 256
      %4288 = vsyncadd [#allocation5], %s4287
      %s4289 = sshll.u32 [#allocation11], 4
      %s4290 = int_to_ptr.vmem [resolvable:$true] %s4289
      %4295 = dma.vmem_to_hbm [thread:$0]  %s4290, 256, %s9, [#allocation5], 128, 128, 8
    $region57: #{tpu_custom_call.1} parent=1 // pred_fallthru
      _
    // Predicated region
    $region58: #{tpu_custom_call.1} parent=1 // pred_check
      _
    $region59: #{tpu_custom_call.1} parent=1 // pred_check_branch
      %4297 = sbr.rel (0) target = $region61
    $region60: #{tpu_custom_call.1} parent=1 // pred_region
      %4298 = dma.done [#allocation5], 256
    $region61: #{tpu_custom_call.1} parent=1 // pred_fallthru
      _
    %4299 = vsyncpa [#allocation4], 1
    %4300 = vsyncpa [#allocation7], 1
    %4301 = vsyncpa [#allocation10], 1
    %4302 = vsyncpa [#allocation5], 1

</llo_original>
